<compile_context>
chip_gen: v7x
topology: tpu7x:2x2x1
jax: 0.10.0
libtpu: 0.0.40
codegen_flags: <defaults>
</compile_context>

<pallas_src>
import functools

import jax
import jax.numpy as jnp
from jax.experimental import pallas as pl
from jax.experimental.pallas import tpu as pltpu


VMEM_LIMIT_BYTES = 48 * 1024 * 1024   # fits v7x 64 MiB physical; >= v5e default


def _round_up(x, m):
    return (x + m - 1) // m * m


# ----------------------------------------------------------------------------
# Kernel 1: gridded matmul + bias + optional ReLU  (used for both conv layers)
# ----------------------------------------------------------------------------
def _linear_kernel(x_ref, w_ref, b_ref, o_ref, *, relu):
    x = x_ref[...]
    if x.dtype != jnp.bfloat16:
        x = x.astype(jnp.bfloat16)                      # MXU input in bf16
    y = jnp.dot(x, w_ref[...], preferred_element_type=jnp.float32)
    y = y + b_ref[...]                                  # f32 epilogue
    if relu:
        y = jnp.maximum(y, 0.0)
    o_ref[...] = y.astype(o_ref.dtype)


def fused_linear(x, w, b, *, relu=False, out_dtype=jnp.float32, block_m=512):
    """y = act(x @ w + b), row-tiled over M with VMEM-resident weights."""
    M, K = x.shape
    K2, N = w.shape
    assert K == K2, (K, K2)
    bm = min(block_m, _round_up(M, 16))
    grid = (pl.cdiv(M, bm),)
    kernel = functools.partial(_linear_kernel, relu=relu)
    return pl.pallas_call(
        kernel,
        out_shape=jax.ShapeDtypeStruct((M, N), out_dtype),
        grid_spec=pltpu.PrefetchScalarGridSpec(
            num_scalar_prefetch=0,
            grid=grid,
            in_specs=[
                pl.BlockSpec((bm, K), lambda i: (i, 0)),   # streamed row tiles
                pl.BlockSpec((K, N), lambda i: (0, 0)),    # weight resident
                pl.BlockSpec((1, N), lambda i: (0, 0)),    # bias resident
            ],
            out_specs=pl.BlockSpec((bm, N), lambda i: (i, 0)),
        ),
        compiler_params=pltpu.CompilerParams(
            dimension_semantics=("parallel",),
            vmem_limit_bytes=VMEM_LIMIT_BYTES,
        ),
    )(x, w, b)


# ----------------------------------------------------------------------------
# Kernel 2: fused 3-layer MLP  (fc1 -> ReLU -> fc2 -> ReLU -> fc3)
# Hidden/action widths are zero-padded to 128 lanes (math is identical; stores
# are unmasked and MXU columns dense). Intermediates never leave VMEM/vregs.
# ----------------------------------------------------------------------------
def _mlp_kernel(x_ref, w1_ref, b1_ref, w2_ref, b2_ref, w3_ref, b3_ref, o_ref):
    h = jnp.dot(x_ref[...], w1_ref[...], preferred_element_type=jnp.float32)
    h = jnp.maximum(h + b1_ref[...], 0.0)
    h = jnp.dot(h.astype(jnp.bfloat16), w2_ref[...],
                preferred_element_type=jnp.float32)
    h = jnp.maximum(h + b2_ref[...], 0.0)
    q = jnp.dot(h.astype(jnp.bfloat16), w3_ref[...],
                preferred_element_type=jnp.float32)
    o_ref[...] = q + b3_ref[...]


def fused_mlp(x, w1, b1, w2, b2, w3, b3, *, block_m=512):
    M, K = x.shape
    H = w1.shape[1]
    A = w3.shape[1]
    bm = min(block_m, _round_up(M, 16))
    grid = (pl.cdiv(M, bm),)

    def resident(shape):
        return pl.BlockSpec(shape, lambda i: (0, 0))

    return pl.pallas_call(
        _mlp_kernel,
        out_shape=jax.ShapeDtypeStruct((M, A), jnp.float32),
        grid_spec=pltpu.PrefetchScalarGridSpec(
            num_scalar_prefetch=0,
            grid=grid,
            in_specs=[
                pl.BlockSpec((bm, K), lambda i: (i, 0)),   # streamed activations
                resident((K, H)), resident((1, H)),        # fc1
                resident((H, H)), resident((1, H)),        # fc2
                resident((H, A)), resident((1, A)),        # fc3
            ],
            out_specs=pl.BlockSpec((bm, A), lambda i: (i, 0)),
        ),
        compiler_params=pltpu.CompilerParams(
            dimension_semantics=("parallel",),
            vmem_limit_bytes=VMEM_LIMIT_BYTES,
        ),
    )(x, w1, b1, w2, b2, w3, b3)


# ----------------------------------------------------------------------------
# Glue: NHWC im2col (valid padding). Feature order = (kh, kw, C); the conv
# weights are permuted accordingly at init.
# ----------------------------------------------------------------------------
def extract_patches_nhwc(x, kh, kw, sh, sw):
    n, h, w, c = x.shape
    ho = (h - kh) // sh + 1
    wo = (w - kw) // sw + 1
    parts = []
    for i in range(kh):
        for j in range(kw):
            parts.append(x[:, i:i + sh * ho:sh, j:j + sw * wo:sw, :])
    p = jnp.concatenate(parts, axis=-1)                  # (N, Ho, Wo, kh*kw*C)
    return p.reshape(n * ho * wo, kh * kw * c), ho, wo


# ----------------------------------------------------------------------------
# Parameters: synthesize PyTorch-layout tensors, then convert to kernel layout
# (conv weight permutation, norm folding, NHWC fc1 row permutation, lane pad,
# bf16 weights / f32 biases).
# ----------------------------------------------------------------------------
def init_params(key, in_channels, H, W, hidden, action_space):
    ks = jax.random.split(key, 5)

    # conv output spatial sizes (valid padding, k4s2 then k3s2)
    h1, w1 = (H - 4) // 2 + 1, (W - 4) // 2 + 1
    h2, w2 = (h1 - 3) // 2 + 1, (w1 - 3) // 2 + 1
    assert h2 * w2 * 256 == 28 * 256, "architecture expects 28*256 conv features"

    def conv_w(k, cout, cin, kh, kw):
        return jax.random.normal(k, (cout, cin, kh, kw), jnp.float32) * ((cin * kh * kw) ** -0.5)

    def lin_w(k, fout, fin):
        return jax.random.normal(k, (fout, fin), jnp.float32) * (fin ** -0.5)

    # ---- PyTorch-layout tensors (what nn.Conv2d / nn.Linear would hold) ----
    w1_pt = conv_w(ks[0], 32, in_channels, 4, 4); b1_pt = jnp.zeros((32,), jnp.float32)
    w2_pt = conv_w(ks[1], 256, 32, 3, 3);         b2_pt = jnp.zeros((256,), jnp.float32)
    wf1_pt = lin_w(ks[2], hidden, 28 * 256);      bf1_pt = jnp.zeros((hidden,), jnp.float32)
    wf2_pt = lin_w(ks[3], hidden, hidden);        bf2_pt = jnp.zeros((hidden,), jnp.float32)
    wf3_pt = lin_w(ks[4], action_space, hidden);  bf3_pt = jnp.zeros((action_space,), jnp.float32)

    # ---- convert to kernel layout ----
    def conv_to_kernel(w_pt):
        # (Cout,Cin,kh,kw) -> (kh*kw*Cin, Cout), matching extract_patches_nhwc
        cout, cin, kh, kw = w_pt.shape
        return w_pt.transpose(2, 3, 1, 0).reshape(kh * kw * cin, cout)

    # conv1 with obs normalization folded in:
    #   ((x-127.5)/127.5) @ W + b == x @ (W/127.5) + (b - sum_rows(W))
    w1k = conv_to_kernel(w1_pt)
    b1k = (b1_pt - jnp.sum(w1k, axis=0)).reshape(1, -1)
    w1k = w1k / 127.5

    w2k = conv_to_kernel(w2_pt)
    b2k = b2_pt.reshape(1, -1)

    # fc1: (out,in) -> (in,out), then permute rows from PyTorch's NCHW flatten
    # order (c,h,w) to our NHWC flatten order (h,w,c).
    wf1k = wf1_pt.T.reshape(256, h2, w2, hidden).transpose(1, 2, 0, 3)
    wf1k = wf1k.reshape(h2 * w2 * 256, hidden)
    wf2k = wf2_pt.T
    wf3k = wf3_pt.T

    # zero-pad hidden/action widths to 128 lanes (bit-identical math)
    hp = _round_up(hidden, 128)
    ap = _round_up(action_space, 128)
    wf1k = jnp.pad(wf1k, ((0, 0), (0, hp - hidden)))
    bf1k = jnp.pad(bf1_pt, (0, hp - hidden)).reshape(1, hp)
    wf2k = jnp.pad(wf2k, ((0, hp - hidden), (0, hp - hidden)))
    bf2k = jnp.pad(bf2_pt, (0, hp - hidden)).reshape(1, hp)
    wf3k = jnp.pad(wf3k, ((0, hp - hidden), (0, ap - action_space)))
    bf3k = jnp.pad(bf3_pt, (0, ap - action_space)).reshape(1, ap)

    bf16 = lambda a: a.astype(jnp.bfloat16)
    return dict(
        w1=bf16(w1k), b1=b1k, w2=bf16(w2k), b2=b2k,
        wf1=bf16(wf1k), bf1=bf1k, wf2=bf16(wf2k), bf2=bf2k,
        wf3=bf16(wf3k), bf3=bf3k)


# ----------------------------------------------------------------------------
# Forward pass of visual_obs_critic
# ----------------------------------------------------------------------------
def make_forward(action_space):
    @jax.jit
    def forward(obs, params):
        n = obs.shape[0]
        # NCHW -> NHWC once at entry; everything downstream stays channel-last.
        x = jnp.transpose(obs, (0, 2, 3, 1)).astype(jnp.bfloat16)

        # conv1 (k=4, s=2) + ReLU; obs normalization folded into w1/b1
        p1, h1, w1s = extract_patches_nhwc(x, 4, 4, 2, 2)
        y1 = fused_linear(p1, params["w1"], params["b1"], relu=True,
                          out_dtype=jnp.bfloat16)
        x1 = y1.reshape(n, h1, w1s, 32)                      # NHWC, no transpose

        # conv2 (k=3, s=2) + ReLU
        p2, h2, w2s = extract_patches_nhwc(x1, 3, 3, 2, 2)
        y2 = fused_linear(p2, params["w2"], params["b2"], relu=True,
                          out_dtype=jnp.bfloat16)

        # NHWC flatten; wf1 rows were permuted at init so this equals the
        # PyTorch NCHW x.view(N, -1) semantics exactly.
        flat = y2.reshape(n, h2 * w2s * 256)

        # fused fc1 -> ReLU -> fc2 -> ReLU -> fc3 (128-lane padded output)
        q_pad = fused_mlp(flat, params["wf1"], params["bf1"],
                          params["wf2"], params["bf2"],
                          params["wf3"], params["bf3"])
        return q_pad[:, :action_space]
    return forward


if __name__ == "__main__":
    key = jax.random.PRNGKey(0)
    k_obs, k_par = jax.random.split(key)

    batch, in_channels, H, W = 2, 3, 32, 20     # -> conv feats (7,4,256) = 28*256
    hidden, action_space = 32, 6

    obs = jax.random.uniform(k_obs, (batch, in_channels, H, W),
                             minval=0.0, maxval=255.0, dtype=jnp.float32)
    params = init_params(k_par, in_channels, H, W, hidden, action_space)

    forward = make_forward(action_space)
    q = forward(obs, params)
    q = jax.block_until_ready(q)

    assert q.shape == (batch, action_space), q.shape
    assert bool(jnp.all(jnp.isfinite(q)))
    print("KERNEL_OK")
</pallas_src>

<mosaic_0001>
module attributes {stable_mosaic.version = 11 : i64} {
  func.func @_linear_kernel(%arg0: i32, %arg1: memref<272x48xbf16, #tpu.memory_space<vmem>>, %arg2: memref<48x32xbf16, #tpu.memory_space<vmem>>, %arg3: memref<1x32xf32, #tpu.memory_space<vmem>>, %arg4: memref<272x32xbf16, #tpu.memory_space<vmem>>) attributes {dimension_semantics = [#tpu.dimension_semantics<parallel>], iteration_bounds = array<i64: 1>, scalar_prefetch = 0 : i64, scratch_operands = 0 : i64, tpu.core_type = #tpu.core_type<tc>, window_params = [{transform_indices = @transform_0, window_bounds = array<i64: 272, 48>}, {pipeline_mode = #tpu.pipeline_mode<synchronous>, transform_indices = @transform_1, window_bounds = array<i64: 48, 32>}, {pipeline_mode = #tpu.pipeline_mode<synchronous>, transform_indices = @transform_2, window_bounds = array<i64: 1, 32>}, {transform_indices = @transform_3, window_bounds = array<i64: 272, 32>}]} {
    %c0 = arith.constant 0 : index
    %c0_0 = arith.constant 0 : index
    %0 = vector.load %arg1[%c0, %c0_0] : memref<272x48xbf16, #tpu.memory_space<vmem>>, vector<272x48xbf16>
    %c0_1 = arith.constant 0 : index
    %c0_2 = arith.constant 0 : index
    %1 = vector.load %arg2[%c0_1, %c0_2] : memref<48x32xbf16, #tpu.memory_space<vmem>>, vector<48x32xbf16>
    %cst = arith.constant dense<0.000000e+00> : vector<272x32xf32>
    %2 = tpu.matmul %0, %1, %cst {dimension_numbers = #tpu.dot_dimension_numbers<[1], [0], [0], [1], [0, 0, 1, 1], [], []>} : vector<272x48xbf16>, vector<48x32xbf16>, vector<272x32xf32> -> vector<272x32xf32>
    %c0_3 = arith.constant 0 : index
    %c0_4 = arith.constant 0 : index
    %3 = vector.load %arg3[%c0_3, %c0_4] : memref<1x32xf32, #tpu.memory_space<vmem>>, vector<1x32xf32>
    %4 = vector.broadcast %3 : vector<1x32xf32> to vector<272x32xf32>
    %5 = arith.addf %2, %4 : vector<272x32xf32>
    %cst_5 = arith.constant 0.000000e+00 : f32
    %6 = vector.broadcast %cst_5 : f32 to vector<272x32xf32>
    %7 = arith.maximumf %5, %6 : vector<272x32xf32>
    %8 = arith.truncf %7 : vector<272x32xf32> to vector<272x32xbf16>
    %c0_6 = arith.constant 0 : index
    %c0_7 = arith.constant 0 : index
    %9 = vector.load %arg4[%c0_6, %c0_7] : memref<272x32xbf16, #tpu.memory_space<vmem>>, vector<272x32xbf16>
    tpu.vector_store %arg4[%c0_6, %c0_7], %8 {strides = array<i32>} : memref<272x32xbf16, #tpu.memory_space<vmem>>, vector<272x32xbf16>,
    return
  }
  func.func @transform_0(%arg0: i32) -> (i32, i32) {
    %c0_i32 = arith.constant 0 : i32
    %c0_i32_0 = arith.constant 0 : i32
    return %arg0, %c0_i32 : i32, i32
  }
  func.func @transform_1(%arg0: i32) -> (i32, i32) {
    %c0_i32 = arith.constant 0 : i32
    %c0_i32_0 = arith.constant 0 : i32
    %c0_i32_1 = arith.constant 0 : i32
    return %c0_i32, %c0_i32_0 : i32, i32
  }
  func.func @transform_2(%arg0: i32) -> (i32, i32) {
    %c0_i32 = arith.constant 0 : i32
    %c0_i32_0 = arith.constant 0 : i32
    %c0_i32_1 = arith.constant 0 : i32
    return %c0_i32, %c0_i32_0 : i32, i32
  }
  func.func @transform_3(%arg0: i32) -> (i32, i32) {
    %c0_i32 = arith.constant 0 : i32
    %c0_i32_0 = arith.constant 0 : i32
    return %arg0, %c0_i32 : i32, i32
  }
}

module attributes {stable_mosaic.version = 11 : i64} {
  func.func @_linear_kernel(%arg0: i32, %arg1: memref<64x288xbf16, #tpu.memory_space<vmem>>, %arg2: memref<288x256xbf16, #tpu.memory_space<vmem>>, %arg3: memref<1x256xf32, #tpu.memory_space<vmem>>, %arg4: memref<64x256xbf16, #tpu.memory_space<vmem>>) attributes {dimension_semantics = [#tpu.dimension_semantics<parallel>], iteration_bounds = array<i64: 1>, scalar_prefetch = 0 : i64, scratch_operands = 0 : i64, tpu.core_type = #tpu.core_type<tc>, window_params = [{transform_indices = @transform_0, window_bounds = array<i64: 64, 288>}, {pipeline_mode = #tpu.pipeline_mode<synchronous>, transform_indices = @transform_1, window_bounds = array<i64: 288, 256>}, {pipeline_mode = #tpu.pipeline_mode<synchronous>, transform_indices = @transform_2, window_bounds = array<i64: 1, 256>}, {transform_indices = @transform_3, window_bounds = array<i64: 64, 256>}]} {
    %c0 = arith.constant 0 : index
    %c0_0 = arith.constant 0 : index
    %0 = vector.load %arg1[%c0, %c0_0] : memref<64x288xbf16, #tpu.memory_space<vmem>>, vector<64x288xbf16>
    %c0_1 = arith.constant 0 : index
    %c0_2 = arith.constant 0 : index
    %1 = vector.load %arg2[%c0_1, %c0_2] : memref<288x256xbf16, #tpu.memory_space<vmem>>, vector<288x256xbf16>
    %cst = arith.constant dense<0.000000e+00> : vector<64x256xf32>
    %2 = tpu.matmul %0, %1, %cst {dimension_numbers = #tpu.dot_dimension_numbers<[1], [0], [0], [1], [0, 0, 1, 1], [], []>} : vector<64x288xbf16>, vector<288x256xbf16>, vector<64x256xf32> -> vector<64x256xf32>
    %c0_3 = arith.constant 0 : index
    %c0_4 = arith.constant 0 : index
    %3 = vector.load %arg3[%c0_3, %c0_4] : memref<1x256xf32, #tpu.memory_space<vmem>>, vector<1x256xf32>
    %4 = vector.broadcast %3 : vector<1x256xf32> to vector<64x256xf32>
    %5 = arith.addf %2, %4 : vector<64x256xf32>
    %cst_5 = arith.constant 0.000000e+00 : f32
    %6 = vector.broadcast %cst_5 : f32 to vector<64x256xf32>
    %7 = arith.maximumf %5, %6 : vector<64x256xf32>
    %8 = arith.truncf %7 : vector<64x256xf32> to vector<64x256xbf16>
    %c0_6 = arith.constant 0 : index
    %c0_7 = arith.constant 0 : index
    %9 = vector.load %arg4[%c0_6, %c0_7] : memref<64x256xbf16, #tpu.memory_space<vmem>>, vector<64x256xbf16>
    tpu.vector_store %arg4[%c0_6, %c0_7], %8 {strides = array<i32>} : memref<64x256xbf16, #tpu.memory_space<vmem>>, vector<64x256xbf16>,
    return
  }
  func.func @transform_0(%arg0: i32) -> (i32, i32) {
    %c0_i32 = arith.constant 0 : i32
    %c0_i32_0 = arith.constant 0 : i32
    return %arg0, %c0_i32 : i32, i32
  }
  func.func @transform_1(%arg0: i32) -> (i32, i32) {
    %c0_i32 = arith.constant 0 : i32
    %c0_i32_0 = arith.constant 0 : i32
    %c0_i32_1 = arith.constant 0 : i32
    return %c0_i32, %c0_i32_0 : i32, i32
  }
  func.func @transform_2(%arg0: i32) -> (i32, i32) {
    %c0_i32 = arith.constant 0 : i32
    %c0_i32_0 = arith.constant 0 : i32
    %c0_i32_1 = arith.constant 0 : i32
    return %c0_i32, %c0_i32_0 : i32, i32
  }
  func.func @transform_3(%arg0: i32) -> (i32, i32) {
    %c0_i32 = arith.constant 0 : i32
    %c0_i32_0 = arith.constant 0 : i32
    return %arg0, %c0_i32 : i32, i32
  }
}

module attributes {stable_mosaic.version = 11 : i64} {
  func.func @_mlp_kernel(%arg0: i32, %arg1: memref<16x7168xbf16, #tpu.memory_space<vmem>>, %arg2: memref<7168x128xbf16, #tpu.memory_space<vmem>>, %arg3: memref<1x128xf32, #tpu.memory_space<vmem>>, %arg4: memref<128x128xbf16, #tpu.memory_space<vmem>>, %arg5: memref<1x128xf32, #tpu.memory_space<vmem>>, %arg6: memref<128x128xbf16, #tpu.memory_space<vmem>>, %arg7: memref<1x128xf32, #tpu.memory_space<vmem>>, %arg8: memref<16x128xf32, #tpu.memory_space<vmem>>) attributes {dimension_semantics = [#tpu.dimension_semantics<parallel>], iteration_bounds = array<i64: 1>, scalar_prefetch = 0 : i64, scratch_operands = 0 : i64, tpu.core_type = #tpu.core_type<tc>, window_params = [{transform_indices = @transform_0, window_bounds = array<i64: 16, 7168>}, {pipeline_mode = #tpu.pipeline_mode<synchronous>, transform_indices = @transform_1, window_bounds = array<i64: 7168, 128>}, {pipeline_mode = #tpu.pipeline_mode<synchronous>, transform_indices = @transform_2, window_bounds = array<i64: 1, 128>}, {pipeline_mode = #tpu.pipeline_mode<synchronous>, transform_indices = @transform_3, window_bounds = array<i64: 128, 128>}, {pipeline_mode = #tpu.pipeline_mode<synchronous>, transform_indices = @transform_4, window_bounds = array<i64: 1, 128>}, {pipeline_mode = #tpu.pipeline_mode<synchronous>, transform_indices = @transform_5, window_bounds = array<i64: 128, 128>}, {pipeline_mode = #tpu.pipeline_mode<synchronous>, transform_indices = @transform_6, window_bounds = array<i64: 1, 128>}, {transform_indices = @transform_7, window_bounds = array<i64: 16, 128>}]} {
    %c0 = arith.constant 0 : index
    %c0_0 = arith.constant 0 : index
    %0 = vector.load %arg1[%c0, %c0_0] : memref<16x7168xbf16, #tpu.memory_space<vmem>>, vector<16x7168xbf16>
    %c0_1 = arith.constant 0 : index
    %c0_2 = arith.constant 0 : index
    %1 = vector.load %arg2[%c0_1, %c0_2] : memref<7168x128xbf16, #tpu.memory_space<vmem>>, vector<7168x128xbf16>
    %cst = arith.constant dense<0.000000e+00> : vector<16x128xf32>
    %2 = tpu.matmul %0, %1, %cst {dimension_numbers = #tpu.dot_dimension_numbers<[1], [0], [0], [1], [0, 0, 1, 1], [], []>} : vector<16x7168xbf16>, vector<7168x128xbf16>, vector<16x128xf32> -> vector<16x128xf32>
    %c0_3 = arith.constant 0 : index
    %c0_4 = arith.constant 0 : index
    %3 = vector.load %arg3[%c0_3, %c0_4] : memref<1x128xf32, #tpu.memory_space<vmem>>, vector<1x128xf32>
    %4 = vector.broadcast %3 : vector<1x128xf32> to vector<16x128xf32>
    %5 = arith.addf %2, %4 : vector<16x128xf32>
    %cst_5 = arith.constant 0.000000e+00 : f32
    %6 = vector.broadcast %cst_5 : f32 to vector<16x128xf32>
    %7 = arith.maximumf %5, %6 : vector<16x128xf32>
    %8 = arith.truncf %7 : vector<16x128xf32> to vector<16x128xbf16>
    %c0_6 = arith.constant 0 : index
    %c0_7 = arith.constant 0 : index
    %9 = vector.load %arg4[%c0_6, %c0_7] : memref<128x128xbf16, #tpu.memory_space<vmem>>, vector<128x128xbf16>
    %cst_8 = arith.constant dense<0.000000e+00> : vector<16x128xf32>
    %10 = tpu.matmul %8, %9, %cst_8 {dimension_numbers = #tpu.dot_dimension_numbers<[1], [0], [0], [1], [0, 0, 1, 1], [], []>} : vector<16x128xbf16>, vector<128x128xbf16>, vector<16x128xf32> -> vector<16x128xf32>
    %c0_9 = arith.constant 0 : index
    %c0_10 = arith.constant 0 : index
    %11 = vector.load %arg5[%c0_9, %c0_10] : memref<1x128xf32, #tpu.memory_space<vmem>>, vector<1x128xf32>
    %12 = vector.broadcast %11 : vector<1x128xf32> to vector<16x128xf32>
    %13 = arith.addf %10, %12 : vector<16x128xf32>
    %cst_11 = arith.constant 0.000000e+00 : f32
    %14 = vector.broadcast %cst_11 : f32 to vector<16x128xf32>
    %15 = arith.maximumf %13, %14 : vector<16x128xf32>
    %16 = arith.truncf %15 : vector<16x128xf32> to vector<16x128xbf16>
    %c0_12 = arith.constant 0 : index
    %c0_13 = arith.constant 0 : index
    %17 = vector.load %arg6[%c0_12, %c0_13] : memref<128x128xbf16, #tpu.memory_space<vmem>>, vector<128x128xbf16>
    %cst_14 = arith.constant dense<0.000000e+00> : vector<16x128xf32>
    %18 = tpu.matmul %16, %17, %cst_14 {dimension_numbers = #tpu.dot_dimension_numbers<[1], [0], [0], [1], [0, 0, 1, 1], [], []>} : vector<16x128xbf16>, vector<128x128xbf16>, vector<16x128xf32> -> vector<16x128xf32>
    %c0_15 = arith.constant 0 : index
    %c0_16 = arith.constant 0 : index
    %19 = vector.load %arg7[%c0_15, %c0_16] : memref<1x128xf32, #tpu.memory_space<vmem>>, vector<1x128xf32>
    %20 = vector.broadcast %19 : vector<1x128xf32> to vector<16x128xf32>
    %21 = arith.addf %18, %20 : vector<16x128xf32>
    %c0_17 = arith.constant 0 : index
    %c0_18 = arith.constant 0 : index
    %22 = vector.load %arg8[%c0_17, %c0_18] : memref<16x128xf32, #tpu.memory_space<vmem>>, vector<16x128xf32>
    tpu.vector_store %arg8[%c0_17, %c0_18], %21 {strides = array<i32>} : memref<16x128xf32, #tpu.memory_space<vmem>>, vector<16x128xf32>,
    return
  }
  func.func @transform_0(%arg0: i32) -> (i32, i32) {
    %c0_i32 = arith.constant 0 : i32
    %c0_i32_0 = arith.constant 0 : i32
    return %arg0, %c0_i32 : i32, i32
  }
  func.func @transform_1(%arg0: i32) -> (i32, i32) {
    %c0_i32 = arith.constant 0 : i32
    %c0_i32_0 = arith.constant 0 : i32
    %c0_i32_1 = arith.constant 0 : i32
    return %c0_i32, %c0_i32_0 : i32, i32
  }
  func.func @transform_2(%arg0: i32) -> (i32, i32) {
    %c0_i32 = arith.constant 0 : i32
    %c0_i32_0 = arith.constant 0 : i32
    %c0_i32_1 = arith.constant 0 : i32
    return %c0_i32, %c0_i32_0 : i32, i32
  }
  func.func @transform_3(%arg0: i32) -> (i32, i32) {
    %c0_i32 = arith.constant 0 : i32
    %c0_i32_0 = arith.constant 0 : i32
    %c0_i32_1 = arith.constant 0 : i32
    return %c0_i32, %c0_i32_0 : i32, i32
  }
  func.func @transform_4(%arg0: i32) -> (i32, i32) {
    %c0_i32 = arith.constant 0 : i32
    %c0_i32_0 = arith.constant 0 : i32
    %c0_i32_1 = arith.constant 0 : i32
    return %c0_i32, %c0_i32_0 : i32, i32
  }
  func.func @transform_5(%arg0: i32) -> (i32, i32) {
    %c0_i32 = arith.constant 0 : i32
    %c0_i32_0 = arith.constant 0 : i32
    %c0_i32_1 = arith.constant 0 : i32
    return %c0_i32, %c0_i32_0 : i32, i32
  }
  func.func @transform_6(%arg0: i32) -> (i32, i32) {
    %c0_i32 = arith.constant 0 : i32
    %c0_i32_0 = arith.constant 0 : i32
    %c0_i32_1 = arith.constant 0 : i32
    return %c0_i32, %c0_i32_0 : i32, i32
  }
  func.func @transform_7(%arg0: i32) -> (i32, i32) {
    %c0_i32 = arith.constant 0 : i32
    %c0_i32_0 = arith.constant 0 : i32
    return %arg0, %c0_i32 : i32, i32
  }
}

</mosaic_0001>

<llo_original>
// kernel: forward.3
$region0: #{forward.3}
  #allocation0 [shape = 'u32[]', space=smem, size = 0x4, offset = 0x4, fixed_abs, tag = 'smem constant byte address 0x4 - core index']
  #allocation1 [shape = 'u32[144,128]{1,0:T(1,128)}', space=vmem, size = 0x12000, scoped, tag = 'internal scratch']
  %s0 = inlined_call_operand.vmem [shape: bf16[270,48], index: 0, kind: input, shape index: {}]
  %s1 = inlined_call_operand.vmem [shape: bf16[48,32], index: 1, kind: input, shape index: {}]
  %s2 = inlined_call_operand.vmem [shape: f32[1,32], index: 2, kind: input, shape index: {}]
  %s3 = inlined_call_operand.vmem [shape: bf16[270,32], index: 3, kind: output, shape index: {}]
  %s4 = sld [smem:[#allocation0]]
  $region22: #{forward.3} parent=0
    _
  %s6 = ssub.s32 1, %s4
  %s7 = scalar_select 0, %s6, %s4
  // Predicated region
  $region2: #{forward.3} parent=0 // pred_check
    _
  $region3: #{forward.3} parent=0 // pred_check_branch
    %9 = sbr.rel (0) target = $region5
  $region4: #{forward.3} parent=0 // pred_region
    _
  $region5: #{forward.3} parent=0 // pred_fallthru
    _
  // Predicated region
  $region6: #{forward.3} parent=0 // pred_check
    _
  $region7: #{forward.3} parent=0 // pred_check_branch
    %11 = sbr.rel (0) target = $region9
  $region8: #{forward.3} parent=0 // pred_region
    _
  $region9: #{forward.3} parent=0 // pred_fallthru
    _
  // Predicated region
  $region10: #{forward.3} parent=0 // pred_check
    _
  $region11: #{forward.3} parent=0 // pred_check_branch
    %13 = sbr.rel (0) target = $region13
  $region12: #{forward.3} parent=0 // pred_region
    _
  $region13: #{forward.3} parent=0 // pred_fallthru
    _
  %v15 = vld [vmem:[%s0] sm:$0xf]
  %v16 = vld [vmem:[%s0 + $0x4] sm:$0xf]
  %v17 = vld [vmem:[%s0 + $0x8] sm:$0xf]
  %v18 = vld [vmem:[%s0 + $0xc] sm:$0xf]
  %v19 = vld [vmem:[%s0 + $0x10] sm:$0xf]
  %v20 = vld [vmem:[%s0 + $0x14] sm:$0xf]
  %v21 = vld [vmem:[%s0 + $0x18] sm:$0xf]
  %v22 = vld [vmem:[%s0 + $0x1c] sm:$0xf]
  %v23 = vld [vmem:[%s0 + $0x20] sm:$0xf]
  %v24 = vld [vmem:[%s0 + $0x24] sm:$0xf]
  %v25 = vld [vmem:[%s0 + $0x28] sm:$0xf]
  %v26 = vld [vmem:[%s0 + $0x2c] sm:$0xf]
  %v27 = vld [vmem:[%s0 + $0x30] sm:$0xf]
  %v28 = vld [vmem:[%s0 + $0x34] sm:$0xf]
  %v29 = vld [vmem:[%s0 + $0x38] sm:$0xf]
  %v30 = vld [vmem:[%s0 + $0x3c] sm:$0xf]
  %v31 = vld [vmem:[%s0 + $0x40] sm:$0xf]
  %v32 = vld [vmem:[%s0 + $0x44] sm:$0xf]
  %v33 = vld [vmem:[%s0 + $0x48] sm:$0xf]
  %v34 = vld [vmem:[%s0 + $0x4c] sm:$0xf]
  %v35 = vld [vmem:[%s0 + $0x50] sm:$0xf]
  %v36 = vld [vmem:[%s0 + $0x54] sm:$0xf]
  %v37 = vld [vmem:[%s0 + $0x58] sm:$0xf]
  %v38 = vld [vmem:[%s0 + $0x5c] sm:$0xf]
  %v39 = vld [vmem:[%s0 + $0x60] sm:$0xf]
  %v40 = vld [vmem:[%s0 + $0x64] sm:$0xf]
  %v41 = vld [vmem:[%s0 + $0x68] sm:$0xf]
  %v42 = vld [vmem:[%s0 + $0x6c] sm:$0xf]
  %v43 = vld [vmem:[%s0 + $0x70] sm:$0xf]
  %v44 = vld [vmem:[%s0 + $0x74] sm:$0xf]
  %v45 = vld [vmem:[%s0 + $0x78] sm:$0xf]
  %v46 = vld [vmem:[%s0 + $0x7c] sm:$0xf]
  %v47 = vld [vmem:[%s0 + $0x80] sm:$0xf]
  %v48 = vld [vmem:[%s0 + $0x84] sm:$0xf]
  %v49 = vld [vmem:[%s1] sm:$0xf]
  %v50 = vld [vmem:[%s1 + $0x4] sm:$0xf]
  %v51 = vld [vmem:[%s1 + $0x8] sm:$0xf]
  %v52 = vld [vmem:[%s1 + $0xc] sm:$0xf]
  %v53 = vld [vmem:[%s1 + $0x10] sm:$0xf]
  %v54 = vld [vmem:[%s1 + $0x14] sm:$0xf]
  %v55 = vld [vmem:[%s2] sm:$0x1]
  %v57 = vlaneseq
  %v58 = vshrl.u32 %v57, 7
  %v59 = vsub.s32 0, %v58
  %v60 = vrot.slane %v55, %v59
  %v96 = vunpack.c.l.b16 %v15
  %v97 = vunpack.c.l.b16 %v16
  %v98 = vunpack.c.l.b16 %v17
  %v99 = vunpack.c.l.b16 %v18
  %v100 = vunpack.c.l.b16 %v19
  %v101 = vunpack.c.l.b16 %v20
  %v102 = vunpack.c.l.b16 %v21
  %v103 = vunpack.c.l.b16 %v22
  %v104 = vunpack.c.l.b16 %v23
  %v105 = vunpack.c.l.b16 %v24
  %v106 = vunpack.c.l.b16 %v25
  %v107 = vunpack.c.l.b16 %v26
  %v108 = vunpack.c.l.b16 %v27
  %v109 = vunpack.c.l.b16 %v28
  %v110 = vunpack.c.l.b16 %v29
  %v111 = vunpack.c.l.b16 %v30
  %v112 = vunpack.c.l.b16 %v31
  %v113 = vunpack.c.l.b16 %v32
  %v114 = vunpack.c.l.b16 %v33
  %v115 = vunpack.c.l.b16 %v34
  %v116 = vunpack.c.l.b16 %v35
  %v117 = vunpack.c.l.b16 %v36
  %v118 = vunpack.c.l.b16 %v37
  %v119 = vunpack.c.l.b16 %v38
  %v120 = vunpack.c.l.b16 %v39
  %v121 = vunpack.c.l.b16 %v40
  %v122 = vunpack.c.l.b16 %v41
  %v123 = vunpack.c.l.b16 %v42
  %v124 = vunpack.c.l.b16 %v43
  %v125 = vunpack.c.l.b16 %v44
  %v126 = vunpack.c.l.b16 %v45
  %v127 = vunpack.c.l.b16 %v46
  %v128 = vunpack.c.l.b16 %v47
  %v129 = vunpack.c.l.b16 %v48
  %v130 = vpack.c.b16 %v97, %v96
  %v131 = vpack.c.b16 %v99, %v98
  %v132 = vpack.c.b16 %v101, %v100
  %v133 = vpack.c.b16 %v103, %v102
  %v134 = vpack.c.b16 %v105, %v104
  %v135 = vpack.c.b16 %v107, %v106
  %v136 = vpack.c.b16 %v109, %v108
  %v137 = vpack.c.b16 %v111, %v110
  %v138 = vpack.c.b16 %v113, %v112
  %v139 = vpack.c.b16 %v115, %v114
  %v140 = vpack.c.b16 %v117, %v116
  %v141 = vpack.c.b16 %v119, %v118
  %v142 = vpack.c.b16 %v121, %v120
  %v143 = vpack.c.b16 %v123, %v122
  %v144 = vpack.c.b16 %v125, %v124
  %v145 = vpack.c.b16 %v127, %v126
  %v146 = vpack.c.b16 %v129, %v128
  %v153 = vunpack.c.l.b16 %v49
  %v154 = vunpack.c.l.b16 %v50
  %v155 = vunpack.c.l.b16 %v51
  %v156 = vunpack.c.l.b16 %v52
  %v157 = vunpack.c.l.b16 %v53
  %v158 = vunpack.c.l.b16 %v54
  %v159 = vpack.c.b16 %v154, %v153
  %v160 = vpack.c.b16 %v156, %v155
  %v161 = vpack.c.b16 %v158, %v157
  %vm165 = vcmask 392192
  %v167 = vsel %vm165, %v130, 0
  %v170 = vsel %vm165, %v131, 0
  %v173 = vsel %vm165, %v132, 0
  %v176 = vsel %vm165, %v133, 0
  %v179 = vsel %vm165, %v134, 0
  %v182 = vsel %vm165, %v135, 0
  %v185 = vsel %vm165, %v136, 0
  %v188 = vsel %vm165, %v137, 0
  %v191 = vsel %vm165, %v138, 0
  %v194 = vsel %vm165, %v139, 0
  %v197 = vsel %vm165, %v140, 0
  %v200 = vsel %vm165, %v141, 0
  %v203 = vsel %vm165, %v142, 0
  %v206 = vsel %vm165, %v143, 0
  %v209 = vsel %vm165, %v144, 0
  %v212 = vsel %vm165, %v145, 0
  %v215 = vsel %vm165, %v146, 0
  %217 = vmatprep.subr.bf16.mxu0 0
  %218 = vmatpush1.bf16.msra.mxu0 %v159
  %219 = vmatprep.subr.bf16.mxu0 0
  %220 = vmatpush1.bf16.msra.mxu0 %v160
  %221 = vmatprep.subr.bf16.mxu0 0
  %222 = vmatpush1.bf16.msra.mxu0 %v161
  %223 = vmatprep.subr.bf16.mxu0 0
  %224 = vmatpush1.bf16.msra.mxu0 0
  %225 = vmatprep.subr.bf16.mxu0 0
  %226 = vmatpush1.bf16.msra.mxu0 0
  %227 = vmatprep.subr.bf16.mxu0 0
  %228 = vmatpush1.bf16.msra.mxu0 0
  %229 = vmatprep.subr.bf16.mxu0 0
  %230 = vmatpush1.bf16.msra.mxu0 0
  %231 = vmatprep.subr.bf16.mxu0 0
  %232 = vmatpush1.bf16.msra.mxu0 0
  %233 = vmatprep.subr.bf16.mxu0 0
  %234 = vmatpush1.bf16.msra.mxu0 0
  %235 = vmatprep.subr.bf16.mxu0 0
  %236 = vmatpush1.bf16.msra.mxu0 0
  %237 = vmatprep.subr.bf16.mxu0 0
  %238 = vmatpush1.bf16.msra.mxu0 0
  %239 = vmatprep.subr.bf16.mxu0 0
  %240 = vmatpush1.bf16.msra.mxu0 0
  %241 = vmatprep.subr.bf16.mxu0 0
  %242 = vmatpush1.bf16.msra.mxu0 0
  %243 = vmatprep.subr.bf16.mxu0 0
  %244 = vmatpush1.bf16.msra.mxu0 0
  %245 = vmatprep.subr.bf16.mxu0 0
  %246 = vmatpush1.bf16.msra.mxu0 0
  %247 = vmatprep.subr.bf16.mxu0 0
  %248 = vmatpush1.bf16.msra.mxu0 0
  %249 = vmatprep.mubr.bf16.mxu0 0
  %250 = vmatmul.mubr.bf16.gmra.mrb[0].mxu0 %v167
  %v251 = vpop.f32.mrb[0].mxu0
  %v252 = vadd.f32 %v60, %v251
  %v253 = vpop.f32.mrb[0].mxu0
  %v254 = vpop.f32.mrb[0].mxu0
  %v255 = vadd.f32 %v60, %v254
  %v256 = vpop.f32.mrb[0].mxu0
  %257 = vmatprep.mubr.bf16.mxu0 0
  %258 = vmatmul.mubr.bf16.gmra.mrb[0].mxu0 %v170
  %v259 = vpop.f32.mrb[0].mxu0
  %v260 = vadd.f32 %v60, %v259
  %v261 = vpop.f32.mrb[0].mxu0
  %v262 = vpop.f32.mrb[0].mxu0
  %v263 = vadd.f32 %v60, %v262
  %v264 = vpop.f32.mrb[0].mxu0
  %265 = vmatprep.mubr.bf16.mxu0 0
  %266 = vmatmul.mubr.bf16.gmra.mrb[0].mxu0 %v173
  %v267 = vpop.f32.mrb[0].mxu0
  %v268 = vadd.f32 %v60, %v267
  %v269 = vpop.f32.mrb[0].mxu0
  %v270 = vpop.f32.mrb[0].mxu0
  %v271 = vadd.f32 %v60, %v270
  %v272 = vpop.f32.mrb[0].mxu0
  %273 = vmatprep.mubr.bf16.mxu0 0
  %274 = vmatmul.mubr.bf16.gmra.mrb[0].mxu0 %v176
  %v275 = vpop.f32.mrb[0].mxu0
  %v276 = vadd.f32 %v60, %v275
  %v277 = vpop.f32.mrb[0].mxu0
  %v278 = vpop.f32.mrb[0].mxu0
  %v279 = vadd.f32 %v60, %v278
  %v280 = vpop.f32.mrb[0].mxu0
  %281 = vmatprep.mubr.bf16.mxu0 0
  %282 = vmatmul.mubr.bf16.gmra.mrb[0].mxu0 %v179
  %v283 = vpop.f32.mrb[0].mxu0
  %v284 = vadd.f32 %v60, %v283
  %v285 = vpop.f32.mrb[0].mxu0
  %v286 = vpop.f32.mrb[0].mxu0
  %v287 = vadd.f32 %v60, %v286
  %v288 = vpop.f32.mrb[0].mxu0
  %289 = vmatprep.mubr.bf16.mxu0 0
  %290 = vmatmul.mubr.bf16.gmra.mrb[0].mxu0 %v182
  %v291 = vpop.f32.mrb[0].mxu0
  %v292 = vadd.f32 %v60, %v291
  %v293 = vpop.f32.mrb[0].mxu0
  %v294 = vpop.f32.mrb[0].mxu0
  %v295 = vadd.f32 %v60, %v294
  %v296 = vpop.f32.mrb[0].mxu0
  %297 = vmatprep.mubr.bf16.mxu0 0
  %298 = vmatmul.mubr.bf16.gmra.mrb[0].mxu0 %v185
  %v299 = vpop.f32.mrb[0].mxu0
  %v300 = vadd.f32 %v60, %v299
  %v301 = vpop.f32.mrb[0].mxu0
  %v302 = vpop.f32.mrb[0].mxu0
  %v303 = vadd.f32 %v60, %v302
  %v304 = vpop.f32.mrb[0].mxu0
  %305 = vmatprep.mubr.bf16.mxu0 0
  %306 = vmatmul.mubr.bf16.gmra.mrb[0].mxu0 %v188
  %v307 = vpop.f32.mrb[0].mxu0
  %v308 = vadd.f32 %v60, %v307
  %v309 = vpop.f32.mrb[0].mxu0
  %v310 = vpop.f32.mrb[0].mxu0
  %v311 = vadd.f32 %v60, %v310
  %v312 = vpop.f32.mrb[0].mxu0
  %313 = vmatprep.mubr.bf16.mxu0 0
  %314 = vmatmul.mubr.bf16.gmra.mrb[0].mxu0 %v191
  %v315 = vpop.f32.mrb[0].mxu0
  %v316 = vadd.f32 %v60, %v315
  %v317 = vpop.f32.mrb[0].mxu0
  %v318 = vpop.f32.mrb[0].mxu0
  %v319 = vadd.f32 %v60, %v318
  %v320 = vpop.f32.mrb[0].mxu0
  %321 = vmatprep.mubr.bf16.mxu0 0
  %322 = vmatmul.mubr.bf16.gmra.mrb[0].mxu0 %v194
  %v323 = vpop.f32.mrb[0].mxu0
  %v324 = vadd.f32 %v60, %v323
  %v325 = vpop.f32.mrb[0].mxu0
  %v326 = vpop.f32.mrb[0].mxu0
  %v327 = vadd.f32 %v60, %v326
  %v328 = vpop.f32.mrb[0].mxu0
  %329 = vmatprep.mubr.bf16.mxu0 0
  %330 = vmatmul.mubr.bf16.gmra.mrb[0].mxu0 %v197
  %v331 = vpop.f32.mrb[0].mxu0
  %v332 = vadd.f32 %v60, %v331
  %v333 = vpop.f32.mrb[0].mxu0
  %v334 = vpop.f32.mrb[0].mxu0
  %v335 = vadd.f32 %v60, %v334
  %v336 = vpop.f32.mrb[0].mxu0
  %337 = vmatprep.mubr.bf16.mxu0 0
  %338 = vmatmul.mubr.bf16.gmra.mrb[0].mxu0 %v200
  %v339 = vpop.f32.mrb[0].mxu0
  %v340 = vadd.f32 %v60, %v339
  %v341 = vpop.f32.mrb[0].mxu0
  %v342 = vpop.f32.mrb[0].mxu0
  %v343 = vadd.f32 %v60, %v342
  %v344 = vpop.f32.mrb[0].mxu0
  %345 = vmatprep.mubr.bf16.mxu0 0
  %346 = vmatmul.mubr.bf16.gmra.mrb[0].mxu0 %v203
  %v347 = vpop.f32.mrb[0].mxu0
  %v348 = vadd.f32 %v60, %v347
  %v349 = vpop.f32.mrb[0].mxu0
  %v350 = vpop.f32.mrb[0].mxu0
  %v351 = vadd.f32 %v60, %v350
  %v352 = vpop.f32.mrb[0].mxu0
  %353 = vmatprep.mubr.bf16.mxu0 0
  %354 = vmatmul.mubr.bf16.gmra.mrb[0].mxu0 %v206
  %v355 = vpop.f32.mrb[0].mxu0
  %v356 = vadd.f32 %v60, %v355
  %v357 = vpop.f32.mrb[0].mxu0
  %v358 = vpop.f32.mrb[0].mxu0
  %v359 = vadd.f32 %v60, %v358
  %v360 = vpop.f32.mrb[0].mxu0
  %361 = vmatprep.mubr.bf16.mxu0 0
  %362 = vmatmul.mubr.bf16.gmra.mrb[0].mxu0 %v209
  %v363 = vpop.f32.mrb[0].mxu0
  %v364 = vadd.f32 %v60, %v363
  %v365 = vpop.f32.mrb[0].mxu0
  %v366 = vpop.f32.mrb[0].mxu0
  %v367 = vadd.f32 %v60, %v366
  %v368 = vpop.f32.mrb[0].mxu0
  %369 = vmatprep.mubr.bf16.mxu0 0
  %370 = vmatmul.mubr.bf16.gmra.mrb[0].mxu0 %v212
  %v371 = vpop.f32.mrb[0].mxu0
  %v372 = vadd.f32 %v60, %v371
  %v373 = vpop.f32.mrb[0].mxu0
  %v374 = vpop.f32.mrb[0].mxu0
  %v375 = vadd.f32 %v60, %v374
  %v376 = vpop.f32.mrb[0].mxu0
  %377 = vmatprep.mubr.bf16.mxu0 0
  %378 = vmatmul.mubr.bf16.gmra.mrb[0].mxu0 %v215
  %v379 = vpop.f32.mrb[0].mxu0
  %v380 = vadd.f32 %v60, %v379
  %v381 = vpop.f32.mrb[0].mxu0
  %v382 = vpop.f32.mrb[0].mxu0
  %v383 = vadd.f32 %v60, %v382
  %v384 = vpop.f32.mrb[0].mxu0
  %385 = vdwg.mxu0
  %v386 = vmax.f32 %v252, 0.0
  %v387 = vmax.f32 %v255, 0.0
  %v388 = vmax.f32 %v260, 0.0
  %v389 = vmax.f32 %v263, 0.0
  %v390 = vmax.f32 %v268, 0.0
  %v391 = vmax.f32 %v271, 0.0
  %v392 = vmax.f32 %v276, 0.0
  %v393 = vmax.f32 %v279, 0.0
  %v394 = vmax.f32 %v284, 0.0
  %v395 = vmax.f32 %v287, 0.0
  %v396 = vmax.f32 %v292, 0.0
  %v397 = vmax.f32 %v295, 0.0
  %v398 = vmax.f32 %v300, 0.0
  %v399 = vmax.f32 %v303, 0.0
  %v400 = vmax.f32 %v308, 0.0
  %v401 = vmax.f32 %v311, 0.0
  %v402 = vmax.f32 %v316, 0.0
  %v403 = vmax.f32 %v319, 0.0
  %v404 = vmax.f32 %v324, 0.0
  %v405 = vmax.f32 %v327, 0.0
  %v406 = vmax.f32 %v332, 0.0
  %v407 = vmax.f32 %v335, 0.0
  %v408 = vmax.f32 %v340, 0.0
  %v409 = vmax.f32 %v343, 0.0
  %v410 = vmax.f32 %v348, 0.0
  %v411 = vmax.f32 %v351, 0.0
  %v412 = vmax.f32 %v356, 0.0
  %v413 = vmax.f32 %v359, 0.0
  %v414 = vmax.f32 %v364, 0.0
  %v415 = vmax.f32 %v367, 0.0
  %v416 = vmax.f32 %v372, 0.0
  %v417 = vmax.f32 %v375, 0.0
  %v418 = vmax.f32 %v380, 0.0
  %v419 = vmax.f32 %v383, 0.0
  %v420 = vpack.c.bf16 %v387, %v386
  %v421 = vpack.c.bf16 %v389, %v388
  %v422 = vpack.c.bf16 %v391, %v390
  %v423 = vpack.c.bf16 %v393, %v392
  %v424 = vpack.c.bf16 %v395, %v394
  %v425 = vpack.c.bf16 %v397, %v396
  %v426 = vpack.c.bf16 %v399, %v398
  %v427 = vpack.c.bf16 %v401, %v400
  %v428 = vpack.c.bf16 %v403, %v402
  %v429 = vpack.c.bf16 %v405, %v404
  %v430 = vpack.c.bf16 %v407, %v406
  %v431 = vpack.c.bf16 %v409, %v408
  %v432 = vpack.c.bf16 %v411, %v410
  %v433 = vpack.c.bf16 %v413, %v412
  %v434 = vpack.c.bf16 %v415, %v414
  %v435 = vpack.c.bf16 %v417, %v416
  %v436 = vpack.c.bf16 %v419, %v418
  %v454 = vunpack.c.l.b16 %v420
  %v455 = vunpack.c.h.b16 %v420
  %v456 = vunpack.c.l.b16 %v421
  %v457 = vunpack.c.h.b16 %v421
  %v458 = vunpack.c.l.b16 %v422
  %v459 = vunpack.c.h.b16 %v422
  %v460 = vunpack.c.l.b16 %v423
  %v461 = vunpack.c.h.b16 %v423
  %v462 = vunpack.c.l.b16 %v424
  %v463 = vunpack.c.h.b16 %v424
  %v464 = vunpack.c.l.b16 %v425
  %v465 = vunpack.c.h.b16 %v425
  %v466 = vunpack.c.l.b16 %v426
  %v467 = vunpack.c.h.b16 %v426
  %v468 = vunpack.c.l.b16 %v427
  %v469 = vunpack.c.h.b16 %v427
  %v470 = vunpack.c.l.b16 %v428
  %v471 = vunpack.c.h.b16 %v428
  %v472 = vunpack.c.l.b16 %v429
  %v473 = vunpack.c.h.b16 %v429
  %v474 = vunpack.c.l.b16 %v430
  %v475 = vunpack.c.h.b16 %v430
  %v476 = vunpack.c.l.b16 %v431
  %v477 = vunpack.c.h.b16 %v431
  %v478 = vunpack.c.l.b16 %v432
  %v479 = vunpack.c.h.b16 %v432
  %v480 = vunpack.c.l.b16 %v433
  %v481 = vunpack.c.h.b16 %v433
  %v482 = vunpack.c.l.b16 %v434
  %v483 = vunpack.c.h.b16 %v434
  %v484 = vunpack.c.l.b16 %v435
  %v485 = vunpack.c.h.b16 %v435
  %v486 = vunpack.c.l.b16 %v436
  %v487 = vunpack.c.h.b16 %v436
  %v488 = vpack.c.b16 %v454, %v454
  %v489 = vpack.c.b16 %v455, %v455
  %v490 = vpack.c.b16 %v456, %v456
  %v491 = vpack.c.b16 %v457, %v457
  %v492 = vpack.c.b16 %v458, %v458
  %v493 = vpack.c.b16 %v459, %v459
  %v494 = vpack.c.b16 %v460, %v460
  %v495 = vpack.c.b16 %v461, %v461
  %v496 = vpack.c.b16 %v462, %v462
  %v497 = vpack.c.b16 %v463, %v463
  %v498 = vpack.c.b16 %v464, %v464
  %v499 = vpack.c.b16 %v465, %v465
  %v500 = vpack.c.b16 %v466, %v466
  %v501 = vpack.c.b16 %v467, %v467
  %v502 = vpack.c.b16 %v468, %v468
  %v503 = vpack.c.b16 %v469, %v469
  %v504 = vpack.c.b16 %v470, %v470
  %v505 = vpack.c.b16 %v471, %v471
  %v506 = vpack.c.b16 %v472, %v472
  %v507 = vpack.c.b16 %v473, %v473
  %v508 = vpack.c.b16 %v474, %v474
  %v509 = vpack.c.b16 %v475, %v475
  %v510 = vpack.c.b16 %v476, %v476
  %v511 = vpack.c.b16 %v477, %v477
  %v512 = vpack.c.b16 %v478, %v478
  %v513 = vpack.c.b16 %v479, %v479
  %v514 = vpack.c.b16 %v480, %v480
  %v515 = vpack.c.b16 %v481, %v481
  %v516 = vpack.c.b16 %v482, %v482
  %v517 = vpack.c.b16 %v483, %v483
  %v518 = vpack.c.b16 %v484, %v484
  %v519 = vpack.c.b16 %v485, %v485
  %v520 = vpack.c.b16 %v486, %v486
  %v521 = vpack.c.b16 %v487, %v487
  %vm556 = vcmask 257024
  %557 = vst.msk [vmem:[%s3] sm:$0xf] %vm556, %v488
  %558 = vst.msk [vmem:[%s3 + $0x4] sm:$0xf] %vm556, %v489
  %559 = vst.msk [vmem:[%s3 + $0x8] sm:$0xf] %vm556, %v490
  %560 = vst.msk [vmem:[%s3 + $0xc] sm:$0xf] %vm556, %v491
  %561 = vst.msk [vmem:[%s3 + $0x10] sm:$0xf] %vm556, %v492
  %562 = vst.msk [vmem:[%s3 + $0x14] sm:$0xf] %vm556, %v493
  %563 = vst.msk [vmem:[%s3 + $0x18] sm:$0xf] %vm556, %v494
  %564 = vst.msk [vmem:[%s3 + $0x1c] sm:$0xf] %vm556, %v495
  %565 = vst.msk [vmem:[%s3 + $0x20] sm:$0xf] %vm556, %v496
  %566 = vst.msk [vmem:[%s3 + $0x24] sm:$0xf] %vm556, %v497
  %567 = vst.msk [vmem:[%s3 + $0x28] sm:$0xf] %vm556, %v498
  %568 = vst.msk [vmem:[%s3 + $0x2c] sm:$0xf] %vm556, %v499
  %569 = vst.msk [vmem:[%s3 + $0x30] sm:$0xf] %vm556, %v500
  %570 = vst.msk [vmem:[%s3 + $0x34] sm:$0xf] %vm556, %v501
  %571 = vst.msk [vmem:[%s3 + $0x38] sm:$0xf] %vm556, %v502
  %572 = vst.msk [vmem:[%s3 + $0x3c] sm:$0xf] %vm556, %v503
  %573 = vst.msk [vmem:[%s3 + $0x40] sm:$0xf] %vm556, %v504
  %574 = vst.msk [vmem:[%s3 + $0x44] sm:$0xf] %vm556, %v505
  %575 = vst.msk [vmem:[%s3 + $0x48] sm:$0xf] %vm556, %v506
  %576 = vst.msk [vmem:[%s3 + $0x4c] sm:$0xf] %vm556, %v507
  %577 = vst.msk [vmem:[%s3 + $0x50] sm:$0xf] %vm556, %v508
  %578 = vst.msk [vmem:[%s3 + $0x54] sm:$0xf] %vm556, %v509
  %579 = vst.msk [vmem:[%s3 + $0x58] sm:$0xf] %vm556, %v510
  %580 = vst.msk [vmem:[%s3 + $0x5c] sm:$0xf] %vm556, %v511
  %581 = vst.msk [vmem:[%s3 + $0x60] sm:$0xf] %vm556, %v512
  %582 = vst.msk [vmem:[%s3 + $0x64] sm:$0xf] %vm556, %v513
  %583 = vst.msk [vmem:[%s3 + $0x68] sm:$0xf] %vm556, %v514
  %584 = vst.msk [vmem:[%s3 + $0x6c] sm:$0xf] %vm556, %v515
  %585 = vst.msk [vmem:[%s3 + $0x70] sm:$0xf] %vm556, %v516
  %586 = vst.msk [vmem:[%s3 + $0x74] sm:$0xf] %vm556, %v517
  %587 = vst.msk [vmem:[%s3 + $0x78] sm:$0xf] %vm556, %v518
  %588 = vst.msk [vmem:[%s3 + $0x7c] sm:$0xf] %vm556, %v519
  %589 = vst.msk [vmem:[%s3 + $0x80] sm:$0xf] %vm556, %v520
  %590 = vst.msk [vmem:[%s3 + $0x84] sm:$0xf] %vm556, %v521
  // Predicated region
  $region14: #{forward.3} parent=0 // pred_check
    _
  $region15: #{forward.3} parent=0 // pred_check_branch
    %592 = sbr.rel (0) target = $region17
  $region16: #{forward.3} parent=0 // pred_region
    _
  $region17: #{forward.3} parent=0 // pred_fallthru
    _
  // Predicated region
  $region18: #{forward.3} parent=0 // pred_check
    _
  $region19: #{forward.3} parent=0 // pred_check_branch
    %594 = sbr.rel (0) target = $region21
  $region20: #{forward.3} parent=0 // pred_region
    _
  $region21: #{forward.3} parent=0 // pred_fallthru
    _

// kernel: forward.4
$region0: #{forward.4}
  #allocation0 [shape = 'u32[]', space=smem, size = 0x4, offset = 0x4, fixed_abs, tag = 'smem constant byte address 0x4 - core index']
  #allocation1 [shape = 'u32[144,128]{1,0:T(1,128)}', space=vmem, size = 0x12000, scoped, tag = 'internal scratch']
  %s0 = inlined_call_operand.vmem [shape: bf16[56,288], index: 0, kind: input, shape index: {}]
  %s1 = inlined_call_operand.vmem [shape: bf16[288,256], index: 1, kind: input, shape index: {}]
  %s2 = inlined_call_operand.vmem [shape: f32[1,256], index: 2, kind: input, shape index: {}]
  %s3 = inlined_call_operand.vmem [shape: bf16[56,256], index: 3, kind: output, shape index: {}]
  %s4 = sld [smem:[#allocation0]]
  $region56: #{forward.4} parent=0
    _
  %s6 = ssub.s32 1, %s4
  %s7 = scalar_select 0, %s6, %s4
  $region1: #{forward.4} parent=0
    #allocation2 [shape = 'u8[32768]{0}', space=vmem, size = 0x8000, scoped, tag = 'output window, operand 0, single buffered']
    // Predicated region
    $region2: #{forward.4} parent=1 // pred_check
      _
    $region3: #{forward.4} parent=1 // pred_check_branch
      %9 = sbr.rel (0) target = $region5
    $region4: #{forward.4} parent=1 // pred_region
      _
    $region5: #{forward.4} parent=1 // pred_fallthru
      _
    // Predicated region
    $region6: #{forward.4} parent=1 // pred_check
      _
    $region7: #{forward.4} parent=1 // pred_check_branch
      %11 = sbr.rel (0) target = $region9
    $region8: #{forward.4} parent=1 // pred_region
      _
    $region9: #{forward.4} parent=1 // pred_fallthru
      _
    // Predicated region
    $region10: #{forward.4} parent=1 // pred_check
      _
    $region11: #{forward.4} parent=1 // pred_check_branch
      %13 = sbr.rel (0) target = $region13
    $region12: #{forward.4} parent=1 // pred_region
      _
    $region13: #{forward.4} parent=1 // pred_fallthru
      _
    %v15 = vld [vmem:[%s0] sm:$0xff]
    %v16 = vld [vmem:[%s0 + $0x8] sm:$0xf]
    %v17 = vld [vmem:[%s0 + $0xc] sm:$0xff]
    %v18 = vld [vmem:[%s0 + $0x14] sm:$0xf]
    %v19 = vld [vmem:[%s0 + $0x18] sm:$0xff]
    %v20 = vld [vmem:[%s0 + $0x20] sm:$0xf]
    %v21 = vld [vmem:[%s0 + $0x24] sm:$0xff]
    %v22 = vld [vmem:[%s0 + $0x2c] sm:$0xf]
    %v23 = vld [vmem:[%s0 + $0x30] sm:$0xff]
    %v24 = vld [vmem:[%s0 + $0x38] sm:$0xf]
    %v25 = vld [vmem:[%s0 + $0x3c] sm:$0xff]
    %v26 = vld [vmem:[%s0 + $0x44] sm:$0xf]
    %v27 = vld [vmem:[%s0 + $0x48] sm:$0xff]
    %v28 = vld [vmem:[%s0 + $0x50] sm:$0xf]
    %v29 = vld [vmem:[%s0 + $0x54] sm:$0xff]
    %v30 = vld [vmem:[%s0 + $0x5c] sm:$0xf]
    %v31 = vld [vmem:[%s1] sm:$0xff]
    %v32 = vld [vmem:[%s1 + $0x8] sm:$0xff]
    %v33 = vld [vmem:[%s1 + $0x10] sm:$0xff]
    %v34 = vld [vmem:[%s1 + $0x18] sm:$0xff]
    %v35 = vld [vmem:[%s1 + $0x20] sm:$0xff]
    %v36 = vld [vmem:[%s1 + $0x28] sm:$0xff]
    %v37 = vld [vmem:[%s1 + $0x30] sm:$0xff]
    %v38 = vld [vmem:[%s1 + $0x38] sm:$0xff]
    %v39 = vld [vmem:[%s1 + $0x40] sm:$0xff]
    %v40 = vld [vmem:[%s1 + $0x48] sm:$0xff]
    %v41 = vld [vmem:[%s1 + $0x50] sm:$0xff]
    %v42 = vld [vmem:[%s1 + $0x58] sm:$0xff]
    %v43 = vld [vmem:[%s1 + $0x60] sm:$0xff]
    %v44 = vld [vmem:[%s1 + $0x68] sm:$0xff]
    %v45 = vld [vmem:[%s1 + $0x70] sm:$0xff]
    %v46 = vld [vmem:[%s1 + $0x78] sm:$0xff]
    %v47 = vld [vmem:[%s1 + $0x80] sm:$0xff]
    %v48 = vld [vmem:[%s1 + $0x88] sm:$0xff]
    %v49 = vld [vmem:[%s1 + $0x90] sm:$0xff]
    %v50 = vld [vmem:[%s1 + $0x98] sm:$0xff]
    %v51 = vld [vmem:[%s1 + $0xa0] sm:$0xff]
    %v52 = vld [vmem:[%s1 + $0xa8] sm:$0xff]
    %v53 = vld [vmem:[%s1 + $0xb0] sm:$0xff]
    %v54 = vld [vmem:[%s1 + $0xb8] sm:$0xff]
    %v55 = vld [vmem:[%s1 + $0xc0] sm:$0xff]
    %v56 = vld [vmem:[%s1 + $0xc8] sm:$0xff]
    %v57 = vld [vmem:[%s1 + $0xd0] sm:$0xff]
    %v58 = vld [vmem:[%s1 + $0xd8] sm:$0xff]
    %v59 = vld [vmem:[%s1 + $0xe0] sm:$0xff]
    %v60 = vld [vmem:[%s1 + $0xe8] sm:$0xff]
    %v61 = vld [vmem:[%s1 + $0xf0] sm:$0xff]
    %v62 = vld [vmem:[%s1 + $0xf8] sm:$0xff]
    %v63 = vld [vmem:[%s1 + $0x100] sm:$0xff]
    %v64 = vld [vmem:[%s1 + $0x108] sm:$0xff]
    %v65 = vld [vmem:[%s1 + $0x110] sm:$0xff]
    %v66 = vld [vmem:[%s1 + $0x118] sm:$0xff]
    %v67 = vld [vmem:[%s2] sm:$0x3]
    %v69 = vlaneseq
    %v70 = vshrl.u32 %v69, 7
    %v71 = vsub.s32 0, %v70
    %v72 = vrot.slane %v67, %v71
    %v73 = vlaneseq
    %v74 = vshrl.u32 %v73, 7
    %v75 = vsub.s32 1, %v74
    %v76 = vrot.slane %v67, %v75
    %v95 = vunpack.c.l.b16 %v15
    %v96 = vunpack.c.h.b16 %v15
    %v97 = vunpack.c.l.b16 %v16
    %v98 = vunpack.c.l.b16 %v17
    %v99 = vunpack.c.h.b16 %v17
    %v100 = vunpack.c.l.b16 %v18
    %v101 = vunpack.c.l.b16 %v19
    %v102 = vunpack.c.h.b16 %v19
    %v103 = vunpack.c.l.b16 %v20
    %v104 = vunpack.c.l.b16 %v21
    %v105 = vunpack.c.h.b16 %v21
    %v106 = vunpack.c.l.b16 %v22
    %v107 = vunpack.c.l.b16 %v23
    %v108 = vunpack.c.h.b16 %v23
    %v109 = vunpack.c.l.b16 %v24
    %v110 = vunpack.c.l.b16 %v25
    %v111 = vunpack.c.h.b16 %v25
    %v112 = vunpack.c.l.b16 %v26
    %v113 = vunpack.c.l.b16 %v27
    %v114 = vunpack.c.h.b16 %v27
    %v115 = vunpack.c.l.b16 %v28
    %v116 = vunpack.c.l.b16 %v29
    %v117 = vunpack.c.h.b16 %v29
    %v118 = vunpack.c.l.b16 %v30
    %v119 = vpack.c.b16 %v98, %v95
    %v120 = vpack.c.b16 %v99, %v96
    %v121 = vpack.c.b16 %v100, %v97
    %v122 = vpack.c.b16 %v104, %v101
    %v123 = vpack.c.b16 %v105, %v102
    %v124 = vpack.c.b16 %v106, %v103
    %v125 = vpack.c.b16 %v110, %v107
    %v126 = vpack.c.b16 %v111, %v108
    %v127 = vpack.c.b16 %v112, %v109
    %v128 = vpack.c.b16 %v116, %v113
    %v129 = vpack.c.b16 %v117, %v114
    %v130 = vpack.c.b16 %v118, %v115
    %v175 = vunpack.c.l.b16 %v31
    %v176 = vunpack.c.h.b16 %v31
    %v177 = vunpack.c.l.b16 %v32
    %v178 = vunpack.c.h.b16 %v32
    %v179 = vunpack.c.l.b16 %v33
    %v180 = vunpack.c.h.b16 %v33
    %v181 = vunpack.c.l.b16 %v34
    %v182 = vunpack.c.h.b16 %v34
    %v183 = vunpack.c.l.b16 %v35
    %v184 = vunpack.c.h.b16 %v35
    %v185 = vunpack.c.l.b16 %v36
    %v186 = vunpack.c.h.b16 %v36
    %v187 = vunpack.c.l.b16 %v37
    %v188 = vunpack.c.h.b16 %v37
    %v189 = vunpack.c.l.b16 %v38
    %v190 = vunpack.c.h.b16 %v38
    %v191 = vunpack.c.l.b16 %v39
    %v192 = vunpack.c.h.b16 %v39
    %v193 = vunpack.c.l.b16 %v40
    %v194 = vunpack.c.h.b16 %v40
    %v195 = vunpack.c.l.b16 %v41
    %v196 = vunpack.c.h.b16 %v41
    %v197 = vunpack.c.l.b16 %v42
    %v198 = vunpack.c.h.b16 %v42
    %v199 = vunpack.c.l.b16 %v43
    %v200 = vunpack.c.h.b16 %v43
    %v201 = vunpack.c.l.b16 %v44
    %v202 = vunpack.c.h.b16 %v44
    %v203 = vunpack.c.l.b16 %v45
    %v204 = vunpack.c.h.b16 %v45
    %v205 = vunpack.c.l.b16 %v46
    %v206 = vunpack.c.h.b16 %v46
    %v207 = vunpack.c.l.b16 %v47
    %v208 = vunpack.c.h.b16 %v47
    %v209 = vunpack.c.l.b16 %v48
    %v210 = vunpack.c.h.b16 %v48
    %v211 = vunpack.c.l.b16 %v49
    %v212 = vunpack.c.h.b16 %v49
    %v213 = vunpack.c.l.b16 %v50
    %v214 = vunpack.c.h.b16 %v50
    %v215 = vunpack.c.l.b16 %v51
    %v216 = vunpack.c.h.b16 %v51
    %v217 = vunpack.c.l.b16 %v52
    %v218 = vunpack.c.h.b16 %v52
    %v219 = vunpack.c.l.b16 %v53
    %v220 = vunpack.c.h.b16 %v53
    %v221 = vunpack.c.l.b16 %v54
    %v222 = vunpack.c.h.b16 %v54
    %v223 = vunpack.c.l.b16 %v55
    %v224 = vunpack.c.h.b16 %v55
    %v225 = vunpack.c.l.b16 %v56
    %v226 = vunpack.c.h.b16 %v56
    %v227 = vunpack.c.l.b16 %v57
    %v228 = vunpack.c.h.b16 %v57
    %v229 = vunpack.c.l.b16 %v58
    %v230 = vunpack.c.h.b16 %v58
    %v231 = vunpack.c.l.b16 %v59
    %v232 = vunpack.c.h.b16 %v59
    %v233 = vunpack.c.l.b16 %v60
    %v234 = vunpack.c.h.b16 %v60
    %v235 = vunpack.c.l.b16 %v61
    %v236 = vunpack.c.h.b16 %v61
    %v237 = vunpack.c.l.b16 %v62
    %v238 = vunpack.c.h.b16 %v62
    %v239 = vunpack.c.l.b16 %v63
    %v240 = vunpack.c.h.b16 %v63
    %v241 = vunpack.c.l.b16 %v64
    %v242 = vunpack.c.h.b16 %v64
    %v243 = vunpack.c.l.b16 %v65
    %v244 = vunpack.c.h.b16 %v65
    %v245 = vunpack.c.l.b16 %v66
    %v246 = vunpack.c.h.b16 %v66
    %v247 = vpack.c.b16 %v177, %v175
    %v248 = vpack.c.b16 %v178, %v176
    %v249 = vpack.c.b16 %v181, %v179
    %v250 = vpack.c.b16 %v182, %v180
    %v251 = vpack.c.b16 %v185, %v183
    %v252 = vpack.c.b16 %v186, %v184
    %v253 = vpack.c.b16 %v189, %v187
    %v254 = vpack.c.b16 %v190, %v188
    %v255 = vpack.c.b16 %v193, %v191
    %v256 = vpack.c.b16 %v194, %v192
    %v257 = vpack.c.b16 %v197, %v195
    %v258 = vpack.c.b16 %v198, %v196
    %v259 = vpack.c.b16 %v201, %v199
    %v260 = vpack.c.b16 %v202, %v200
    %v261 = vpack.c.b16 %v205, %v203
    %v262 = vpack.c.b16 %v206, %v204
    %v263 = vpack.c.b16 %v209, %v207
    %v264 = vpack.c.b16 %v210, %v208
    %v265 = vpack.c.b16 %v213, %v211
    %v266 = vpack.c.b16 %v214, %v212
    %v267 = vpack.c.b16 %v217, %v215
    %v268 = vpack.c.b16 %v218, %v216
    %v269 = vpack.c.b16 %v221, %v219
    %v270 = vpack.c.b16 %v222, %v220
    %v271 = vpack.c.b16 %v225, %v223
    %v272 = vpack.c.b16 %v226, %v224
    %v273 = vpack.c.b16 %v229, %v227
    %v274 = vpack.c.b16 %v230, %v228
    %v275 = vpack.c.b16 %v233, %v231
    %v276 = vpack.c.b16 %v234, %v232
    %v277 = vpack.c.b16 %v237, %v235
    %v278 = vpack.c.b16 %v238, %v236
    %v279 = vpack.c.b16 %v241, %v239
    %v280 = vpack.c.b16 %v242, %v240
    %v281 = vpack.c.b16 %v245, %v243
    %v282 = vpack.c.b16 %v246, %v244
    %vm319 = vcmask 261120
    %v321 = vsel %vm319, %v121, 0
    %v324 = vsel %vm319, %v124, 0
    %v327 = vsel %vm319, %v127, 0
    %v330 = vsel %vm319, %v130, 0
    %332 = vmatprep.subr.bf16.mxu0 %v248
    %333 = vmatpush1.bf16.msra.mxu0 %v247
    %334 = vmatprep.subr.bf16.mxu0 %v250
    %335 = vmatpush1.bf16.msra.mxu0 %v249
    %336 = vmatprep.subr.bf16.mxu0 %v252
    %337 = vmatpush1.bf16.msra.mxu0 %v251
    %338 = vmatprep.subr.bf16.mxu0 %v254
    %339 = vmatpush1.bf16.msra.mxu0 %v253
    %340 = vmatprep.subr.bf16.mxu0 %v256
    %341 = vmatpush1.bf16.msra.mxu0 %v255
    %342 = vmatprep.subr.bf16.mxu0 %v258
    %343 = vmatpush1.bf16.msra.mxu0 %v257
    %344 = vmatprep.subr.bf16.mxu0 %v260
    %345 = vmatpush1.bf16.msra.mxu0 %v259
    %346 = vmatprep.subr.bf16.mxu0 %v262
    %347 = vmatpush1.bf16.msra.mxu0 %v261
    %348 = vmatprep.subr.bf16.mxu0 %v264
    %349 = vmatpush1.bf16.msra.mxu0 %v263
    %350 = vmatprep.subr.bf16.mxu0 %v266
    %351 = vmatpush1.bf16.msra.mxu0 %v265
    %352 = vmatprep.subr.bf16.mxu0 %v268
    %353 = vmatpush1.bf16.msra.mxu0 %v267
    %354 = vmatprep.subr.bf16.mxu0 %v270
    %355 = vmatpush1.bf16.msra.mxu0 %v269
    %356 = vmatprep.subr.bf16.mxu0 %v272
    %357 = vmatpush1.bf16.msra.mxu0 %v271
    %358 = vmatprep.subr.bf16.mxu0 %v274
    %359 = vmatpush1.bf16.msra.mxu0 %v273
    %360 = vmatprep.subr.bf16.mxu0 %v276
    %361 = vmatpush1.bf16.msra.mxu0 %v275
    %362 = vmatprep.subr.bf16.mxu0 %v278
    %363 = vmatpush1.bf16.msra.mxu0 %v277
    %364 = vmatprep.mubr.bf16.mxu0 %v120
    %365 = vmatmul.mubr.bf16.gmra.mrb[0].mxu0 %v119
    %v366 = vpop.f32.mrb[0].mxu0
    %v367 = vadd.f32 %v72, %v366
    %v368 = vpop.f32.mrb[0].mxu0
    %v369 = vadd.f32 %v76, %v368
    %v370 = vpop.f32.mrb[0].mxu0
    %v371 = vadd.f32 %v72, %v370
    %v372 = vpop.f32.mrb[0].mxu0
    %v373 = vadd.f32 %v76, %v372
    %374 = vmatprep.mubr.bf16.mxu0 %v123
    %375 = vmatmul.mubr.bf16.gmra.mrb[0].mxu0 %v122
    %v376 = vpop.f32.mrb[0].mxu0
    %v377 = vadd.f32 %v72, %v376
    %v378 = vpop.f32.mrb[0].mxu0
    %v379 = vadd.f32 %v76, %v378
    %v380 = vpop.f32.mrb[0].mxu0
    %v381 = vadd.f32 %v72, %v380
    %v382 = vpop.f32.mrb[0].mxu0
    %v383 = vadd.f32 %v76, %v382
    %384 = vmatprep.mubr.bf16.mxu0 %v126
    %385 = vmatmul.mubr.bf16.gmra.mrb[0].mxu0 %v125
    %v386 = vpop.f32.mrb[0].mxu0
    %v387 = vadd.f32 %v72, %v386
    %v388 = vpop.f32.mrb[0].mxu0
    %v389 = vadd.f32 %v76, %v388
    %v390 = vpop.f32.mrb[0].mxu0
    %v391 = vadd.f32 %v72, %v390
    %v392 = vpop.f32.mrb[0].mxu0
    %v393 = vadd.f32 %v76, %v392
    %394 = vmatprep.mubr.bf16.mxu0 %v129
    %395 = vmatmul.mubr.bf16.gmra.mrb[0].mxu0 %v128
    %v396 = vpop.f32.mrb[0].mxu0
    %v397 = vadd.f32 %v72, %v396
    %v398 = vpop.f32.mrb[0].mxu0
    %v399 = vadd.f32 %v76, %v398
    %v400 = vpop.f32.mrb[0].mxu0
    %v401 = vadd.f32 %v72, %v400
    %v402 = vpop.f32.mrb[0].mxu0
    %v403 = vadd.f32 %v76, %v402
    %404 = vdwg.mxu0
    %405 = vmatprep.subr.bf16.mxu0 %v280
    %406 = vmatpush1.bf16.msra.mxu0 %v279
    %407 = vmatprep.subr.bf16.mxu0 %v282
    %408 = vmatpush1.bf16.msra.mxu0 %v281
    %409 = vmatprep.subr.bf16.mxu0 0
    %410 = vmatpush1.bf16.msra.mxu0 0
    %411 = vmatprep.subr.bf16.mxu0 0
    %412 = vmatpush1.bf16.msra.mxu0 0
    %413 = vmatprep.subr.bf16.mxu0 0
    %414 = vmatpush1.bf16.msra.mxu0 0
    %415 = vmatprep.subr.bf16.mxu0 0
    %416 = vmatpush1.bf16.msra.mxu0 0
    %417 = vmatprep.subr.bf16.mxu0 0
    %418 = vmatpush1.bf16.msra.mxu0 0
    %419 = vmatprep.subr.bf16.mxu0 0
    %420 = vmatpush1.bf16.msra.mxu0 0
    %421 = vmatprep.subr.bf16.mxu0 0
    %422 = vmatpush1.bf16.msra.mxu0 0
    %423 = vmatprep.subr.bf16.mxu0 0
    %424 = vmatpush1.bf16.msra.mxu0 0
    %425 = vmatprep.subr.bf16.mxu0 0
    %426 = vmatpush1.bf16.msra.mxu0 0
    %427 = vmatprep.subr.bf16.mxu0 0
    %428 = vmatpush1.bf16.msra.mxu0 0
    %429 = vmatprep.subr.bf16.mxu0 0
    %430 = vmatpush1.bf16.msra.mxu0 0
    %431 = vmatprep.subr.bf16.mxu0 0
    %432 = vmatpush1.bf16.msra.mxu0 0
    %433 = vmatprep.subr.bf16.mxu0 0
    %434 = vmatpush1.bf16.msra.mxu0 0
    %435 = vmatprep.subr.bf16.mxu0 0
    %436 = vmatpush1.bf16.msra.mxu0 0
    %437 = vmatprep.mubr.bf16.mxu0 0
    %438 = vmatmul.mubr.bf16.gmra.mrb[0].mxu0 %v321
    %v439 = vpop.f32.mrb[0].mxu0
    %v440 = vadd.f32 %v367, %v439
    %v441 = vpop.f32.mrb[0].mxu0
    %v442 = vadd.f32 %v369, %v441
    %v443 = vpop.f32.mrb[0].mxu0
    %v444 = vadd.f32 %v371, %v443
    %v445 = vpop.f32.mrb[0].mxu0
    %v446 = vadd.f32 %v373, %v445
    %447 = vmatprep.mubr.bf16.mxu0 0
    %448 = vmatmul.mubr.bf16.gmra.mrb[0].mxu0 %v324
    %v449 = vpop.f32.mrb[0].mxu0
    %v450 = vadd.f32 %v377, %v449
    %v451 = vpop.f32.mrb[0].mxu0
    %v452 = vadd.f32 %v379, %v451
    %v453 = vpop.f32.mrb[0].mxu0
    %v454 = vadd.f32 %v381, %v453
    %v455 = vpop.f32.mrb[0].mxu0
    %v456 = vadd.f32 %v383, %v455
    %457 = vmatprep.mubr.bf16.mxu0 0
    %458 = vmatmul.mubr.bf16.gmra.mrb[0].mxu0 %v327
    %v459 = vpop.f32.mrb[0].mxu0
    %v460 = vadd.f32 %v387, %v459
    %v461 = vpop.f32.mrb[0].mxu0
    %v462 = vadd.f32 %v389, %v461
    %v463 = vpop.f32.mrb[0].mxu0
    %v464 = vadd.f32 %v391, %v463
    %v465 = vpop.f32.mrb[0].mxu0
    %v466 = vadd.f32 %v393, %v465
    %467 = vmatprep.mubr.bf16.mxu0 0
    %468 = vmatmul.mubr.bf16.gmra.mrb[0].mxu0 %v330
    %v469 = vpop.f32.mrb[0].mxu0
    %v470 = vadd.f32 %v397, %v469
    %v471 = vpop.f32.mrb[0].mxu0
    %v472 = vadd.f32 %v399, %v471
    %v473 = vpop.f32.mrb[0].mxu0
    %v474 = vadd.f32 %v401, %v473
    %v475 = vpop.f32.mrb[0].mxu0
    %v476 = vadd.f32 %v403, %v475
    %477 = vdwg.mxu0
    %v478 = vmax.f32 %v440, 0.0
    %v479 = vmax.f32 %v442, 0.0
    %v480 = vmax.f32 %v444, 0.0
    %v481 = vmax.f32 %v446, 0.0
    %v482 = vmax.f32 %v450, 0.0
    %v483 = vmax.f32 %v452, 0.0
    %v484 = vmax.f32 %v454, 0.0
    %v485 = vmax.f32 %v456, 0.0
    %v486 = vmax.f32 %v460, 0.0
    %v487 = vmax.f32 %v462, 0.0
    %v488 = vmax.f32 %v464, 0.0
    %v489 = vmax.f32 %v466, 0.0
    %v490 = vmax.f32 %v470, 0.0
    %v491 = vmax.f32 %v472, 0.0
    %v492 = vmax.f32 %v474, 0.0
    %v493 = vmax.f32 %v476, 0.0
    %v494 = vpack.c.bf16 %v480, %v478
    %v495 = vpack.c.bf16 %v481, %v479
    %v496 = vpack.c.bf16 %v484, %v482
    %v497 = vpack.c.bf16 %v485, %v483
    %v498 = vpack.c.bf16 %v488, %v486
    %v499 = vpack.c.bf16 %v489, %v487
    %v500 = vpack.c.bf16 %v492, %v490
    %v501 = vpack.c.bf16 %v493, %v491
    %v510 = vunpack.c.l.b16 %v494
    %v511 = vunpack.c.l.b16 %v495
    %v512 = vunpack.c.h.b16 %v494
    %v513 = vunpack.c.h.b16 %v495
    %v514 = vunpack.c.l.b16 %v496
    %v515 = vunpack.c.l.b16 %v497
    %v516 = vunpack.c.h.b16 %v496
    %v517 = vunpack.c.h.b16 %v497
    %v518 = vunpack.c.l.b16 %v498
    %v519 = vunpack.c.l.b16 %v499
    %v520 = vunpack.c.h.b16 %v498
    %v521 = vunpack.c.h.b16 %v499
    %v522 = vunpack.c.l.b16 %v500
    %v523 = vunpack.c.l.b16 %v501
    %v524 = vunpack.c.h.b16 %v500
    %v525 = vunpack.c.h.b16 %v501
    %v526 = vpack.c.b16 %v511, %v510
    %v527 = vpack.c.b16 %v513, %v512
    %v528 = vpack.c.b16 %v515, %v514
    %v529 = vpack.c.b16 %v517, %v516
    %v530 = vpack.c.b16 %v519, %v518
    %v531 = vpack.c.b16 %v521, %v520
    %v532 = vpack.c.b16 %v523, %v522
    %v533 = vpack.c.b16 %v525, %v524
    %542 = vst [vmem:[#allocation2] sm:$0xff] %v526
    %543 = vst [vmem:[#allocation2 + $0x8] sm:$0xff] %v527
    %544 = vst [vmem:[#allocation2 + $0x10] sm:$0xff] %v528
    %545 = vst [vmem:[#allocation2 + $0x18] sm:$0xff] %v529
    %546 = vst [vmem:[#allocation2 + $0x20] sm:$0xff] %v530
    %547 = vst [vmem:[#allocation2 + $0x28] sm:$0xff] %v531
    %548 = vst [vmem:[#allocation2 + $0x30] sm:$0xff] %v532
    %549 = vst [vmem:[#allocation2 + $0x38] sm:$0xff] %v533
    // Predicated region
    $region14: #{forward.4} parent=1 // pred_check
      _
    $region15: #{forward.4} parent=1 // pred_check_branch
      %551 = sbr.rel (0) target = $region17
    $region16: #{forward.4} parent=1 // pred_region
      // Predicated region
      $region18: #{forward.4} parent=16 // pred_check
        _
      $region19: #{forward.4} parent=16 // pred_check_branch
        %553 = sbr.rel (0) target = $region21
      $region20: #{forward.4} parent=16 // pred_region
        // Predicated region
        $region22: #{forward.4} parent=20 // pred_check
          _
        $region23: #{forward.4} parent=20 // pred_check_branch
          %555 = sbr.rel (0) target = $region25
        $region24: #{forward.4} parent=20 // pred_region
          // Predicated region
          $region37: #{forward.4} parent=24 // pred_check
            _
          $region38: #{forward.4} parent=24 // pred_check_branch
            %582 = sbr.rel (0) target = $region40
          $region39: #{forward.4} parent=24 // pred_region
            loop: start=0, step=1, limit=1
            $region41: #{forward.4} parent=39 // loop_pre_header
              _
            $region42: #{forward.4} parent=39 // loop_header
              %s584 = sphi 0, %s588
              %p585 = scmp.ge.s32.totalorder %s584, 1
              %s589 = sphi [#allocation2], [#allocation2]
              %s590 = sphi %s3, %s3
            $region43: #{forward.4} parent=39 // loop_header_branch
              %587 = sbr.rel (%p585) target = $region47
            $region44: #{forward.4} parent=39 // loop_body
              %v591 = vld [vmem:[%s589] sm:$0xff]
              %592 = vst [vmem:[%s590] sm:$0xff] %v591
              %v593 = vld [vmem:[%s589 + $0x8] sm:$0xff]
              %594 = vst [vmem:[%s590 + $0x8] sm:$0xff] %v593
              %v595 = vld [vmem:[%s589 + $0x10] sm:$0xff]
              %596 = vst [vmem:[%s590 + $0x10] sm:$0xff] %v595
              %v597 = vld [vmem:[%s589 + $0x18] sm:$0xff]
              %598 = vst [vmem:[%s590 + $0x18] sm:$0xff] %v597
              %v599 = vld [vmem:[%s589 + $0x20] sm:$0xff]
              %600 = vst [vmem:[%s590 + $0x20] sm:$0xff] %v599
              %v601 = vld [vmem:[%s589 + $0x28] sm:$0xff]
              %602 = vst [vmem:[%s590 + $0x28] sm:$0xff] %v601
              %v603 = vld [vmem:[%s589 + $0x30] sm:$0xff]
              %604 = vst [vmem:[%s590 + $0x30] sm:$0xff] %v603
            $region45: #{forward.4} parent=39 // loop_footer
              %s588 = sadd.s32 1, %s584
            $region46: #{forward.4} parent=39 // loop_footer_branch
              %583 = sbr.rel target = $region42
            $region47: #{forward.4} parent=39 // loop_exit
              _
          $region40: #{forward.4} parent=24 // pred_fallthru
            _
          // Predicated region
          $region48: #{forward.4} parent=24 // pred_check
            _
          $region49: #{forward.4} parent=24 // pred_check_branch
            %606 = sbr.rel target = $region51
          $region50: #{forward.4} parent=24 // pred_region
            _
          $region51: #{forward.4} parent=24 // pred_fallthru
            _
        $region25: #{forward.4} parent=20 // pred_fallthru
          _
        // Predicated region
        $region26: #{forward.4} parent=20 // pred_check
          _
        $region27: #{forward.4} parent=20 // pred_check_branch
          %557 = sbr.rel target = $region29
        $region28: #{forward.4} parent=20 // pred_region
          loop: start=0, step=1, limit=1
          $region30: #{forward.4} parent=28 // loop_pre_header
            _
          $region31: #{forward.4} parent=28 // loop_header
            %s560 = sphi 0, %s564
            %p561 = scmp.ge.s32.totalorder %s560, 1
            %s565 = sphi [#allocation2], [#allocation2]
            %s566 = sphi %s3, %s3
          $region32: #{forward.4} parent=28 // loop_header_branch
            %563 = sbr.rel (%p561) target = $region36
          $region33: #{forward.4} parent=28 // loop_body
            %v567 = vld [vmem:[%s565] sm:$0xff]
            %568 = vst [vmem:[%s566] sm:$0xff] %v567
            %v569 = vld [vmem:[%s565 + $0x8] sm:$0xff]
            %570 = vst [vmem:[%s566 + $0x8] sm:$0xff] %v569
            %v571 = vld [vmem:[%s565 + $0x10] sm:$0xff]
            %572 = vst [vmem:[%s566 + $0x10] sm:$0xff] %v571
            %v573 = vld [vmem:[%s565 + $0x18] sm:$0xff]
            %574 = vst [vmem:[%s566 + $0x18] sm:$0xff] %v573
            %v575 = vld [vmem:[%s565 + $0x20] sm:$0xff]
            %576 = vst [vmem:[%s566 + $0x20] sm:$0xff] %v575
            %v577 = vld [vmem:[%s565 + $0x28] sm:$0xff]
            %578 = vst [vmem:[%s566 + $0x28] sm:$0xff] %v577
            %v579 = vld [vmem:[%s565 + $0x30] sm:$0xff]
            %580 = vst [vmem:[%s566 + $0x30] sm:$0xff] %v579
          $region34: #{forward.4} parent=28 // loop_footer
            %s564 = sadd.s32 1, %s560
          $region35: #{forward.4} parent=28 // loop_footer_branch
            %559 = sbr.rel target = $region31
          $region36: #{forward.4} parent=28 // loop_exit
            _
        $region29: #{forward.4} parent=20 // pred_fallthru
          _
      $region21: #{forward.4} parent=16 // pred_fallthru
        _
      %607 = vnop
    $region17: #{forward.4} parent=1 // pred_fallthru
      _
    // Predicated region
    $region52: #{forward.4} parent=1 // pred_check
      _
    $region53: #{forward.4} parent=1 // pred_check_branch
      %609 = sbr.rel (0) target = $region55
    $region54: #{forward.4} parent=1 // pred_region
      _
    $region55: #{forward.4} parent=1 // pred_fallthru
      _

// kernel: forward.5
$region0: #{forward.5}
  #allocation0 [shape = 'u32[]', space=smem, size = 0x4, offset = 0x4, fixed_abs, tag = 'smem constant byte address 0x4 - core index']
  #allocation1 [shape = 'u32[144,128]{1,0:T(1,128)}', space=vmem, size = 0x12000, scoped, tag = 'internal scratch']
  %s0 = inlined_call_operand.vmem [shape: bf16[2,7168], index: 0, kind: input, shape index: {}]
  %s1 = inlined_call_operand.vmem [shape: bf16[7168,128], index: 1, kind: input, shape index: {}]
  %s2 = inlined_call_operand.vmem [shape: f32[1,128], index: 2, kind: input, shape index: {}]
  %s3 = inlined_call_operand.vmem [shape: bf16[128,128], index: 3, kind: input, shape index: {}]
  %s4 = inlined_call_operand.vmem [shape: f32[1,128], index: 4, kind: input, shape index: {}]
  %s5 = inlined_call_operand.vmem [shape: bf16[128,128], index: 5, kind: input, shape index: {}]
  %s6 = inlined_call_operand.vmem [shape: f32[1,128], index: 6, kind: input, shape index: {}]
  %s7 = inlined_call_operand.hbm [shape: f32[2,128], index: 7, kind: output, shape index: {}]
  %s8 = sld [smem:[#allocation0]]
  $region38: #{forward.5} parent=0
    _
  %s10 = ssub.s32 1, %s8
  %s11 = scalar_select 0, %s10, %s8
  $region1: #{forward.5} parent=0
    #allocation2 [shape = 'u8[8192]{0}', space=vmem, size = 0x2000, scoped, tag = 'output window, operand 0, single buffered']
    #allocation3 [shape = 's32[1]{0}', space=sflag, size = 0x4, scoped, tag = 'scoped memory for forward.5']
    %12 = vsyncpa [#allocation3], 0
    // Predicated region
    $region2: #{forward.5} parent=1 // pred_check
      _
    $region3: #{forward.5} parent=1 // pred_check_branch
      %14 = sbr.rel (0) target = $region5
    $region4: #{forward.5} parent=1 // pred_region
      _
    $region5: #{forward.5} parent=1 // pred_fallthru
      _
    // Predicated region
    $region6: #{forward.5} parent=1 // pred_check
      _
    $region7: #{forward.5} parent=1 // pred_check_branch
      %16 = sbr.rel (0) target = $region9
    $region8: #{forward.5} parent=1 // pred_region
      _
    $region9: #{forward.5} parent=1 // pred_fallthru
      _
    // Predicated region
    $region10: #{forward.5} parent=1 // pred_check
      _
    $region11: #{forward.5} parent=1 // pred_check_branch
      %18 = sbr.rel (0) target = $region13
    $region12: #{forward.5} parent=1 // pred_region
      _
    $region13: #{forward.5} parent=1 // pred_fallthru
      _
    // Predicated region
    $region14: #{forward.5} parent=1 // pred_check
      _
    $region15: #{forward.5} parent=1 // pred_check_branch
      %20 = sbr.rel (0) target = $region17
    $region16: #{forward.5} parent=1 // pred_region
      _
    $region17: #{forward.5} parent=1 // pred_fallthru
      _
    // Predicated region
    $region18: #{forward.5} parent=1 // pred_check
      _
    $region19: #{forward.5} parent=1 // pred_check_branch
      %22 = sbr.rel (0) target = $region21
    $region20: #{forward.5} parent=1 // pred_region
      _
    $region21: #{forward.5} parent=1 // pred_fallthru
      _
    // Predicated region
    $region22: #{forward.5} parent=1 // pred_check
      _
    $region23: #{forward.5} parent=1 // pred_check_branch
      %24 = sbr.rel (0) target = $region25
    $region24: #{forward.5} parent=1 // pred_region
      _
    $region25: #{forward.5} parent=1 // pred_fallthru
      _
    // Predicated region
    $region26: #{forward.5} parent=1 // pred_check
      _
    $region27: #{forward.5} parent=1 // pred_check_branch
      %26 = sbr.rel (0) target = $region29
    $region28: #{forward.5} parent=1 // pred_region
      _
    $region29: #{forward.5} parent=1 // pred_fallthru
      _
    %v28 = vld [vmem:[%s0] sm:$0xff]
    %v29 = vld [vmem:[%s0 + $0x8] sm:$0xff]
    %v30 = vld [vmem:[%s0 + $0x10] sm:$0xff]
    %v31 = vld [vmem:[%s0 + $0x18] sm:$0xff]
    %v32 = vld [vmem:[%s0 + $0x20] sm:$0xff]
    %v33 = vld [vmem:[%s0 + $0x28] sm:$0xff]
    %v34 = vld [vmem:[%s0 + $0x30] sm:$0xff]
    %v35 = vld [vmem:[%s0 + $0x38] sm:$0xff]
    %v36 = vld [vmem:[%s0 + $0x40] sm:$0xff]
    %v37 = vld [vmem:[%s0 + $0x48] sm:$0xff]
    %v38 = vld [vmem:[%s0 + $0x50] sm:$0xff]
    %v39 = vld [vmem:[%s0 + $0x58] sm:$0xff]
    %v40 = vld [vmem:[%s0 + $0x60] sm:$0xff]
    %v41 = vld [vmem:[%s0 + $0x68] sm:$0xff]
    %v42 = vld [vmem:[%s0 + $0x70] sm:$0xff]
    %v43 = vld [vmem:[%s0 + $0x78] sm:$0xff]
    %v44 = vld [vmem:[%s0 + $0x80] sm:$0xff]
    %v45 = vld [vmem:[%s0 + $0x88] sm:$0xff]
    %v46 = vld [vmem:[%s0 + $0x90] sm:$0xff]
    %v47 = vld [vmem:[%s0 + $0x98] sm:$0xff]
    %v48 = vld [vmem:[%s0 + $0xa0] sm:$0xff]
    %v49 = vld [vmem:[%s0 + $0xa8] sm:$0xff]
    %v50 = vld [vmem:[%s0 + $0xb0] sm:$0xff]
    %v51 = vld [vmem:[%s0 + $0xb8] sm:$0xff]
    %v52 = vld [vmem:[%s0 + $0xc0] sm:$0xff]
    %v53 = vld [vmem:[%s0 + $0xc8] sm:$0xff]
    %v54 = vld [vmem:[%s0 + $0xd0] sm:$0xff]
    %v55 = vld [vmem:[%s0 + $0xd8] sm:$0xff]
    %v56 = vld [vmem:[%s0 + $0xe0] sm:$0xff]
    %v57 = vld [vmem:[%s0 + $0xe8] sm:$0xff]
    %v58 = vld [vmem:[%s0 + $0xf0] sm:$0xff]
    %v59 = vld [vmem:[%s0 + $0xf8] sm:$0xff]
    %v60 = vld [vmem:[%s0 + $0x100] sm:$0xff]
    %v61 = vld [vmem:[%s0 + $0x108] sm:$0xff]
    %v62 = vld [vmem:[%s0 + $0x110] sm:$0xff]
    %v63 = vld [vmem:[%s0 + $0x118] sm:$0xff]
    %v64 = vld [vmem:[%s0 + $0x120] sm:$0xff]
    %v65 = vld [vmem:[%s0 + $0x128] sm:$0xff]
    %v66 = vld [vmem:[%s0 + $0x130] sm:$0xff]
    %v67 = vld [vmem:[%s0 + $0x138] sm:$0xff]
    %v68 = vld [vmem:[%s0 + $0x140] sm:$0xff]
    %v69 = vld [vmem:[%s0 + $0x148] sm:$0xff]
    %v70 = vld [vmem:[%s0 + $0x150] sm:$0xff]
    %v71 = vld [vmem:[%s0 + $0x158] sm:$0xff]
    %v72 = vld [vmem:[%s0 + $0x160] sm:$0xff]
    %v73 = vld [vmem:[%s0 + $0x168] sm:$0xff]
    %v74 = vld [vmem:[%s0 + $0x170] sm:$0xff]
    %v75 = vld [vmem:[%s0 + $0x178] sm:$0xff]
    %v76 = vld [vmem:[%s0 + $0x180] sm:$0xff]
    %v77 = vld [vmem:[%s0 + $0x188] sm:$0xff]
    %v78 = vld [vmem:[%s0 + $0x190] sm:$0xff]
    %v79 = vld [vmem:[%s0 + $0x198] sm:$0xff]
    %v80 = vld [vmem:[%s0 + $0x1a0] sm:$0xff]
    %v81 = vld [vmem:[%s0 + $0x1a8] sm:$0xff]
    %v82 = vld [vmem:[%s0 + $0x1b0] sm:$0xff]
    %v83 = vld [vmem:[%s0 + $0x1b8] sm:$0xff]
    %v84 = vld [vmem:[%s1] sm:$0xf]
    %v85 = vld [vmem:[%s1 + $0x4] sm:$0xf]
    %v86 = vld [vmem:[%s1 + $0x8] sm:$0xf]
    %v87 = vld [vmem:[%s1 + $0xc] sm:$0xf]
    %v88 = vld [vmem:[%s1 + $0x10] sm:$0xf]
    %v89 = vld [vmem:[%s1 + $0x14] sm:$0xf]
    %v90 = vld [vmem:[%s1 + $0x18] sm:$0xf]
    %v91 = vld [vmem:[%s1 + $0x1c] sm:$0xf]
    %v92 = vld [vmem:[%s1 + $0x20] sm:$0xf]
    %v93 = vld [vmem:[%s1 + $0x24] sm:$0xf]
    %v94 = vld [vmem:[%s1 + $0x28] sm:$0xf]
    %v95 = vld [vmem:[%s1 + $0x2c] sm:$0xf]
    %v96 = vld [vmem:[%s1 + $0x30] sm:$0xf]
    %v97 = vld [vmem:[%s1 + $0x34] sm:$0xf]
    %v98 = vld [vmem:[%s1 + $0x38] sm:$0xf]
    %v99 = vld [vmem:[%s1 + $0x3c] sm:$0xf]
    %v100 = vld [vmem:[%s1 + $0x40] sm:$0xf]
    %v101 = vld [vmem:[%s1 + $0x44] sm:$0xf]
    %v102 = vld [vmem:[%s1 + $0x48] sm:$0xf]
    %v103 = vld [vmem:[%s1 + $0x4c] sm:$0xf]
    %v104 = vld [vmem:[%s1 + $0x50] sm:$0xf]
    %v105 = vld [vmem:[%s1 + $0x54] sm:$0xf]
    %v106 = vld [vmem:[%s1 + $0x58] sm:$0xf]
    %v107 = vld [vmem:[%s1 + $0x5c] sm:$0xf]
    %v108 = vld [vmem:[%s1 + $0x60] sm:$0xf]
    %v109 = vld [vmem:[%s1 + $0x64] sm:$0xf]
    %v110 = vld [vmem:[%s1 + $0x68] sm:$0xf]
    %v111 = vld [vmem:[%s1 + $0x6c] sm:$0xf]
    %v112 = vld [vmem:[%s1 + $0x70] sm:$0xf]
    %v113 = vld [vmem:[%s1 + $0x74] sm:$0xf]
    %v114 = vld [vmem:[%s1 + $0x78] sm:$0xf]
    %v115 = vld [vmem:[%s1 + $0x7c] sm:$0xf]
    %v116 = vld [vmem:[%s1 + $0x80] sm:$0xf]
    %v117 = vld [vmem:[%s1 + $0x84] sm:$0xf]
    %v118 = vld [vmem:[%s1 + $0x88] sm:$0xf]
    %v119 = vld [vmem:[%s1 + $0x8c] sm:$0xf]
    %v120 = vld [vmem:[%s1 + $0x90] sm:$0xf]
    %v121 = vld [vmem:[%s1 + $0x94] sm:$0xf]
    %v122 = vld [vmem:[%s1 + $0x98] sm:$0xf]
    %v123 = vld [vmem:[%s1 + $0x9c] sm:$0xf]
    %v124 = vld [vmem:[%s1 + $0xa0] sm:$0xf]
    %v125 = vld [vmem:[%s1 + $0xa4] sm:$0xf]
    %v126 = vld [vmem:[%s1 + $0xa8] sm:$0xf]
    %v127 = vld [vmem:[%s1 + $0xac] sm:$0xf]
    %v128 = vld [vmem:[%s1 + $0xb0] sm:$0xf]
    %v129 = vld [vmem:[%s1 + $0xb4] sm:$0xf]
    %v130 = vld [vmem:[%s1 + $0xb8] sm:$0xf]
    %v131 = vld [vmem:[%s1 + $0xbc] sm:$0xf]
    %v132 = vld [vmem:[%s1 + $0xc0] sm:$0xf]
    %v133 = vld [vmem:[%s1 + $0xc4] sm:$0xf]
    %v134 = vld [vmem:[%s1 + $0xc8] sm:$0xf]
    %v135 = vld [vmem:[%s1 + $0xcc] sm:$0xf]
    %v136 = vld [vmem:[%s1 + $0xd0] sm:$0xf]
    %v137 = vld [vmem:[%s1 + $0xd4] sm:$0xf]
    %v138 = vld [vmem:[%s1 + $0xd8] sm:$0xf]
    %v139 = vld [vmem:[%s1 + $0xdc] sm:$0xf]
    %v140 = vld [vmem:[%s1 + $0xe0] sm:$0xf]
    %v141 = vld [vmem:[%s1 + $0xe4] sm:$0xf]
    %v142 = vld [vmem:[%s1 + $0xe8] sm:$0xf]
    %v143 = vld [vmem:[%s1 + $0xec] sm:$0xf]
    %v144 = vld [vmem:[%s1 + $0xf0] sm:$0xf]
    %v145 = vld [vmem:[%s1 + $0xf4] sm:$0xf]
    %v146 = vld [vmem:[%s1 + $0xf8] sm:$0xf]
    %v147 = vld [vmem:[%s1 + $0xfc] sm:$0xf]
    %v148 = vld [vmem:[%s1 + $0x100] sm:$0xf]
    %v149 = vld [vmem:[%s1 + $0x104] sm:$0xf]
    %v150 = vld [vmem:[%s1 + $0x108] sm:$0xf]
    %v151 = vld [vmem:[%s1 + $0x10c] sm:$0xf]
    %v152 = vld [vmem:[%s1 + $0x110] sm:$0xf]
    %v153 = vld [vmem:[%s1 + $0x114] sm:$0xf]
    %v154 = vld [vmem:[%s1 + $0x118] sm:$0xf]
    %v155 = vld [vmem:[%s1 + $0x11c] sm:$0xf]
    %v156 = vld [vmem:[%s1 + $0x120] sm:$0xf]
    %v157 = vld [vmem:[%s1 + $0x124] sm:$0xf]
    %v158 = vld [vmem:[%s1 + $0x128] sm:$0xf]
    %v159 = vld [vmem:[%s1 + $0x12c] sm:$0xf]
    %v160 = vld [vmem:[%s1 + $0x130] sm:$0xf]
    %v161 = vld [vmem:[%s1 + $0x134] sm:$0xf]
    %v162 = vld [vmem:[%s1 + $0x138] sm:$0xf]
    %v163 = vld [vmem:[%s1 + $0x13c] sm:$0xf]
    %v164 = vld [vmem:[%s1 + $0x140] sm:$0xf]
    %v165 = vld [vmem:[%s1 + $0x144] sm:$0xf]
    %v166 = vld [vmem:[%s1 + $0x148] sm:$0xf]
    %v167 = vld [vmem:[%s1 + $0x14c] sm:$0xf]
    %v168 = vld [vmem:[%s1 + $0x150] sm:$0xf]
    %v169 = vld [vmem:[%s1 + $0x154] sm:$0xf]
    %v170 = vld [vmem:[%s1 + $0x158] sm:$0xf]
    %v171 = vld [vmem:[%s1 + $0x15c] sm:$0xf]
    %v172 = vld [vmem:[%s1 + $0x160] sm:$0xf]
    %v173 = vld [vmem:[%s1 + $0x164] sm:$0xf]
    %v174 = vld [vmem:[%s1 + $0x168] sm:$0xf]
    %v175 = vld [vmem:[%s1 + $0x16c] sm:$0xf]
    %v176 = vld [vmem:[%s1 + $0x170] sm:$0xf]
    %v177 = vld [vmem:[%s1 + $0x174] sm:$0xf]
    %v178 = vld [vmem:[%s1 + $0x178] sm:$0xf]
    %v179 = vld [vmem:[%s1 + $0x17c] sm:$0xf]
    %v180 = vld [vmem:[%s1 + $0x180] sm:$0xf]
    %v181 = vld [vmem:[%s1 + $0x184] sm:$0xf]
    %v182 = vld [vmem:[%s1 + $0x188] sm:$0xf]
    %v183 = vld [vmem:[%s1 + $0x18c] sm:$0xf]
    %v184 = vld [vmem:[%s1 + $0x190] sm:$0xf]
    %v185 = vld [vmem:[%s1 + $0x194] sm:$0xf]
    %v186 = vld [vmem:[%s1 + $0x198] sm:$0xf]
    %v187 = vld [vmem:[%s1 + $0x19c] sm:$0xf]
    %v188 = vld [vmem:[%s1 + $0x1a0] sm:$0xf]
    %v189 = vld [vmem:[%s1 + $0x1a4] sm:$0xf]
    %v190 = vld [vmem:[%s1 + $0x1a8] sm:$0xf]
    %v191 = vld [vmem:[%s1 + $0x1ac] sm:$0xf]
    %v192 = vld [vmem:[%s1 + $0x1b0] sm:$0xf]
    %v193 = vld [vmem:[%s1 + $0x1b4] sm:$0xf]
    %v194 = vld [vmem:[%s1 + $0x1b8] sm:$0xf]
    %v195 = vld [vmem:[%s1 + $0x1bc] sm:$0xf]
    %v196 = vld [vmem:[%s1 + $0x1c0] sm:$0xf]
    %v197 = vld [vmem:[%s1 + $0x1c4] sm:$0xf]
    %v198 = vld [vmem:[%s1 + $0x1c8] sm:$0xf]
    %v199 = vld [vmem:[%s1 + $0x1cc] sm:$0xf]
    %v200 = vld [vmem:[%s1 + $0x1d0] sm:$0xf]
    %v201 = vld [vmem:[%s1 + $0x1d4] sm:$0xf]
    %v202 = vld [vmem:[%s1 + $0x1d8] sm:$0xf]
    %v203 = vld [vmem:[%s1 + $0x1dc] sm:$0xf]
    %v204 = vld [vmem:[%s1 + $0x1e0] sm:$0xf]
    %v205 = vld [vmem:[%s1 + $0x1e4] sm:$0xf]
    %v206 = vld [vmem:[%s1 + $0x1e8] sm:$0xf]
    %v207 = vld [vmem:[%s1 + $0x1ec] sm:$0xf]
    %v208 = vld [vmem:[%s1 + $0x1f0] sm:$0xf]
    %v209 = vld [vmem:[%s1 + $0x1f4] sm:$0xf]
    %v210 = vld [vmem:[%s1 + $0x1f8] sm:$0xf]
    %v211 = vld [vmem:[%s1 + $0x1fc] sm:$0xf]
    %v212 = vld [vmem:[%s1 + $0x200] sm:$0xf]
    %v213 = vld [vmem:[%s1 + $0x204] sm:$0xf]
    %v214 = vld [vmem:[%s1 + $0x208] sm:$0xf]
    %v215 = vld [vmem:[%s1 + $0x20c] sm:$0xf]
    %v216 = vld [vmem:[%s1 + $0x210] sm:$0xf]
    %v217 = vld [vmem:[%s1 + $0x214] sm:$0xf]
    %v218 = vld [vmem:[%s1 + $0x218] sm:$0xf]
    %v219 = vld [vmem:[%s1 + $0x21c] sm:$0xf]
    %v220 = vld [vmem:[%s1 + $0x220] sm:$0xf]
    %v221 = vld [vmem:[%s1 + $0x224] sm:$0xf]
    %v222 = vld [vmem:[%s1 + $0x228] sm:$0xf]
    %v223 = vld [vmem:[%s1 + $0x22c] sm:$0xf]
    %v224 = vld [vmem:[%s1 + $0x230] sm:$0xf]
    %v225 = vld [vmem:[%s1 + $0x234] sm:$0xf]
    %v226 = vld [vmem:[%s1 + $0x238] sm:$0xf]
    %v227 = vld [vmem:[%s1 + $0x23c] sm:$0xf]
    %v228 = vld [vmem:[%s1 + $0x240] sm:$0xf]
    %v229 = vld [vmem:[%s1 + $0x244] sm:$0xf]
    %v230 = vld [vmem:[%s1 + $0x248] sm:$0xf]
    %v231 = vld [vmem:[%s1 + $0x24c] sm:$0xf]
    %v232 = vld [vmem:[%s1 + $0x250] sm:$0xf]
    %v233 = vld [vmem:[%s1 + $0x254] sm:$0xf]
    %v234 = vld [vmem:[%s1 + $0x258] sm:$0xf]
    %v235 = vld [vmem:[%s1 + $0x25c] sm:$0xf]
    %v236 = vld [vmem:[%s1 + $0x260] sm:$0xf]
    %v237 = vld [vmem:[%s1 + $0x264] sm:$0xf]
    %v238 = vld [vmem:[%s1 + $0x268] sm:$0xf]
    %v239 = vld [vmem:[%s1 + $0x26c] sm:$0xf]
    %v240 = vld [vmem:[%s1 + $0x270] sm:$0xf]
    %v241 = vld [vmem:[%s1 + $0x274] sm:$0xf]
    %v242 = vld [vmem:[%s1 + $0x278] sm:$0xf]
    %v243 = vld [vmem:[%s1 + $0x27c] sm:$0xf]
    %v244 = vld [vmem:[%s1 + $0x280] sm:$0xf]
    %v245 = vld [vmem:[%s1 + $0x284] sm:$0xf]
    %v246 = vld [vmem:[%s1 + $0x288] sm:$0xf]
    %v247 = vld [vmem:[%s1 + $0x28c] sm:$0xf]
    %v248 = vld [vmem:[%s1 + $0x290] sm:$0xf]
    %v249 = vld [vmem:[%s1 + $0x294] sm:$0xf]
    %v250 = vld [vmem:[%s1 + $0x298] sm:$0xf]
    %v251 = vld [vmem:[%s1 + $0x29c] sm:$0xf]
    %v252 = vld [vmem:[%s1 + $0x2a0] sm:$0xf]
    %v253 = vld [vmem:[%s1 + $0x2a4] sm:$0xf]
    %v254 = vld [vmem:[%s1 + $0x2a8] sm:$0xf]
    %v255 = vld [vmem:[%s1 + $0x2ac] sm:$0xf]
    %v256 = vld [vmem:[%s1 + $0x2b0] sm:$0xf]
    %v257 = vld [vmem:[%s1 + $0x2b4] sm:$0xf]
    %v258 = vld [vmem:[%s1 + $0x2b8] sm:$0xf]
    %v259 = vld [vmem:[%s1 + $0x2bc] sm:$0xf]
    %v260 = vld [vmem:[%s1 + $0x2c0] sm:$0xf]
    %v261 = vld [vmem:[%s1 + $0x2c4] sm:$0xf]
    %v262 = vld [vmem:[%s1 + $0x2c8] sm:$0xf]
    %v263 = vld [vmem:[%s1 + $0x2cc] sm:$0xf]
    %v264 = vld [vmem:[%s1 + $0x2d0] sm:$0xf]
    %v265 = vld [vmem:[%s1 + $0x2d4] sm:$0xf]
    %v266 = vld [vmem:[%s1 + $0x2d8] sm:$0xf]
    %v267 = vld [vmem:[%s1 + $0x2dc] sm:$0xf]
    %v268 = vld [vmem:[%s1 + $0x2e0] sm:$0xf]
    %v269 = vld [vmem:[%s1 + $0x2e4] sm:$0xf]
    %v270 = vld [vmem:[%s1 + $0x2e8] sm:$0xf]
    %v271 = vld [vmem:[%s1 + $0x2ec] sm:$0xf]
    %v272 = vld [vmem:[%s1 + $0x2f0] sm:$0xf]
    %v273 = vld [vmem:[%s1 + $0x2f4] sm:$0xf]
    %v274 = vld [vmem:[%s1 + $0x2f8] sm:$0xf]
    %v275 = vld [vmem:[%s1 + $0x2fc] sm:$0xf]
    %v276 = vld [vmem:[%s1 + $0x300] sm:$0xf]
    %v277 = vld [vmem:[%s1 + $0x304] sm:$0xf]
    %v278 = vld [vmem:[%s1 + $0x308] sm:$0xf]
    %v279 = vld [vmem:[%s1 + $0x30c] sm:$0xf]
    %v280 = vld [vmem:[%s1 + $0x310] sm:$0xf]
    %v281 = vld [vmem:[%s1 + $0x314] sm:$0xf]
    %v282 = vld [vmem:[%s1 + $0x318] sm:$0xf]
    %v283 = vld [vmem:[%s1 + $0x31c] sm:$0xf]
    %v284 = vld [vmem:[%s1 + $0x320] sm:$0xf]
    %v285 = vld [vmem:[%s1 + $0x324] sm:$0xf]
    %v286 = vld [vmem:[%s1 + $0x328] sm:$0xf]
    %v287 = vld [vmem:[%s1 + $0x32c] sm:$0xf]
    %v288 = vld [vmem:[%s1 + $0x330] sm:$0xf]
    %v289 = vld [vmem:[%s1 + $0x334] sm:$0xf]
    %v290 = vld [vmem:[%s1 + $0x338] sm:$0xf]
    %v291 = vld [vmem:[%s1 + $0x33c] sm:$0xf]
    %v292 = vld [vmem:[%s1 + $0x340] sm:$0xf]
    %v293 = vld [vmem:[%s1 + $0x344] sm:$0xf]
    %v294 = vld [vmem:[%s1 + $0x348] sm:$0xf]
    %v295 = vld [vmem:[%s1 + $0x34c] sm:$0xf]
    %v296 = vld [vmem:[%s1 + $0x350] sm:$0xf]
    %v297 = vld [vmem:[%s1 + $0x354] sm:$0xf]
    %v298 = vld [vmem:[%s1 + $0x358] sm:$0xf]
    %v299 = vld [vmem:[%s1 + $0x35c] sm:$0xf]
    %v300 = vld [vmem:[%s1 + $0x360] sm:$0xf]
    %v301 = vld [vmem:[%s1 + $0x364] sm:$0xf]
    %v302 = vld [vmem:[%s1 + $0x368] sm:$0xf]
    %v303 = vld [vmem:[%s1 + $0x36c] sm:$0xf]
    %v304 = vld [vmem:[%s1 + $0x370] sm:$0xf]
    %v305 = vld [vmem:[%s1 + $0x374] sm:$0xf]
    %v306 = vld [vmem:[%s1 + $0x378] sm:$0xf]
    %v307 = vld [vmem:[%s1 + $0x37c] sm:$0xf]
    %v308 = vld [vmem:[%s1 + $0x380] sm:$0xf]
    %v309 = vld [vmem:[%s1 + $0x384] sm:$0xf]
    %v310 = vld [vmem:[%s1 + $0x388] sm:$0xf]
    %v311 = vld [vmem:[%s1 + $0x38c] sm:$0xf]
    %v312 = vld [vmem:[%s1 + $0x390] sm:$0xf]
    %v313 = vld [vmem:[%s1 + $0x394] sm:$0xf]
    %v314 = vld [vmem:[%s1 + $0x398] sm:$0xf]
    %v315 = vld [vmem:[%s1 + $0x39c] sm:$0xf]
    %v316 = vld [vmem:[%s1 + $0x3a0] sm:$0xf]
    %v317 = vld [vmem:[%s1 + $0x3a4] sm:$0xf]
    %v318 = vld [vmem:[%s1 + $0x3a8] sm:$0xf]
    %v319 = vld [vmem:[%s1 + $0x3ac] sm:$0xf]
    %v320 = vld [vmem:[%s1 + $0x3b0] sm:$0xf]
    %v321 = vld [vmem:[%s1 + $0x3b4] sm:$0xf]
    %v322 = vld [vmem:[%s1 + $0x3b8] sm:$0xf]
    %v323 = vld [vmem:[%s1 + $0x3bc] sm:$0xf]
    %v324 = vld [vmem:[%s1 + $0x3c0] sm:$0xf]
    %v325 = vld [vmem:[%s1 + $0x3c4] sm:$0xf]
    %v326 = vld [vmem:[%s1 + $0x3c8] sm:$0xf]
    %v327 = vld [vmem:[%s1 + $0x3cc] sm:$0xf]
    %v328 = vld [vmem:[%s1 + $0x3d0] sm:$0xf]
    %v329 = vld [vmem:[%s1 + $0x3d4] sm:$0xf]
    %v330 = vld [vmem:[%s1 + $0x3d8] sm:$0xf]
    %v331 = vld [vmem:[%s1 + $0x3dc] sm:$0xf]
    %v332 = vld [vmem:[%s1 + $0x3e0] sm:$0xf]
    %v333 = vld [vmem:[%s1 + $0x3e4] sm:$0xf]
    %v334 = vld [vmem:[%s1 + $0x3e8] sm:$0xf]
    %v335 = vld [vmem:[%s1 + $0x3ec] sm:$0xf]
    %v336 = vld [vmem:[%s1 + $0x3f0] sm:$0xf]
    %v337 = vld [vmem:[%s1 + $0x3f4] sm:$0xf]
    %v338 = vld [vmem:[%s1 + $0x3f8] sm:$0xf]
    %v339 = vld [vmem:[%s1 + $0x3fc] sm:$0xf]
    %v340 = vld [vmem:[%s1 + $0x400] sm:$0xf]
    %v341 = vld [vmem:[%s1 + $0x404] sm:$0xf]
    %v342 = vld [vmem:[%s1 + $0x408] sm:$0xf]
    %v343 = vld [vmem:[%s1 + $0x40c] sm:$0xf]
    %v344 = vld [vmem:[%s1 + $0x410] sm:$0xf]
    %v345 = vld [vmem:[%s1 + $0x414] sm:$0xf]
    %v346 = vld [vmem:[%s1 + $0x418] sm:$0xf]
    %v347 = vld [vmem:[%s1 + $0x41c] sm:$0xf]
    %v348 = vld [vmem:[%s1 + $0x420] sm:$0xf]
    %v349 = vld [vmem:[%s1 + $0x424] sm:$0xf]
    %v350 = vld [vmem:[%s1 + $0x428] sm:$0xf]
    %v351 = vld [vmem:[%s1 + $0x42c] sm:$0xf]
    %v352 = vld [vmem:[%s1 + $0x430] sm:$0xf]
    %v353 = vld [vmem:[%s1 + $0x434] sm:$0xf]
    %v354 = vld [vmem:[%s1 + $0x438] sm:$0xf]
    %v355 = vld [vmem:[%s1 + $0x43c] sm:$0xf]
    %v356 = vld [vmem:[%s1 + $0x440] sm:$0xf]
    %v357 = vld [vmem:[%s1 + $0x444] sm:$0xf]
    %v358 = vld [vmem:[%s1 + $0x448] sm:$0xf]
    %v359 = vld [vmem:[%s1 + $0x44c] sm:$0xf]
    %v360 = vld [vmem:[%s1 + $0x450] sm:$0xf]
    %v361 = vld [vmem:[%s1 + $0x454] sm:$0xf]
    %v362 = vld [vmem:[%s1 + $0x458] sm:$0xf]
    %v363 = vld [vmem:[%s1 + $0x45c] sm:$0xf]
    %v364 = vld [vmem:[%s1 + $0x460] sm:$0xf]
    %v365 = vld [vmem:[%s1 + $0x464] sm:$0xf]
    %v366 = vld [vmem:[%s1 + $0x468] sm:$0xf]
    %v367 = vld [vmem:[%s1 + $0x46c] sm:$0xf]
    %v368 = vld [vmem:[%s1 + $0x470] sm:$0xf]
    %v369 = vld [vmem:[%s1 + $0x474] sm:$0xf]
    %v370 = vld [vmem:[%s1 + $0x478] sm:$0xf]
    %v371 = vld [vmem:[%s1 + $0x47c] sm:$0xf]
    %v372 = vld [vmem:[%s1 + $0x480] sm:$0xf]
    %v373 = vld [vmem:[%s1 + $0x484] sm:$0xf]
    %v374 = vld [vmem:[%s1 + $0x488] sm:$0xf]
    %v375 = vld [vmem:[%s1 + $0x48c] sm:$0xf]
    %v376 = vld [vmem:[%s1 + $0x490] sm:$0xf]
    %v377 = vld [vmem:[%s1 + $0x494] sm:$0xf]
    %v378 = vld [vmem:[%s1 + $0x498] sm:$0xf]
    %v379 = vld [vmem:[%s1 + $0x49c] sm:$0xf]
    %v380 = vld [vmem:[%s1 + $0x4a0] sm:$0xf]
    %v381 = vld [vmem:[%s1 + $0x4a4] sm:$0xf]
    %v382 = vld [vmem:[%s1 + $0x4a8] sm:$0xf]
    %v383 = vld [vmem:[%s1 + $0x4ac] sm:$0xf]
    %v384 = vld [vmem:[%s1 + $0x4b0] sm:$0xf]
    %v385 = vld [vmem:[%s1 + $0x4b4] sm:$0xf]
    %v386 = vld [vmem:[%s1 + $0x4b8] sm:$0xf]
    %v387 = vld [vmem:[%s1 + $0x4bc] sm:$0xf]
    %v388 = vld [vmem:[%s1 + $0x4c0] sm:$0xf]
    %v389 = vld [vmem:[%s1 + $0x4c4] sm:$0xf]
    %v390 = vld [vmem:[%s1 + $0x4c8] sm:$0xf]
    %v391 = vld [vmem:[%s1 + $0x4cc] sm:$0xf]
    %v392 = vld [vmem:[%s1 + $0x4d0] sm:$0xf]
    %v393 = vld [vmem:[%s1 + $0x4d4] sm:$0xf]
    %v394 = vld [vmem:[%s1 + $0x4d8] sm:$0xf]
    %v395 = vld [vmem:[%s1 + $0x4dc] sm:$0xf]
    %v396 = vld [vmem:[%s1 + $0x4e0] sm:$0xf]
    %v397 = vld [vmem:[%s1 + $0x4e4] sm:$0xf]
    %v398 = vld [vmem:[%s1 + $0x4e8] sm:$0xf]
    %v399 = vld [vmem:[%s1 + $0x4ec] sm:$0xf]
    %v400 = vld [vmem:[%s1 + $0x4f0] sm:$0xf]
    %v401 = vld [vmem:[%s1 + $0x4f4] sm:$0xf]
    %v402 = vld [vmem:[%s1 + $0x4f8] sm:$0xf]
    %v403 = vld [vmem:[%s1 + $0x4fc] sm:$0xf]
    %v404 = vld [vmem:[%s1 + $0x500] sm:$0xf]
    %v405 = vld [vmem:[%s1 + $0x504] sm:$0xf]
    %v406 = vld [vmem:[%s1 + $0x508] sm:$0xf]
    %v407 = vld [vmem:[%s1 + $0x50c] sm:$0xf]
    %v408 = vld [vmem:[%s1 + $0x510] sm:$0xf]
    %v409 = vld [vmem:[%s1 + $0x514] sm:$0xf]
    %v410 = vld [vmem:[%s1 + $0x518] sm:$0xf]
    %v411 = vld [vmem:[%s1 + $0x51c] sm:$0xf]
    %v412 = vld [vmem:[%s1 + $0x520] sm:$0xf]
    %v413 = vld [vmem:[%s1 + $0x524] sm:$0xf]
    %v414 = vld [vmem:[%s1 + $0x528] sm:$0xf]
    %v415 = vld [vmem:[%s1 + $0x52c] sm:$0xf]
    %v416 = vld [vmem:[%s1 + $0x530] sm:$0xf]
    %v417 = vld [vmem:[%s1 + $0x534] sm:$0xf]
    %v418 = vld [vmem:[%s1 + $0x538] sm:$0xf]
    %v419 = vld [vmem:[%s1 + $0x53c] sm:$0xf]
    %v420 = vld [vmem:[%s1 + $0x540] sm:$0xf]
    %v421 = vld [vmem:[%s1 + $0x544] sm:$0xf]
    %v422 = vld [vmem:[%s1 + $0x548] sm:$0xf]
    %v423 = vld [vmem:[%s1 + $0x54c] sm:$0xf]
    %v424 = vld [vmem:[%s1 + $0x550] sm:$0xf]
    %v425 = vld [vmem:[%s1 + $0x554] sm:$0xf]
    %v426 = vld [vmem:[%s1 + $0x558] sm:$0xf]
    %v427 = vld [vmem:[%s1 + $0x55c] sm:$0xf]
    %v428 = vld [vmem:[%s1 + $0x560] sm:$0xf]
    %v429 = vld [vmem:[%s1 + $0x564] sm:$0xf]
    %v430 = vld [vmem:[%s1 + $0x568] sm:$0xf]
    %v431 = vld [vmem:[%s1 + $0x56c] sm:$0xf]
    %v432 = vld [vmem:[%s1 + $0x570] sm:$0xf]
    %v433 = vld [vmem:[%s1 + $0x574] sm:$0xf]
    %v434 = vld [vmem:[%s1 + $0x578] sm:$0xf]
    %v435 = vld [vmem:[%s1 + $0x57c] sm:$0xf]
    %v436 = vld [vmem:[%s1 + $0x580] sm:$0xf]
    %v437 = vld [vmem:[%s1 + $0x584] sm:$0xf]
    %v438 = vld [vmem:[%s1 + $0x588] sm:$0xf]
    %v439 = vld [vmem:[%s1 + $0x58c] sm:$0xf]
    %v440 = vld [vmem:[%s1 + $0x590] sm:$0xf]
    %v441 = vld [vmem:[%s1 + $0x594] sm:$0xf]
    %v442 = vld [vmem:[%s1 + $0x598] sm:$0xf]
    %v443 = vld [vmem:[%s1 + $0x59c] sm:$0xf]
    %v444 = vld [vmem:[%s1 + $0x5a0] sm:$0xf]
    %v445 = vld [vmem:[%s1 + $0x5a4] sm:$0xf]
    %v446 = vld [vmem:[%s1 + $0x5a8] sm:$0xf]
    %v447 = vld [vmem:[%s1 + $0x5ac] sm:$0xf]
    %v448 = vld [vmem:[%s1 + $0x5b0] sm:$0xf]
    %v449 = vld [vmem:[%s1 + $0x5b4] sm:$0xf]
    %v450 = vld [vmem:[%s1 + $0x5b8] sm:$0xf]
    %v451 = vld [vmem:[%s1 + $0x5bc] sm:$0xf]
    %v452 = vld [vmem:[%s1 + $0x5c0] sm:$0xf]
    %v453 = vld [vmem:[%s1 + $0x5c4] sm:$0xf]
    %v454 = vld [vmem:[%s1 + $0x5c8] sm:$0xf]
    %v455 = vld [vmem:[%s1 + $0x5cc] sm:$0xf]
    %v456 = vld [vmem:[%s1 + $0x5d0] sm:$0xf]
    %v457 = vld [vmem:[%s1 + $0x5d4] sm:$0xf]
    %v458 = vld [vmem:[%s1 + $0x5d8] sm:$0xf]
    %v459 = vld [vmem:[%s1 + $0x5dc] sm:$0xf]
    %v460 = vld [vmem:[%s1 + $0x5e0] sm:$0xf]
    %v461 = vld [vmem:[%s1 + $0x5e4] sm:$0xf]
    %v462 = vld [vmem:[%s1 + $0x5e8] sm:$0xf]
    %v463 = vld [vmem:[%s1 + $0x5ec] sm:$0xf]
    %v464 = vld [vmem:[%s1 + $0x5f0] sm:$0xf]
    %v465 = vld [vmem:[%s1 + $0x5f4] sm:$0xf]
    %v466 = vld [vmem:[%s1 + $0x5f8] sm:$0xf]
    %v467 = vld [vmem:[%s1 + $0x5fc] sm:$0xf]
    %v468 = vld [vmem:[%s1 + $0x600] sm:$0xf]
    %v469 = vld [vmem:[%s1 + $0x604] sm:$0xf]
    %v470 = vld [vmem:[%s1 + $0x608] sm:$0xf]
    %v471 = vld [vmem:[%s1 + $0x60c] sm:$0xf]
    %v472 = vld [vmem:[%s1 + $0x610] sm:$0xf]
    %v473 = vld [vmem:[%s1 + $0x614] sm:$0xf]
    %v474 = vld [vmem:[%s1 + $0x618] sm:$0xf]
    %v475 = vld [vmem:[%s1 + $0x61c] sm:$0xf]
    %v476 = vld [vmem:[%s1 + $0x620] sm:$0xf]
    %v477 = vld [vmem:[%s1 + $0x624] sm:$0xf]
    %v478 = vld [vmem:[%s1 + $0x628] sm:$0xf]
    %v479 = vld [vmem:[%s1 + $0x62c] sm:$0xf]
    %v480 = vld [vmem:[%s1 + $0x630] sm:$0xf]
    %v481 = vld [vmem:[%s1 + $0x634] sm:$0xf]
    %v482 = vld [vmem:[%s1 + $0x638] sm:$0xf]
    %v483 = vld [vmem:[%s1 + $0x63c] sm:$0xf]
    %v484 = vld [vmem:[%s1 + $0x640] sm:$0xf]
    %v485 = vld [vmem:[%s1 + $0x644] sm:$0xf]
    %v486 = vld [vmem:[%s1 + $0x648] sm:$0xf]
    %v487 = vld [vmem:[%s1 + $0x64c] sm:$0xf]
    %v488 = vld [vmem:[%s1 + $0x650] sm:$0xf]
    %v489 = vld [vmem:[%s1 + $0x654] sm:$0xf]
    %v490 = vld [vmem:[%s1 + $0x658] sm:$0xf]
    %v491 = vld [vmem:[%s1 + $0x65c] sm:$0xf]
    %v492 = vld [vmem:[%s1 + $0x660] sm:$0xf]
    %v493 = vld [vmem:[%s1 + $0x664] sm:$0xf]
    %v494 = vld [vmem:[%s1 + $0x668] sm:$0xf]
    %v495 = vld [vmem:[%s1 + $0x66c] sm:$0xf]
    %v496 = vld [vmem:[%s1 + $0x670] sm:$0xf]
    %v497 = vld [vmem:[%s1 + $0x674] sm:$0xf]
    %v498 = vld [vmem:[%s1 + $0x678] sm:$0xf]
    %v499 = vld [vmem:[%s1 + $0x67c] sm:$0xf]
    %v500 = vld [vmem:[%s1 + $0x680] sm:$0xf]
    %v501 = vld [vmem:[%s1 + $0x684] sm:$0xf]
    %v502 = vld [vmem:[%s1 + $0x688] sm:$0xf]
    %v503 = vld [vmem:[%s1 + $0x68c] sm:$0xf]
    %v504 = vld [vmem:[%s1 + $0x690] sm:$0xf]
    %v505 = vld [vmem:[%s1 + $0x694] sm:$0xf]
    %v506 = vld [vmem:[%s1 + $0x698] sm:$0xf]
    %v507 = vld [vmem:[%s1 + $0x69c] sm:$0xf]
    %v508 = vld [vmem:[%s1 + $0x6a0] sm:$0xf]
    %v509 = vld [vmem:[%s1 + $0x6a4] sm:$0xf]
    %v510 = vld [vmem:[%s1 + $0x6a8] sm:$0xf]
    %v511 = vld [vmem:[%s1 + $0x6ac] sm:$0xf]
    %v512 = vld [vmem:[%s1 + $0x6b0] sm:$0xf]
    %v513 = vld [vmem:[%s1 + $0x6b4] sm:$0xf]
    %v514 = vld [vmem:[%s1 + $0x6b8] sm:$0xf]
    %v515 = vld [vmem:[%s1 + $0x6bc] sm:$0xf]
    %v516 = vld [vmem:[%s1 + $0x6c0] sm:$0xf]
    %v517 = vld [vmem:[%s1 + $0x6c4] sm:$0xf]
    %v518 = vld [vmem:[%s1 + $0x6c8] sm:$0xf]
    %v519 = vld [vmem:[%s1 + $0x6cc] sm:$0xf]
    %v520 = vld [vmem:[%s1 + $0x6d0] sm:$0xf]
    %v521 = vld [vmem:[%s1 + $0x6d4] sm:$0xf]
    %v522 = vld [vmem:[%s1 + $0x6d8] sm:$0xf]
    %v523 = vld [vmem:[%s1 + $0x6dc] sm:$0xf]
    %v524 = vld [vmem:[%s1 + $0x6e0] sm:$0xf]
    %v525 = vld [vmem:[%s1 + $0x6e4] sm:$0xf]
    %v526 = vld [vmem:[%s1 + $0x6e8] sm:$0xf]
    %v527 = vld [vmem:[%s1 + $0x6ec] sm:$0xf]
    %v528 = vld [vmem:[%s1 + $0x6f0] sm:$0xf]
    %v529 = vld [vmem:[%s1 + $0x6f4] sm:$0xf]
    %v530 = vld [vmem:[%s1 + $0x6f8] sm:$0xf]
    %v531 = vld [vmem:[%s1 + $0x6fc] sm:$0xf]
    %v532 = vld [vmem:[%s1 + $0x700] sm:$0xf]
    %v533 = vld [vmem:[%s1 + $0x704] sm:$0xf]
    %v534 = vld [vmem:[%s1 + $0x708] sm:$0xf]
    %v535 = vld [vmem:[%s1 + $0x70c] sm:$0xf]
    %v536 = vld [vmem:[%s1 + $0x710] sm:$0xf]
    %v537 = vld [vmem:[%s1 + $0x714] sm:$0xf]
    %v538 = vld [vmem:[%s1 + $0x718] sm:$0xf]
    %v539 = vld [vmem:[%s1 + $0x71c] sm:$0xf]
    %v540 = vld [vmem:[%s1 + $0x720] sm:$0xf]
    %v541 = vld [vmem:[%s1 + $0x724] sm:$0xf]
    %v542 = vld [vmem:[%s1 + $0x728] sm:$0xf]
    %v543 = vld [vmem:[%s1 + $0x72c] sm:$0xf]
    %v544 = vld [vmem:[%s1 + $0x730] sm:$0xf]
    %v545 = vld [vmem:[%s1 + $0x734] sm:$0xf]
    %v546 = vld [vmem:[%s1 + $0x738] sm:$0xf]
    %v547 = vld [vmem:[%s1 + $0x73c] sm:$0xf]
    %v548 = vld [vmem:[%s1 + $0x740] sm:$0xf]
    %v549 = vld [vmem:[%s1 + $0x744] sm:$0xf]
    %v550 = vld [vmem:[%s1 + $0x748] sm:$0xf]
    %v551 = vld [vmem:[%s1 + $0x74c] sm:$0xf]
    %v552 = vld [vmem:[%s1 + $0x750] sm:$0xf]
    %v553 = vld [vmem:[%s1 + $0x754] sm:$0xf]
    %v554 = vld [vmem:[%s1 + $0x758] sm:$0xf]
    %v555 = vld [vmem:[%s1 + $0x75c] sm:$0xf]
    %v556 = vld [vmem:[%s1 + $0x760] sm:$0xf]
    %v557 = vld [vmem:[%s1 + $0x764] sm:$0xf]
    %v558 = vld [vmem:[%s1 + $0x768] sm:$0xf]
    %v559 = vld [vmem:[%s1 + $0x76c] sm:$0xf]
    %v560 = vld [vmem:[%s1 + $0x770] sm:$0xf]
    %v561 = vld [vmem:[%s1 + $0x774] sm:$0xf]
    %v562 = vld [vmem:[%s1 + $0x778] sm:$0xf]
    %v563 = vld [vmem:[%s1 + $0x77c] sm:$0xf]
    %v564 = vld [vmem:[%s1 + $0x780] sm:$0xf]
    %v565 = vld [vmem:[%s1 + $0x784] sm:$0xf]
    %v566 = vld [vmem:[%s1 + $0x788] sm:$0xf]
    %v567 = vld [vmem:[%s1 + $0x78c] sm:$0xf]
    %v568 = vld [vmem:[%s1 + $0x790] sm:$0xf]
    %v569 = vld [vmem:[%s1 + $0x794] sm:$0xf]
    %v570 = vld [vmem:[%s1 + $0x798] sm:$0xf]
    %v571 = vld [vmem:[%s1 + $0x79c] sm:$0xf]
    %v572 = vld [vmem:[%s1 + $0x7a0] sm:$0xf]
    %v573 = vld [vmem:[%s1 + $0x7a4] sm:$0xf]
    %v574 = vld [vmem:[%s1 + $0x7a8] sm:$0xf]
    %v575 = vld [vmem:[%s1 + $0x7ac] sm:$0xf]
    %v576 = vld [vmem:[%s1 + $0x7b0] sm:$0xf]
    %v577 = vld [vmem:[%s1 + $0x7b4] sm:$0xf]
    %v578 = vld [vmem:[%s1 + $0x7b8] sm:$0xf]
    %v579 = vld [vmem:[%s1 + $0x7bc] sm:$0xf]
    %v580 = vld [vmem:[%s1 + $0x7c0] sm:$0xf]
    %v581 = vld [vmem:[%s1 + $0x7c4] sm:$0xf]
    %v582 = vld [vmem:[%s1 + $0x7c8] sm:$0xf]
    %v583 = vld [vmem:[%s1 + $0x7cc] sm:$0xf]
    %v584 = vld [vmem:[%s1 + $0x7d0] sm:$0xf]
    %v585 = vld [vmem:[%s1 + $0x7d4] sm:$0xf]
    %v586 = vld [vmem:[%s1 + $0x7d8] sm:$0xf]
    %v587 = vld [vmem:[%s1 + $0x7dc] sm:$0xf]
    %v588 = vld [vmem:[%s1 + $0x7e0] sm:$0xf]
    %v589 = vld [vmem:[%s1 + $0x7e4] sm:$0xf]
    %v590 = vld [vmem:[%s1 + $0x7e8] sm:$0xf]
    %v591 = vld [vmem:[%s1 + $0x7ec] sm:$0xf]
    %v592 = vld [vmem:[%s1 + $0x7f0] sm:$0xf]
    %v593 = vld [vmem:[%s1 + $0x7f4] sm:$0xf]
    %v594 = vld [vmem:[%s1 + $0x7f8] sm:$0xf]
    %v595 = vld [vmem:[%s1 + $0x7fc] sm:$0xf]
    %v596 = vld [vmem:[%s1 + $0x800] sm:$0xf]
    %v597 = vld [vmem:[%s1 + $0x804] sm:$0xf]
    %v598 = vld [vmem:[%s1 + $0x808] sm:$0xf]
    %v599 = vld [vmem:[%s1 + $0x80c] sm:$0xf]
    %v600 = vld [vmem:[%s1 + $0x810] sm:$0xf]
    %v601 = vld [vmem:[%s1 + $0x814] sm:$0xf]
    %v602 = vld [vmem:[%s1 + $0x818] sm:$0xf]
    %v603 = vld [vmem:[%s1 + $0x81c] sm:$0xf]
    %v604 = vld [vmem:[%s1 + $0x820] sm:$0xf]
    %v605 = vld [vmem:[%s1 + $0x824] sm:$0xf]
    %v606 = vld [vmem:[%s1 + $0x828] sm:$0xf]
    %v607 = vld [vmem:[%s1 + $0x82c] sm:$0xf]
    %v608 = vld [vmem:[%s1 + $0x830] sm:$0xf]
    %v609 = vld [vmem:[%s1 + $0x834] sm:$0xf]
    %v610 = vld [vmem:[%s1 + $0x838] sm:$0xf]
    %v611 = vld [vmem:[%s1 + $0x83c] sm:$0xf]
    %v612 = vld [vmem:[%s1 + $0x840] sm:$0xf]
    %v613 = vld [vmem:[%s1 + $0x844] sm:$0xf]
    %v614 = vld [vmem:[%s1 + $0x848] sm:$0xf]
    %v615 = vld [vmem:[%s1 + $0x84c] sm:$0xf]
    %v616 = vld [vmem:[%s1 + $0x850] sm:$0xf]
    %v617 = vld [vmem:[%s1 + $0x854] sm:$0xf]
    %v618 = vld [vmem:[%s1 + $0x858] sm:$0xf]
    %v619 = vld [vmem:[%s1 + $0x85c] sm:$0xf]
    %v620 = vld [vmem:[%s1 + $0x860] sm:$0xf]
    %v621 = vld [vmem:[%s1 + $0x864] sm:$0xf]
    %v622 = vld [vmem:[%s1 + $0x868] sm:$0xf]
    %v623 = vld [vmem:[%s1 + $0x86c] sm:$0xf]
    %v624 = vld [vmem:[%s1 + $0x870] sm:$0xf]
    %v625 = vld [vmem:[%s1 + $0x874] sm:$0xf]
    %v626 = vld [vmem:[%s1 + $0x878] sm:$0xf]
    %v627 = vld [vmem:[%s1 + $0x87c] sm:$0xf]
    %v628 = vld [vmem:[%s1 + $0x880] sm:$0xf]
    %v629 = vld [vmem:[%s1 + $0x884] sm:$0xf]
    %v630 = vld [vmem:[%s1 + $0x888] sm:$0xf]
    %v631 = vld [vmem:[%s1 + $0x88c] sm:$0xf]
    %v632 = vld [vmem:[%s1 + $0x890] sm:$0xf]
    %v633 = vld [vmem:[%s1 + $0x894] sm:$0xf]
    %v634 = vld [vmem:[%s1 + $0x898] sm:$0xf]
    %v635 = vld [vmem:[%s1 + $0x89c] sm:$0xf]
    %v636 = vld [vmem:[%s1 + $0x8a0] sm:$0xf]
    %v637 = vld [vmem:[%s1 + $0x8a4] sm:$0xf]
    %v638 = vld [vmem:[%s1 + $0x8a8] sm:$0xf]
    %v639 = vld [vmem:[%s1 + $0x8ac] sm:$0xf]
    %v640 = vld [vmem:[%s1 + $0x8b0] sm:$0xf]
    %v641 = vld [vmem:[%s1 + $0x8b4] sm:$0xf]
    %v642 = vld [vmem:[%s1 + $0x8b8] sm:$0xf]
    %v643 = vld [vmem:[%s1 + $0x8bc] sm:$0xf]
    %v644 = vld [vmem:[%s1 + $0x8c0] sm:$0xf]
    %v645 = vld [vmem:[%s1 + $0x8c4] sm:$0xf]
    %v646 = vld [vmem:[%s1 + $0x8c8] sm:$0xf]
    %v647 = vld [vmem:[%s1 + $0x8cc] sm:$0xf]
    %v648 = vld [vmem:[%s1 + $0x8d0] sm:$0xf]
    %v649 = vld [vmem:[%s1 + $0x8d4] sm:$0xf]
    %v650 = vld [vmem:[%s1 + $0x8d8] sm:$0xf]
    %v651 = vld [vmem:[%s1 + $0x8dc] sm:$0xf]
    %v652 = vld [vmem:[%s1 + $0x8e0] sm:$0xf]
    %v653 = vld [vmem:[%s1 + $0x8e4] sm:$0xf]
    %v654 = vld [vmem:[%s1 + $0x8e8] sm:$0xf]
    %v655 = vld [vmem:[%s1 + $0x8ec] sm:$0xf]
    %v656 = vld [vmem:[%s1 + $0x8f0] sm:$0xf]
    %v657 = vld [vmem:[%s1 + $0x8f4] sm:$0xf]
    %v658 = vld [vmem:[%s1 + $0x8f8] sm:$0xf]
    %v659 = vld [vmem:[%s1 + $0x8fc] sm:$0xf]
    %v660 = vld [vmem:[%s1 + $0x900] sm:$0xf]
    %v661 = vld [vmem:[%s1 + $0x904] sm:$0xf]
    %v662 = vld [vmem:[%s1 + $0x908] sm:$0xf]
    %v663 = vld [vmem:[%s1 + $0x90c] sm:$0xf]
    %v664 = vld [vmem:[%s1 + $0x910] sm:$0xf]
    %v665 = vld [vmem:[%s1 + $0x914] sm:$0xf]
    %v666 = vld [vmem:[%s1 + $0x918] sm:$0xf]
    %v667 = vld [vmem:[%s1 + $0x91c] sm:$0xf]
    %v668 = vld [vmem:[%s1 + $0x920] sm:$0xf]
    %v669 = vld [vmem:[%s1 + $0x924] sm:$0xf]
    %v670 = vld [vmem:[%s1 + $0x928] sm:$0xf]
    %v671 = vld [vmem:[%s1 + $0x92c] sm:$0xf]
    %v672 = vld [vmem:[%s1 + $0x930] sm:$0xf]
    %v673 = vld [vmem:[%s1 + $0x934] sm:$0xf]
    %v674 = vld [vmem:[%s1 + $0x938] sm:$0xf]
    %v675 = vld [vmem:[%s1 + $0x93c] sm:$0xf]
    %v676 = vld [vmem:[%s1 + $0x940] sm:$0xf]
    %v677 = vld [vmem:[%s1 + $0x944] sm:$0xf]
    %v678 = vld [vmem:[%s1 + $0x948] sm:$0xf]
    %v679 = vld [vmem:[%s1 + $0x94c] sm:$0xf]
    %v680 = vld [vmem:[%s1 + $0x950] sm:$0xf]
    %v681 = vld [vmem:[%s1 + $0x954] sm:$0xf]
    %v682 = vld [vmem:[%s1 + $0x958] sm:$0xf]
    %v683 = vld [vmem:[%s1 + $0x95c] sm:$0xf]
    %v684 = vld [vmem:[%s1 + $0x960] sm:$0xf]
    %v685 = vld [vmem:[%s1 + $0x964] sm:$0xf]
    %v686 = vld [vmem:[%s1 + $0x968] sm:$0xf]
    %v687 = vld [vmem:[%s1 + $0x96c] sm:$0xf]
    %v688 = vld [vmem:[%s1 + $0x970] sm:$0xf]
    %v689 = vld [vmem:[%s1 + $0x974] sm:$0xf]
    %v690 = vld [vmem:[%s1 + $0x978] sm:$0xf]
    %v691 = vld [vmem:[%s1 + $0x97c] sm:$0xf]
    %v692 = vld [vmem:[%s1 + $0x980] sm:$0xf]
    %v693 = vld [vmem:[%s1 + $0x984] sm:$0xf]
    %v694 = vld [vmem:[%s1 + $0x988] sm:$0xf]
    %v695 = vld [vmem:[%s1 + $0x98c] sm:$0xf]
    %v696 = vld [vmem:[%s1 + $0x990] sm:$0xf]
    %v697 = vld [vmem:[%s1 + $0x994] sm:$0xf]
    %v698 = vld [vmem:[%s1 + $0x998] sm:$0xf]
    %v699 = vld [vmem:[%s1 + $0x99c] sm:$0xf]
    %v700 = vld [vmem:[%s1 + $0x9a0] sm:$0xf]
    %v701 = vld [vmem:[%s1 + $0x9a4] sm:$0xf]
    %v702 = vld [vmem:[%s1 + $0x9a8] sm:$0xf]
    %v703 = vld [vmem:[%s1 + $0x9ac] sm:$0xf]
    %v704 = vld [vmem:[%s1 + $0x9b0] sm:$0xf]
    %v705 = vld [vmem:[%s1 + $0x9b4] sm:$0xf]
    %v706 = vld [vmem:[%s1 + $0x9b8] sm:$0xf]
    %v707 = vld [vmem:[%s1 + $0x9bc] sm:$0xf]
    %v708 = vld [vmem:[%s1 + $0x9c0] sm:$0xf]
    %v709 = vld [vmem:[%s1 + $0x9c4] sm:$0xf]
    %v710 = vld [vmem:[%s1 + $0x9c8] sm:$0xf]
    %v711 = vld [vmem:[%s1 + $0x9cc] sm:$0xf]
    %v712 = vld [vmem:[%s1 + $0x9d0] sm:$0xf]
    %v713 = vld [vmem:[%s1 + $0x9d4] sm:$0xf]
    %v714 = vld [vmem:[%s1 + $0x9d8] sm:$0xf]
    %v715 = vld [vmem:[%s1 + $0x9dc] sm:$0xf]
    %v716 = vld [vmem:[%s1 + $0x9e0] sm:$0xf]
    %v717 = vld [vmem:[%s1 + $0x9e4] sm:$0xf]
    %v718 = vld [vmem:[%s1 + $0x9e8] sm:$0xf]
    %v719 = vld [vmem:[%s1 + $0x9ec] sm:$0xf]
    %v720 = vld [vmem:[%s1 + $0x9f0] sm:$0xf]
    %v721 = vld [vmem:[%s1 + $0x9f4] sm:$0xf]
    %v722 = vld [vmem:[%s1 + $0x9f8] sm:$0xf]
    %v723 = vld [vmem:[%s1 + $0x9fc] sm:$0xf]
    %v724 = vld [vmem:[%s1 + $0xa00] sm:$0xf]
    %v725 = vld [vmem:[%s1 + $0xa04] sm:$0xf]
    %v726 = vld [vmem:[%s1 + $0xa08] sm:$0xf]
    %v727 = vld [vmem:[%s1 + $0xa0c] sm:$0xf]
    %v728 = vld [vmem:[%s1 + $0xa10] sm:$0xf]
    %v729 = vld [vmem:[%s1 + $0xa14] sm:$0xf]
    %v730 = vld [vmem:[%s1 + $0xa18] sm:$0xf]
    %v731 = vld [vmem:[%s1 + $0xa1c] sm:$0xf]
    %v732 = vld [vmem:[%s1 + $0xa20] sm:$0xf]
    %v733 = vld [vmem:[%s1 + $0xa24] sm:$0xf]
    %v734 = vld [vmem:[%s1 + $0xa28] sm:$0xf]
    %v735 = vld [vmem:[%s1 + $0xa2c] sm:$0xf]
    %v736 = vld [vmem:[%s1 + $0xa30] sm:$0xf]
    %v737 = vld [vmem:[%s1 + $0xa34] sm:$0xf]
    %v738 = vld [vmem:[%s1 + $0xa38] sm:$0xf]
    %v739 = vld [vmem:[%s1 + $0xa3c] sm:$0xf]
    %v740 = vld [vmem:[%s1 + $0xa40] sm:$0xf]
    %v741 = vld [vmem:[%s1 + $0xa44] sm:$0xf]
    %v742 = vld [vmem:[%s1 + $0xa48] sm:$0xf]
    %v743 = vld [vmem:[%s1 + $0xa4c] sm:$0xf]
    %v744 = vld [vmem:[%s1 + $0xa50] sm:$0xf]
    %v745 = vld [vmem:[%s1 + $0xa54] sm:$0xf]
    %v746 = vld [vmem:[%s1 + $0xa58] sm:$0xf]
    %v747 = vld [vmem:[%s1 + $0xa5c] sm:$0xf]
    %v748 = vld [vmem:[%s1 + $0xa60] sm:$0xf]
    %v749 = vld [vmem:[%s1 + $0xa64] sm:$0xf]
    %v750 = vld [vmem:[%s1 + $0xa68] sm:$0xf]
    %v751 = vld [vmem:[%s1 + $0xa6c] sm:$0xf]
    %v752 = vld [vmem:[%s1 + $0xa70] sm:$0xf]
    %v753 = vld [vmem:[%s1 + $0xa74] sm:$0xf]
    %v754 = vld [vmem:[%s1 + $0xa78] sm:$0xf]
    %v755 = vld [vmem:[%s1 + $0xa7c] sm:$0xf]
    %v756 = vld [vmem:[%s1 + $0xa80] sm:$0xf]
    %v757 = vld [vmem:[%s1 + $0xa84] sm:$0xf]
    %v758 = vld [vmem:[%s1 + $0xa88] sm:$0xf]
    %v759 = vld [vmem:[%s1 + $0xa8c] sm:$0xf]
    %v760 = vld [vmem:[%s1 + $0xa90] sm:$0xf]
    %v761 = vld [vmem:[%s1 + $0xa94] sm:$0xf]
    %v762 = vld [vmem:[%s1 + $0xa98] sm:$0xf]
    %v763 = vld [vmem:[%s1 + $0xa9c] sm:$0xf]
    %v764 = vld [vmem:[%s1 + $0xaa0] sm:$0xf]
    %v765 = vld [vmem:[%s1 + $0xaa4] sm:$0xf]
    %v766 = vld [vmem:[%s1 + $0xaa8] sm:$0xf]
    %v767 = vld [vmem:[%s1 + $0xaac] sm:$0xf]
    %v768 = vld [vmem:[%s1 + $0xab0] sm:$0xf]
    %v769 = vld [vmem:[%s1 + $0xab4] sm:$0xf]
    %v770 = vld [vmem:[%s1 + $0xab8] sm:$0xf]
    %v771 = vld [vmem:[%s1 + $0xabc] sm:$0xf]
    %v772 = vld [vmem:[%s1 + $0xac0] sm:$0xf]
    %v773 = vld [vmem:[%s1 + $0xac4] sm:$0xf]
    %v774 = vld [vmem:[%s1 + $0xac8] sm:$0xf]
    %v775 = vld [vmem:[%s1 + $0xacc] sm:$0xf]
    %v776 = vld [vmem:[%s1 + $0xad0] sm:$0xf]
    %v777 = vld [vmem:[%s1 + $0xad4] sm:$0xf]
    %v778 = vld [vmem:[%s1 + $0xad8] sm:$0xf]
    %v779 = vld [vmem:[%s1 + $0xadc] sm:$0xf]
    %v780 = vld [vmem:[%s1 + $0xae0] sm:$0xf]
    %v781 = vld [vmem:[%s1 + $0xae4] sm:$0xf]
    %v782 = vld [vmem:[%s1 + $0xae8] sm:$0xf]
    %v783 = vld [vmem:[%s1 + $0xaec] sm:$0xf]
    %v784 = vld [vmem:[%s1 + $0xaf0] sm:$0xf]
    %v785 = vld [vmem:[%s1 + $0xaf4] sm:$0xf]
    %v786 = vld [vmem:[%s1 + $0xaf8] sm:$0xf]
    %v787 = vld [vmem:[%s1 + $0xafc] sm:$0xf]
    %v788 = vld [vmem:[%s1 + $0xb00] sm:$0xf]
    %v789 = vld [vmem:[%s1 + $0xb04] sm:$0xf]
    %v790 = vld [vmem:[%s1 + $0xb08] sm:$0xf]
    %v791 = vld [vmem:[%s1 + $0xb0c] sm:$0xf]
    %v792 = vld [vmem:[%s1 + $0xb10] sm:$0xf]
    %v793 = vld [vmem:[%s1 + $0xb14] sm:$0xf]
    %v794 = vld [vmem:[%s1 + $0xb18] sm:$0xf]
    %v795 = vld [vmem:[%s1 + $0xb1c] sm:$0xf]
    %v796 = vld [vmem:[%s1 + $0xb20] sm:$0xf]
    %v797 = vld [vmem:[%s1 + $0xb24] sm:$0xf]
    %v798 = vld [vmem:[%s1 + $0xb28] sm:$0xf]
    %v799 = vld [vmem:[%s1 + $0xb2c] sm:$0xf]
    %v800 = vld [vmem:[%s1 + $0xb30] sm:$0xf]
    %v801 = vld [vmem:[%s1 + $0xb34] sm:$0xf]
    %v802 = vld [vmem:[%s1 + $0xb38] sm:$0xf]
    %v803 = vld [vmem:[%s1 + $0xb3c] sm:$0xf]
    %v804 = vld [vmem:[%s1 + $0xb40] sm:$0xf]
    %v805 = vld [vmem:[%s1 + $0xb44] sm:$0xf]
    %v806 = vld [vmem:[%s1 + $0xb48] sm:$0xf]
    %v807 = vld [vmem:[%s1 + $0xb4c] sm:$0xf]
    %v808 = vld [vmem:[%s1 + $0xb50] sm:$0xf]
    %v809 = vld [vmem:[%s1 + $0xb54] sm:$0xf]
    %v810 = vld [vmem:[%s1 + $0xb58] sm:$0xf]
    %v811 = vld [vmem:[%s1 + $0xb5c] sm:$0xf]
    %v812 = vld [vmem:[%s1 + $0xb60] sm:$0xf]
    %v813 = vld [vmem:[%s1 + $0xb64] sm:$0xf]
    %v814 = vld [vmem:[%s1 + $0xb68] sm:$0xf]
    %v815 = vld [vmem:[%s1 + $0xb6c] sm:$0xf]
    %v816 = vld [vmem:[%s1 + $0xb70] sm:$0xf]
    %v817 = vld [vmem:[%s1 + $0xb74] sm:$0xf]
    %v818 = vld [vmem:[%s1 + $0xb78] sm:$0xf]
    %v819 = vld [vmem:[%s1 + $0xb7c] sm:$0xf]
    %v820 = vld [vmem:[%s1 + $0xb80] sm:$0xf]
    %v821 = vld [vmem:[%s1 + $0xb84] sm:$0xf]
    %v822 = vld [vmem:[%s1 + $0xb88] sm:$0xf]
    %v823 = vld [vmem:[%s1 + $0xb8c] sm:$0xf]
    %v824 = vld [vmem:[%s1 + $0xb90] sm:$0xf]
    %v825 = vld [vmem:[%s1 + $0xb94] sm:$0xf]
    %v826 = vld [vmem:[%s1 + $0xb98] sm:$0xf]
    %v827 = vld [vmem:[%s1 + $0xb9c] sm:$0xf]
    %v828 = vld [vmem:[%s1 + $0xba0] sm:$0xf]
    %v829 = vld [vmem:[%s1 + $0xba4] sm:$0xf]
    %v830 = vld [vmem:[%s1 + $0xba8] sm:$0xf]
    %v831 = vld [vmem:[%s1 + $0xbac] sm:$0xf]
    %v832 = vld [vmem:[%s1 + $0xbb0] sm:$0xf]
    %v833 = vld [vmem:[%s1 + $0xbb4] sm:$0xf]
    %v834 = vld [vmem:[%s1 + $0xbb8] sm:$0xf]
    %v835 = vld [vmem:[%s1 + $0xbbc] sm:$0xf]
    %v836 = vld [vmem:[%s1 + $0xbc0] sm:$0xf]
    %v837 = vld [vmem:[%s1 + $0xbc4] sm:$0xf]
    %v838 = vld [vmem:[%s1 + $0xbc8] sm:$0xf]
    %v839 = vld [vmem:[%s1 + $0xbcc] sm:$0xf]
    %v840 = vld [vmem:[%s1 + $0xbd0] sm:$0xf]
    %v841 = vld [vmem:[%s1 + $0xbd4] sm:$0xf]
    %v842 = vld [vmem:[%s1 + $0xbd8] sm:$0xf]
    %v843 = vld [vmem:[%s1 + $0xbdc] sm:$0xf]
    %v844 = vld [vmem:[%s1 + $0xbe0] sm:$0xf]
    %v845 = vld [vmem:[%s1 + $0xbe4] sm:$0xf]
    %v846 = vld [vmem:[%s1 + $0xbe8] sm:$0xf]
    %v847 = vld [vmem:[%s1 + $0xbec] sm:$0xf]
    %v848 = vld [vmem:[%s1 + $0xbf0] sm:$0xf]
    %v849 = vld [vmem:[%s1 + $0xbf4] sm:$0xf]
    %v850 = vld [vmem:[%s1 + $0xbf8] sm:$0xf]
    %v851 = vld [vmem:[%s1 + $0xbfc] sm:$0xf]
    %v852 = vld [vmem:[%s1 + $0xc00] sm:$0xf]
    %v853 = vld [vmem:[%s1 + $0xc04] sm:$0xf]
    %v854 = vld [vmem:[%s1 + $0xc08] sm:$0xf]
    %v855 = vld [vmem:[%s1 + $0xc0c] sm:$0xf]
    %v856 = vld [vmem:[%s1 + $0xc10] sm:$0xf]
    %v857 = vld [vmem:[%s1 + $0xc14] sm:$0xf]
    %v858 = vld [vmem:[%s1 + $0xc18] sm:$0xf]
    %v859 = vld [vmem:[%s1 + $0xc1c] sm:$0xf]
    %v860 = vld [vmem:[%s1 + $0xc20] sm:$0xf]
    %v861 = vld [vmem:[%s1 + $0xc24] sm:$0xf]
    %v862 = vld [vmem:[%s1 + $0xc28] sm:$0xf]
    %v863 = vld [vmem:[%s1 + $0xc2c] sm:$0xf]
    %v864 = vld [vmem:[%s1 + $0xc30] sm:$0xf]
    %v865 = vld [vmem:[%s1 + $0xc34] sm:$0xf]
    %v866 = vld [vmem:[%s1 + $0xc38] sm:$0xf]
    %v867 = vld [vmem:[%s1 + $0xc3c] sm:$0xf]
    %v868 = vld [vmem:[%s1 + $0xc40] sm:$0xf]
    %v869 = vld [vmem:[%s1 + $0xc44] sm:$0xf]
    %v870 = vld [vmem:[%s1 + $0xc48] sm:$0xf]
    %v871 = vld [vmem:[%s1 + $0xc4c] sm:$0xf]
    %v872 = vld [vmem:[%s1 + $0xc50] sm:$0xf]
    %v873 = vld [vmem:[%s1 + $0xc54] sm:$0xf]
    %v874 = vld [vmem:[%s1 + $0xc58] sm:$0xf]
    %v875 = vld [vmem:[%s1 + $0xc5c] sm:$0xf]
    %v876 = vld [vmem:[%s1 + $0xc60] sm:$0xf]
    %v877 = vld [vmem:[%s1 + $0xc64] sm:$0xf]
    %v878 = vld [vmem:[%s1 + $0xc68] sm:$0xf]
    %v879 = vld [vmem:[%s1 + $0xc6c] sm:$0xf]
    %v880 = vld [vmem:[%s1 + $0xc70] sm:$0xf]
    %v881 = vld [vmem:[%s1 + $0xc74] sm:$0xf]
    %v882 = vld [vmem:[%s1 + $0xc78] sm:$0xf]
    %v883 = vld [vmem:[%s1 + $0xc7c] sm:$0xf]
    %v884 = vld [vmem:[%s1 + $0xc80] sm:$0xf]
    %v885 = vld [vmem:[%s1 + $0xc84] sm:$0xf]
    %v886 = vld [vmem:[%s1 + $0xc88] sm:$0xf]
    %v887 = vld [vmem:[%s1 + $0xc8c] sm:$0xf]
    %v888 = vld [vmem:[%s1 + $0xc90] sm:$0xf]
    %v889 = vld [vmem:[%s1 + $0xc94] sm:$0xf]
    %v890 = vld [vmem:[%s1 + $0xc98] sm:$0xf]
    %v891 = vld [vmem:[%s1 + $0xc9c] sm:$0xf]
    %v892 = vld [vmem:[%s1 + $0xca0] sm:$0xf]
    %v893 = vld [vmem:[%s1 + $0xca4] sm:$0xf]
    %v894 = vld [vmem:[%s1 + $0xca8] sm:$0xf]
    %v895 = vld [vmem:[%s1 + $0xcac] sm:$0xf]
    %v896 = vld [vmem:[%s1 + $0xcb0] sm:$0xf]
    %v897 = vld [vmem:[%s1 + $0xcb4] sm:$0xf]
    %v898 = vld [vmem:[%s1 + $0xcb8] sm:$0xf]
    %v899 = vld [vmem:[%s1 + $0xcbc] sm:$0xf]
    %v900 = vld [vmem:[%s1 + $0xcc0] sm:$0xf]
    %v901 = vld [vmem:[%s1 + $0xcc4] sm:$0xf]
    %v902 = vld [vmem:[%s1 + $0xcc8] sm:$0xf]
    %v903 = vld [vmem:[%s1 + $0xccc] sm:$0xf]
    %v904 = vld [vmem:[%s1 + $0xcd0] sm:$0xf]
    %v905 = vld [vmem:[%s1 + $0xcd4] sm:$0xf]
    %v906 = vld [vmem:[%s1 + $0xcd8] sm:$0xf]
    %v907 = vld [vmem:[%s1 + $0xcdc] sm:$0xf]
    %v908 = vld [vmem:[%s1 + $0xce0] sm:$0xf]
    %v909 = vld [vmem:[%s1 + $0xce4] sm:$0xf]
    %v910 = vld [vmem:[%s1 + $0xce8] sm:$0xf]
    %v911 = vld [vmem:[%s1 + $0xcec] sm:$0xf]
    %v912 = vld [vmem:[%s1 + $0xcf0] sm:$0xf]
    %v913 = vld [vmem:[%s1 + $0xcf4] sm:$0xf]
    %v914 = vld [vmem:[%s1 + $0xcf8] sm:$0xf]
    %v915 = vld [vmem:[%s1 + $0xcfc] sm:$0xf]
    %v916 = vld [vmem:[%s1 + $0xd00] sm:$0xf]
    %v917 = vld [vmem:[%s1 + $0xd04] sm:$0xf]
    %v918 = vld [vmem:[%s1 + $0xd08] sm:$0xf]
    %v919 = vld [vmem:[%s1 + $0xd0c] sm:$0xf]
    %v920 = vld [vmem:[%s1 + $0xd10] sm:$0xf]
    %v921 = vld [vmem:[%s1 + $0xd14] sm:$0xf]
    %v922 = vld [vmem:[%s1 + $0xd18] sm:$0xf]
    %v923 = vld [vmem:[%s1 + $0xd1c] sm:$0xf]
    %v924 = vld [vmem:[%s1 + $0xd20] sm:$0xf]
    %v925 = vld [vmem:[%s1 + $0xd24] sm:$0xf]
    %v926 = vld [vmem:[%s1 + $0xd28] sm:$0xf]
    %v927 = vld [vmem:[%s1 + $0xd2c] sm:$0xf]
    %v928 = vld [vmem:[%s1 + $0xd30] sm:$0xf]
    %v929 = vld [vmem:[%s1 + $0xd34] sm:$0xf]
    %v930 = vld [vmem:[%s1 + $0xd38] sm:$0xf]
    %v931 = vld [vmem:[%s1 + $0xd3c] sm:$0xf]
    %v932 = vld [vmem:[%s1 + $0xd40] sm:$0xf]
    %v933 = vld [vmem:[%s1 + $0xd44] sm:$0xf]
    %v934 = vld [vmem:[%s1 + $0xd48] sm:$0xf]
    %v935 = vld [vmem:[%s1 + $0xd4c] sm:$0xf]
    %v936 = vld [vmem:[%s1 + $0xd50] sm:$0xf]
    %v937 = vld [vmem:[%s1 + $0xd54] sm:$0xf]
    %v938 = vld [vmem:[%s1 + $0xd58] sm:$0xf]
    %v939 = vld [vmem:[%s1 + $0xd5c] sm:$0xf]
    %v940 = vld [vmem:[%s1 + $0xd60] sm:$0xf]
    %v941 = vld [vmem:[%s1 + $0xd64] sm:$0xf]
    %v942 = vld [vmem:[%s1 + $0xd68] sm:$0xf]
    %v943 = vld [vmem:[%s1 + $0xd6c] sm:$0xf]
    %v944 = vld [vmem:[%s1 + $0xd70] sm:$0xf]
    %v945 = vld [vmem:[%s1 + $0xd74] sm:$0xf]
    %v946 = vld [vmem:[%s1 + $0xd78] sm:$0xf]
    %v947 = vld [vmem:[%s1 + $0xd7c] sm:$0xf]
    %v948 = vld [vmem:[%s1 + $0xd80] sm:$0xf]
    %v949 = vld [vmem:[%s1 + $0xd84] sm:$0xf]
    %v950 = vld [vmem:[%s1 + $0xd88] sm:$0xf]
    %v951 = vld [vmem:[%s1 + $0xd8c] sm:$0xf]
    %v952 = vld [vmem:[%s1 + $0xd90] sm:$0xf]
    %v953 = vld [vmem:[%s1 + $0xd94] sm:$0xf]
    %v954 = vld [vmem:[%s1 + $0xd98] sm:$0xf]
    %v955 = vld [vmem:[%s1 + $0xd9c] sm:$0xf]
    %v956 = vld [vmem:[%s1 + $0xda0] sm:$0xf]
    %v957 = vld [vmem:[%s1 + $0xda4] sm:$0xf]
    %v958 = vld [vmem:[%s1 + $0xda8] sm:$0xf]
    %v959 = vld [vmem:[%s1 + $0xdac] sm:$0xf]
    %v960 = vld [vmem:[%s1 + $0xdb0] sm:$0xf]
    %v961 = vld [vmem:[%s1 + $0xdb4] sm:$0xf]
    %v962 = vld [vmem:[%s1 + $0xdb8] sm:$0xf]
    %v963 = vld [vmem:[%s1 + $0xdbc] sm:$0xf]
    %v964 = vld [vmem:[%s1 + $0xdc0] sm:$0xf]
    %v965 = vld [vmem:[%s1 + $0xdc4] sm:$0xf]
    %v966 = vld [vmem:[%s1 + $0xdc8] sm:$0xf]
    %v967 = vld [vmem:[%s1 + $0xdcc] sm:$0xf]
    %v968 = vld [vmem:[%s1 + $0xdd0] sm:$0xf]
    %v969 = vld [vmem:[%s1 + $0xdd4] sm:$0xf]
    %v970 = vld [vmem:[%s1 + $0xdd8] sm:$0xf]
    %v971 = vld [vmem:[%s1 + $0xddc] sm:$0xf]
    %v972 = vld [vmem:[%s1 + $0xde0] sm:$0xf]
    %v973 = vld [vmem:[%s1 + $0xde4] sm:$0xf]
    %v974 = vld [vmem:[%s1 + $0xde8] sm:$0xf]
    %v975 = vld [vmem:[%s1 + $0xdec] sm:$0xf]
    %v976 = vld [vmem:[%s1 + $0xdf0] sm:$0xf]
    %v977 = vld [vmem:[%s1 + $0xdf4] sm:$0xf]
    %v978 = vld [vmem:[%s1 + $0xdf8] sm:$0xf]
    %v979 = vld [vmem:[%s1 + $0xdfc] sm:$0xf]
    %v980 = vld [vmem:[%s2] sm:$0x1]
    %v982 = vlaneseq
    %v983 = vshrl.u32 %v982, 7
    %v984 = vsub.s32 0, %v983
    %v985 = vrot.slane %v980, %v984
    %v1043 = vcombine.low %v28, %v35
    %v1044 = vcombine.high %v28, %v35
    %v1045 = vcombine.low %v42, %v49
    %v1046 = vcombine.high %v42, %v49
    %v1047 = vcombine.low %v56, %v63
    %v1048 = vcombine.high %v56, %v63
    %v1049 = vcombine.low %v70, %v77
    %v1050 = vcombine.high %v70, %v77
    %v1052 = vunpack.c.l.s4 1966171168
    %v1053 = vunpack.c.0.s8 %v1052
    %v1054 = vlaneseq
    %v1055 = vshrl.u32 %v1054, 7
    %v1056 = vsub.s32 %v1053, %v1055
    %v1057 = vrot.slane %v1043, %v1056
    %v1059 = vunpack.c.l.s4 1966171168
    %v1060 = vunpack.c.0.s8 %v1059
    %v1061 = vlaneseq
    %v1062 = vshrl.u32 %v1061, 7
    %v1063 = vsub.s32 %v1060, %v1062
    %v1064 = vrot.slane %v1044, %v1063
    %v1066 = vunpack.c.l.s4 1966171168
    %v1067 = vunpack.c.0.s8 %v1066
    %v1068 = vlaneseq
    %v1069 = vshrl.u32 %v1068, 7
    %v1070 = vsub.s32 %v1067, %v1069
    %v1071 = vrot.slane %v1045, %v1070
    %v1073 = vunpack.c.l.s4 1966171168
    %v1074 = vunpack.c.0.s8 %v1073
    %v1075 = vlaneseq
    %v1076 = vshrl.u32 %v1075, 7
    %v1077 = vsub.s32 %v1074, %v1076
    %v1078 = vrot.slane %v1046, %v1077
    %v1080 = vunpack.c.l.s4 1966171168
    %v1081 = vunpack.c.0.s8 %v1080
    %v1082 = vlaneseq
    %v1083 = vshrl.u32 %v1082, 7
    %v1084 = vsub.s32 %v1081, %v1083
    %v1085 = vrot.slane %v1047, %v1084
    %v1087 = vunpack.c.l.s4 1966171168
    %v1088 = vunpack.c.0.s8 %v1087
    %v1089 = vlaneseq
    %v1090 = vshrl.u32 %v1089, 7
    %v1091 = vsub.s32 %v1088, %v1090
    %v1092 = vrot.slane %v1048, %v1091
    %v1094 = vunpack.c.l.s4 1966171168
    %v1095 = vunpack.c.0.s8 %v1094
    %v1096 = vlaneseq
    %v1097 = vshrl.u32 %v1096, 7
    %v1098 = vsub.s32 %v1095, %v1097
    %v1099 = vrot.slane %v1049, %v1098
    %v1101 = vunpack.c.l.s4 1966171168
    %v1102 = vunpack.c.0.s8 %v1101
    %v1103 = vlaneseq
    %v1104 = vshrl.u32 %v1103, 7
    %v1105 = vsub.s32 %v1102, %v1104
    %v1106 = vrot.slane %v1050, %v1105
    %v1107 = vcombine.low %v1057, %v1071
    %v1108 = vcombine.high %v1057, %v1071
    %v1109 = vcombine.low %v1064, %v1078
    %v1110 = vcombine.high %v1064, %v1078
    %v1111 = vcombine.low %v1085, %v1099
    %v1112 = vcombine.high %v1085, %v1099
    %v1113 = vcombine.low %v1092, %v1106
    %v1114 = vcombine.high %v1092, %v1106
    %v1116 = vunpack.c.l.s4 1966171168
    %v1117 = vunpack.c.0.s8 %v1116
    %v1118 = vlaneseq
    %v1119 = vshrl.u32 %v1118, 7
    %v1120 = vsub.s32 %v1117, %v1119
    %v1121 = vrot.slane %v1107, %v1120
    %v1123 = vunpack.c.l.s4 1966171168
    %v1124 = vunpack.c.0.s8 %v1123
    %v1125 = vlaneseq
    %v1126 = vshrl.u32 %v1125, 7
    %v1127 = vsub.s32 %v1124, %v1126
    %v1128 = vrot.slane %v1109, %v1127
    %v1130 = vunpack.c.l.s4 1966171168
    %v1131 = vunpack.c.0.s8 %v1130
    %v1132 = vlaneseq
    %v1133 = vshrl.u32 %v1132, 7
    %v1134 = vsub.s32 %v1131, %v1133
    %v1135 = vrot.slane %v1108, %v1134
    %v1137 = vunpack.c.l.s4 1966171168
    %v1138 = vunpack.c.0.s8 %v1137
    %v1139 = vlaneseq
    %v1140 = vshrl.u32 %v1139, 7
    %v1141 = vsub.s32 %v1138, %v1140
    %v1142 = vrot.slane %v1110, %v1141
    %v1144 = vunpack.c.l.s4 1966171168
    %v1145 = vunpack.c.0.s8 %v1144
    %v1146 = vlaneseq
    %v1147 = vshrl.u32 %v1146, 7
    %v1148 = vsub.s32 %v1145, %v1147
    %v1149 = vrot.slane %v1111, %v1148
    %v1151 = vunpack.c.l.s4 1966171168
    %v1152 = vunpack.c.0.s8 %v1151
    %v1153 = vlaneseq
    %v1154 = vshrl.u32 %v1153, 7
    %v1155 = vsub.s32 %v1152, %v1154
    %v1156 = vrot.slane %v1113, %v1155
    %v1158 = vunpack.c.l.s4 1966171168
    %v1159 = vunpack.c.0.s8 %v1158
    %v1160 = vlaneseq
    %v1161 = vshrl.u32 %v1160, 7
    %v1162 = vsub.s32 %v1159, %v1161
    %v1163 = vrot.slane %v1112, %v1162
    %v1165 = vunpack.c.l.s4 1966171168
    %v1166 = vunpack.c.0.s8 %v1165
    %v1167 = vlaneseq
    %v1168 = vshrl.u32 %v1167, 7
    %v1169 = vsub.s32 %v1166, %v1168
    %v1170 = vrot.slane %v1114, %v1169
    %v1171 = vcombine.low %v1121, %v1149
    %v1172 = vcombine.high %v1121, %v1149
    %v1173 = vcombine.low %v1128, %v1156
    %v1174 = vcombine.high %v1128, %v1156
    %v1175 = vcombine.low %v1135, %v1163
    %v1176 = vcombine.high %v1135, %v1163
    %v1177 = vcombine.low %v1142, %v1170
    %v1178 = vcombine.high %v1142, %v1170
    %v1179 = vcombine.low %v29, %v36
    %v1180 = vcombine.high %v29, %v36
    %v1181 = vcombine.low %v43, %v50
    %v1182 = vcombine.high %v43, %v50
    %v1183 = vcombine.low %v57, %v64
    %v1184 = vcombine.high %v57, %v64
    %v1185 = vcombine.low %v71, %v78
    %v1186 = vcombine.high %v71, %v78
    %v1188 = vunpack.c.l.s4 1966171168
    %v1189 = vunpack.c.0.s8 %v1188
    %v1190 = vlaneseq
    %v1191 = vshrl.u32 %v1190, 7
    %v1192 = vsub.s32 %v1189, %v1191
    %v1193 = vrot.slane %v1179, %v1192
    %v1195 = vunpack.c.l.s4 1966171168
    %v1196 = vunpack.c.0.s8 %v1195
    %v1197 = vlaneseq
    %v1198 = vshrl.u32 %v1197, 7
    %v1199 = vsub.s32 %v1196, %v1198
    %v1200 = vrot.slane %v1180, %v1199
    %v1202 = vunpack.c.l.s4 1966171168
    %v1203 = vunpack.c.0.s8 %v1202
    %v1204 = vlaneseq
    %v1205 = vshrl.u32 %v1204, 7
    %v1206 = vsub.s32 %v1203, %v1205
    %v1207 = vrot.slane %v1181, %v1206
    %v1209 = vunpack.c.l.s4 1966171168
    %v1210 = vunpack.c.0.s8 %v1209
    %v1211 = vlaneseq
    %v1212 = vshrl.u32 %v1211, 7
    %v1213 = vsub.s32 %v1210, %v1212
    %v1214 = vrot.slane %v1182, %v1213
    %v1216 = vunpack.c.l.s4 1966171168
    %v1217 = vunpack.c.0.s8 %v1216
    %v1218 = vlaneseq
    %v1219 = vshrl.u32 %v1218, 7
    %v1220 = vsub.s32 %v1217, %v1219
    %v1221 = vrot.slane %v1183, %v1220
    %v1223 = vunpack.c.l.s4 1966171168
    %v1224 = vunpack.c.0.s8 %v1223
    %v1225 = vlaneseq
    %v1226 = vshrl.u32 %v1225, 7
    %v1227 = vsub.s32 %v1224, %v1226
    %v1228 = vrot.slane %v1184, %v1227
    %v1230 = vunpack.c.l.s4 1966171168
    %v1231 = vunpack.c.0.s8 %v1230
    %v1232 = vlaneseq
    %v1233 = vshrl.u32 %v1232, 7
    %v1234 = vsub.s32 %v1231, %v1233
    %v1235 = vrot.slane %v1185, %v1234
    %v1237 = vunpack.c.l.s4 1966171168
    %v1238 = vunpack.c.0.s8 %v1237
    %v1239 = vlaneseq
    %v1240 = vshrl.u32 %v1239, 7
    %v1241 = vsub.s32 %v1238, %v1240
    %v1242 = vrot.slane %v1186, %v1241
    %v1243 = vcombine.low %v1193, %v1207
    %v1244 = vcombine.high %v1193, %v1207
    %v1245 = vcombine.low %v1200, %v1214
    %v1246 = vcombine.high %v1200, %v1214
    %v1247 = vcombine.low %v1221, %v1235
    %v1248 = vcombine.high %v1221, %v1235
    %v1249 = vcombine.low %v1228, %v1242
    %v1250 = vcombine.high %v1228, %v1242
    %v1252 = vunpack.c.l.s4 1966171168
    %v1253 = vunpack.c.0.s8 %v1252
    %v1254 = vlaneseq
    %v1255 = vshrl.u32 %v1254, 7
    %v1256 = vsub.s32 %v1253, %v1255
    %v1257 = vrot.slane %v1243, %v1256
    %v1259 = vunpack.c.l.s4 1966171168
    %v1260 = vunpack.c.0.s8 %v1259
    %v1261 = vlaneseq
    %v1262 = vshrl.u32 %v1261, 7
    %v1263 = vsub.s32 %v1260, %v1262
    %v1264 = vrot.slane %v1245, %v1263
    %v1266 = vunpack.c.l.s4 1966171168
    %v1267 = vunpack.c.0.s8 %v1266
    %v1268 = vlaneseq
    %v1269 = vshrl.u32 %v1268, 7
    %v1270 = vsub.s32 %v1267, %v1269
    %v1271 = vrot.slane %v1244, %v1270
    %v1273 = vunpack.c.l.s4 1966171168
    %v1274 = vunpack.c.0.s8 %v1273
    %v1275 = vlaneseq
    %v1276 = vshrl.u32 %v1275, 7
    %v1277 = vsub.s32 %v1274, %v1276
    %v1278 = vrot.slane %v1246, %v1277
    %v1280 = vunpack.c.l.s4 1966171168
    %v1281 = vunpack.c.0.s8 %v1280
    %v1282 = vlaneseq
    %v1283 = vshrl.u32 %v1282, 7
    %v1284 = vsub.s32 %v1281, %v1283
    %v1285 = vrot.slane %v1247, %v1284
    %v1287 = vunpack.c.l.s4 1966171168
    %v1288 = vunpack.c.0.s8 %v1287
    %v1289 = vlaneseq
    %v1290 = vshrl.u32 %v1289, 7
    %v1291 = vsub.s32 %v1288, %v1290
    %v1292 = vrot.slane %v1249, %v1291
    %v1294 = vunpack.c.l.s4 1966171168
    %v1295 = vunpack.c.0.s8 %v1294
    %v1296 = vlaneseq
    %v1297 = vshrl.u32 %v1296, 7
    %v1298 = vsub.s32 %v1295, %v1297
    %v1299 = vrot.slane %v1248, %v1298
    %v1301 = vunpack.c.l.s4 1966171168
    %v1302 = vunpack.c.0.s8 %v1301
    %v1303 = vlaneseq
    %v1304 = vshrl.u32 %v1303, 7
    %v1305 = vsub.s32 %v1302, %v1304
    %v1306 = vrot.slane %v1250, %v1305
    %v1307 = vcombine.low %v1257, %v1285
    %v1308 = vcombine.high %v1257, %v1285
    %v1309 = vcombine.low %v1264, %v1292
    %v1310 = vcombine.high %v1264, %v1292
    %v1311 = vcombine.low %v1271, %v1299
    %v1312 = vcombine.high %v1271, %v1299
    %v1313 = vcombine.low %v1278, %v1306
    %v1314 = vcombine.high %v1278, %v1306
    %v1315 = vcombine.low %v30, %v37
    %v1316 = vcombine.high %v30, %v37
    %v1317 = vcombine.low %v44, %v51
    %v1318 = vcombine.high %v44, %v51
    %v1319 = vcombine.low %v58, %v65
    %v1320 = vcombine.high %v58, %v65
    %v1321 = vcombine.low %v72, %v79
    %v1322 = vcombine.high %v72, %v79
    %v1324 = vunpack.c.l.s4 1966171168
    %v1325 = vunpack.c.0.s8 %v1324
    %v1326 = vlaneseq
    %v1327 = vshrl.u32 %v1326, 7
    %v1328 = vsub.s32 %v1325, %v1327
    %v1329 = vrot.slane %v1315, %v1328
    %v1331 = vunpack.c.l.s4 1966171168
    %v1332 = vunpack.c.0.s8 %v1331
    %v1333 = vlaneseq
    %v1334 = vshrl.u32 %v1333, 7
    %v1335 = vsub.s32 %v1332, %v1334
    %v1336 = vrot.slane %v1316, %v1335
    %v1338 = vunpack.c.l.s4 1966171168
    %v1339 = vunpack.c.0.s8 %v1338
    %v1340 = vlaneseq
    %v1341 = vshrl.u32 %v1340, 7
    %v1342 = vsub.s32 %v1339, %v1341
    %v1343 = vrot.slane %v1317, %v1342
    %v1345 = vunpack.c.l.s4 1966171168
    %v1346 = vunpack.c.0.s8 %v1345
    %v1347 = vlaneseq
    %v1348 = vshrl.u32 %v1347, 7
    %v1349 = vsub.s32 %v1346, %v1348
    %v1350 = vrot.slane %v1318, %v1349
    %v1352 = vunpack.c.l.s4 1966171168
    %v1353 = vunpack.c.0.s8 %v1352
    %v1354 = vlaneseq
    %v1355 = vshrl.u32 %v1354, 7
    %v1356 = vsub.s32 %v1353, %v1355
    %v1357 = vrot.slane %v1319, %v1356
    %v1359 = vunpack.c.l.s4 1966171168
    %v1360 = vunpack.c.0.s8 %v1359
    %v1361 = vlaneseq
    %v1362 = vshrl.u32 %v1361, 7
    %v1363 = vsub.s32 %v1360, %v1362
    %v1364 = vrot.slane %v1320, %v1363
    %v1366 = vunpack.c.l.s4 1966171168
    %v1367 = vunpack.c.0.s8 %v1366
    %v1368 = vlaneseq
    %v1369 = vshrl.u32 %v1368, 7
    %v1370 = vsub.s32 %v1367, %v1369
    %v1371 = vrot.slane %v1321, %v1370
    %v1373 = vunpack.c.l.s4 1966171168
    %v1374 = vunpack.c.0.s8 %v1373
    %v1375 = vlaneseq
    %v1376 = vshrl.u32 %v1375, 7
    %v1377 = vsub.s32 %v1374, %v1376
    %v1378 = vrot.slane %v1322, %v1377
    %v1379 = vcombine.low %v1329, %v1343
    %v1380 = vcombine.high %v1329, %v1343
    %v1381 = vcombine.low %v1336, %v1350
    %v1382 = vcombine.high %v1336, %v1350
    %v1383 = vcombine.low %v1357, %v1371
    %v1384 = vcombine.high %v1357, %v1371
    %v1385 = vcombine.low %v1364, %v1378
    %v1386 = vcombine.high %v1364, %v1378
    %v1388 = vunpack.c.l.s4 1966171168
    %v1389 = vunpack.c.0.s8 %v1388
    %v1390 = vlaneseq
    %v1391 = vshrl.u32 %v1390, 7
    %v1392 = vsub.s32 %v1389, %v1391
    %v1393 = vrot.slane %v1379, %v1392
    %v1395 = vunpack.c.l.s4 1966171168
    %v1396 = vunpack.c.0.s8 %v1395
    %v1397 = vlaneseq
    %v1398 = vshrl.u32 %v1397, 7
    %v1399 = vsub.s32 %v1396, %v1398
    %v1400 = vrot.slane %v1381, %v1399
    %v1402 = vunpack.c.l.s4 1966171168
    %v1403 = vunpack.c.0.s8 %v1402
    %v1404 = vlaneseq
    %v1405 = vshrl.u32 %v1404, 7
    %v1406 = vsub.s32 %v1403, %v1405
    %v1407 = vrot.slane %v1380, %v1406
    %v1409 = vunpack.c.l.s4 1966171168
    %v1410 = vunpack.c.0.s8 %v1409
    %v1411 = vlaneseq
    %v1412 = vshrl.u32 %v1411, 7
    %v1413 = vsub.s32 %v1410, %v1412
    %v1414 = vrot.slane %v1382, %v1413
    %v1416 = vunpack.c.l.s4 1966171168
    %v1417 = vunpack.c.0.s8 %v1416
    %v1418 = vlaneseq
    %v1419 = vshrl.u32 %v1418, 7
    %v1420 = vsub.s32 %v1417, %v1419
    %v1421 = vrot.slane %v1383, %v1420
    %v1423 = vunpack.c.l.s4 1966171168
    %v1424 = vunpack.c.0.s8 %v1423
    %v1425 = vlaneseq
    %v1426 = vshrl.u32 %v1425, 7
    %v1427 = vsub.s32 %v1424, %v1426
    %v1428 = vrot.slane %v1385, %v1427
    %v1430 = vunpack.c.l.s4 1966171168
    %v1431 = vunpack.c.0.s8 %v1430
    %v1432 = vlaneseq
    %v1433 = vshrl.u32 %v1432, 7
    %v1434 = vsub.s32 %v1431, %v1433
    %v1435 = vrot.slane %v1384, %v1434
    %v1437 = vunpack.c.l.s4 1966171168
    %v1438 = vunpack.c.0.s8 %v1437
    %v1439 = vlaneseq
    %v1440 = vshrl.u32 %v1439, 7
    %v1441 = vsub.s32 %v1438, %v1440
    %v1442 = vrot.slane %v1386, %v1441
    %v1443 = vcombine.low %v1393, %v1421
    %v1444 = vcombine.high %v1393, %v1421
    %v1445 = vcombine.low %v1400, %v1428
    %v1446 = vcombine.high %v1400, %v1428
    %v1447 = vcombine.low %v1407, %v1435
    %v1448 = vcombine.high %v1407, %v1435
    %v1449 = vcombine.low %v1414, %v1442
    %v1450 = vcombine.high %v1414, %v1442
    %v1451 = vcombine.low %v31, %v38
    %v1452 = vcombine.high %v31, %v38
    %v1453 = vcombine.low %v45, %v52
    %v1454 = vcombine.high %v45, %v52
    %v1455 = vcombine.low %v59, %v66
    %v1456 = vcombine.high %v59, %v66
    %v1457 = vcombine.low %v73, %v80
    %v1458 = vcombine.high %v73, %v80
    %v1460 = vunpack.c.l.s4 1966171168
    %v1461 = vunpack.c.0.s8 %v1460
    %v1462 = vlaneseq
    %v1463 = vshrl.u32 %v1462, 7
    %v1464 = vsub.s32 %v1461, %v1463
    %v1465 = vrot.slane %v1451, %v1464
    %v1467 = vunpack.c.l.s4 1966171168
    %v1468 = vunpack.c.0.s8 %v1467
    %v1469 = vlaneseq
    %v1470 = vshrl.u32 %v1469, 7
    %v1471 = vsub.s32 %v1468, %v1470
    %v1472 = vrot.slane %v1452, %v1471
    %v1474 = vunpack.c.l.s4 1966171168
    %v1475 = vunpack.c.0.s8 %v1474
    %v1476 = vlaneseq
    %v1477 = vshrl.u32 %v1476, 7
    %v1478 = vsub.s32 %v1475, %v1477
    %v1479 = vrot.slane %v1453, %v1478
    %v1481 = vunpack.c.l.s4 1966171168
    %v1482 = vunpack.c.0.s8 %v1481
    %v1483 = vlaneseq
    %v1484 = vshrl.u32 %v1483, 7
    %v1485 = vsub.s32 %v1482, %v1484
    %v1486 = vrot.slane %v1454, %v1485
    %v1488 = vunpack.c.l.s4 1966171168
    %v1489 = vunpack.c.0.s8 %v1488
    %v1490 = vlaneseq
    %v1491 = vshrl.u32 %v1490, 7
    %v1492 = vsub.s32 %v1489, %v1491
    %v1493 = vrot.slane %v1455, %v1492
    %v1495 = vunpack.c.l.s4 1966171168
    %v1496 = vunpack.c.0.s8 %v1495
    %v1497 = vlaneseq
    %v1498 = vshrl.u32 %v1497, 7
    %v1499 = vsub.s32 %v1496, %v1498
    %v1500 = vrot.slane %v1456, %v1499
    %v1502 = vunpack.c.l.s4 1966171168
    %v1503 = vunpack.c.0.s8 %v1502
    %v1504 = vlaneseq
    %v1505 = vshrl.u32 %v1504, 7
    %v1506 = vsub.s32 %v1503, %v1505
    %v1507 = vrot.slane %v1457, %v1506
    %v1509 = vunpack.c.l.s4 1966171168
    %v1510 = vunpack.c.0.s8 %v1509
    %v1511 = vlaneseq
    %v1512 = vshrl.u32 %v1511, 7
    %v1513 = vsub.s32 %v1510, %v1512
    %v1514 = vrot.slane %v1458, %v1513
    %v1515 = vcombine.low %v1465, %v1479
    %v1516 = vcombine.high %v1465, %v1479
    %v1517 = vcombine.low %v1472, %v1486
    %v1518 = vcombine.high %v1472, %v1486
    %v1519 = vcombine.low %v1493, %v1507
    %v1520 = vcombine.high %v1493, %v1507
    %v1521 = vcombine.low %v1500, %v1514
    %v1522 = vcombine.high %v1500, %v1514
    %v1524 = vunpack.c.l.s4 1966171168
    %v1525 = vunpack.c.0.s8 %v1524
    %v1526 = vlaneseq
    %v1527 = vshrl.u32 %v1526, 7
    %v1528 = vsub.s32 %v1525, %v1527
    %v1529 = vrot.slane %v1515, %v1528
    %v1531 = vunpack.c.l.s4 1966171168
    %v1532 = vunpack.c.0.s8 %v1531
    %v1533 = vlaneseq
    %v1534 = vshrl.u32 %v1533, 7
    %v1535 = vsub.s32 %v1532, %v1534
    %v1536 = vrot.slane %v1517, %v1535
    %v1538 = vunpack.c.l.s4 1966171168
    %v1539 = vunpack.c.0.s8 %v1538
    %v1540 = vlaneseq
    %v1541 = vshrl.u32 %v1540, 7
    %v1542 = vsub.s32 %v1539, %v1541
    %v1543 = vrot.slane %v1516, %v1542
    %v1545 = vunpack.c.l.s4 1966171168
    %v1546 = vunpack.c.0.s8 %v1545
    %v1547 = vlaneseq
    %v1548 = vshrl.u32 %v1547, 7
    %v1549 = vsub.s32 %v1546, %v1548
    %v1550 = vrot.slane %v1518, %v1549
    %v1552 = vunpack.c.l.s4 1966171168
    %v1553 = vunpack.c.0.s8 %v1552
    %v1554 = vlaneseq
    %v1555 = vshrl.u32 %v1554, 7
    %v1556 = vsub.s32 %v1553, %v1555
    %v1557 = vrot.slane %v1519, %v1556
    %v1559 = vunpack.c.l.s4 1966171168
    %v1560 = vunpack.c.0.s8 %v1559
    %v1561 = vlaneseq
    %v1562 = vshrl.u32 %v1561, 7
    %v1563 = vsub.s32 %v1560, %v1562
    %v1564 = vrot.slane %v1521, %v1563
    %v1566 = vunpack.c.l.s4 1966171168
    %v1567 = vunpack.c.0.s8 %v1566
    %v1568 = vlaneseq
    %v1569 = vshrl.u32 %v1568, 7
    %v1570 = vsub.s32 %v1567, %v1569
    %v1571 = vrot.slane %v1520, %v1570
    %v1573 = vunpack.c.l.s4 1966171168
    %v1574 = vunpack.c.0.s8 %v1573
    %v1575 = vlaneseq
    %v1576 = vshrl.u32 %v1575, 7
    %v1577 = vsub.s32 %v1574, %v1576
    %v1578 = vrot.slane %v1522, %v1577
    %v1579 = vcombine.low %v1529, %v1557
    %v1580 = vcombine.high %v1529, %v1557
    %v1581 = vcombine.low %v1536, %v1564
    %v1582 = vcombine.high %v1536, %v1564
    %v1583 = vcombine.low %v1543, %v1571
    %v1584 = vcombine.high %v1543, %v1571
    %v1585 = vcombine.low %v1550, %v1578
    %v1586 = vcombine.high %v1550, %v1578
    %v1587 = vcombine.low %v32, %v39
    %v1588 = vcombine.high %v32, %v39
    %v1589 = vcombine.low %v46, %v53
    %v1590 = vcombine.high %v46, %v53
    %v1591 = vcombine.low %v60, %v67
    %v1592 = vcombine.high %v60, %v67
    %v1593 = vcombine.low %v74, %v81
    %v1594 = vcombine.high %v74, %v81
    %v1596 = vunpack.c.l.s4 1966171168
    %v1597 = vunpack.c.0.s8 %v1596
    %v1598 = vlaneseq
    %v1599 = vshrl.u32 %v1598, 7
    %v1600 = vsub.s32 %v1597, %v1599
    %v1601 = vrot.slane %v1587, %v1600
    %v1603 = vunpack.c.l.s4 1966171168
    %v1604 = vunpack.c.0.s8 %v1603
    %v1605 = vlaneseq
    %v1606 = vshrl.u32 %v1605, 7
    %v1607 = vsub.s32 %v1604, %v1606
    %v1608 = vrot.slane %v1588, %v1607
    %v1610 = vunpack.c.l.s4 1966171168
    %v1611 = vunpack.c.0.s8 %v1610
    %v1612 = vlaneseq
    %v1613 = vshrl.u32 %v1612, 7
    %v1614 = vsub.s32 %v1611, %v1613
    %v1615 = vrot.slane %v1589, %v1614
    %v1617 = vunpack.c.l.s4 1966171168
    %v1618 = vunpack.c.0.s8 %v1617
    %v1619 = vlaneseq
    %v1620 = vshrl.u32 %v1619, 7
    %v1621 = vsub.s32 %v1618, %v1620
    %v1622 = vrot.slane %v1590, %v1621
    %v1624 = vunpack.c.l.s4 1966171168
    %v1625 = vunpack.c.0.s8 %v1624
    %v1626 = vlaneseq
    %v1627 = vshrl.u32 %v1626, 7
    %v1628 = vsub.s32 %v1625, %v1627
    %v1629 = vrot.slane %v1591, %v1628
    %v1631 = vunpack.c.l.s4 1966171168
    %v1632 = vunpack.c.0.s8 %v1631
    %v1633 = vlaneseq
    %v1634 = vshrl.u32 %v1633, 7
    %v1635 = vsub.s32 %v1632, %v1634
    %v1636 = vrot.slane %v1592, %v1635
    %v1638 = vunpack.c.l.s4 1966171168
    %v1639 = vunpack.c.0.s8 %v1638
    %v1640 = vlaneseq
    %v1641 = vshrl.u32 %v1640, 7
    %v1642 = vsub.s32 %v1639, %v1641
    %v1643 = vrot.slane %v1593, %v1642
    %v1645 = vunpack.c.l.s4 1966171168
    %v1646 = vunpack.c.0.s8 %v1645
    %v1647 = vlaneseq
    %v1648 = vshrl.u32 %v1647, 7
    %v1649 = vsub.s32 %v1646, %v1648
    %v1650 = vrot.slane %v1594, %v1649
    %v1651 = vcombine.low %v1601, %v1615
    %v1652 = vcombine.high %v1601, %v1615
    %v1653 = vcombine.low %v1608, %v1622
    %v1654 = vcombine.high %v1608, %v1622
    %v1655 = vcombine.low %v1629, %v1643
    %v1656 = vcombine.high %v1629, %v1643
    %v1657 = vcombine.low %v1636, %v1650
    %v1658 = vcombine.high %v1636, %v1650
    %v1660 = vunpack.c.l.s4 1966171168
    %v1661 = vunpack.c.0.s8 %v1660
    %v1662 = vlaneseq
    %v1663 = vshrl.u32 %v1662, 7
    %v1664 = vsub.s32 %v1661, %v1663
    %v1665 = vrot.slane %v1651, %v1664
    %v1667 = vunpack.c.l.s4 1966171168
    %v1668 = vunpack.c.0.s8 %v1667
    %v1669 = vlaneseq
    %v1670 = vshrl.u32 %v1669, 7
    %v1671 = vsub.s32 %v1668, %v1670
    %v1672 = vrot.slane %v1653, %v1671
    %v1674 = vunpack.c.l.s4 1966171168
    %v1675 = vunpack.c.0.s8 %v1674
    %v1676 = vlaneseq
    %v1677 = vshrl.u32 %v1676, 7
    %v1678 = vsub.s32 %v1675, %v1677
    %v1679 = vrot.slane %v1652, %v1678
    %v1681 = vunpack.c.l.s4 1966171168
    %v1682 = vunpack.c.0.s8 %v1681
    %v1683 = vlaneseq
    %v1684 = vshrl.u32 %v1683, 7
    %v1685 = vsub.s32 %v1682, %v1684
    %v1686 = vrot.slane %v1654, %v1685
    %v1688 = vunpack.c.l.s4 1966171168
    %v1689 = vunpack.c.0.s8 %v1688
    %v1690 = vlaneseq
    %v1691 = vshrl.u32 %v1690, 7
    %v1692 = vsub.s32 %v1689, %v1691
    %v1693 = vrot.slane %v1655, %v1692
    %v1695 = vunpack.c.l.s4 1966171168
    %v1696 = vunpack.c.0.s8 %v1695
    %v1697 = vlaneseq
    %v1698 = vshrl.u32 %v1697, 7
    %v1699 = vsub.s32 %v1696, %v1698
    %v1700 = vrot.slane %v1657, %v1699
    %v1702 = vunpack.c.l.s4 1966171168
    %v1703 = vunpack.c.0.s8 %v1702
    %v1704 = vlaneseq
    %v1705 = vshrl.u32 %v1704, 7
    %v1706 = vsub.s32 %v1703, %v1705
    %v1707 = vrot.slane %v1656, %v1706
    %v1709 = vunpack.c.l.s4 1966171168
    %v1710 = vunpack.c.0.s8 %v1709
    %v1711 = vlaneseq
    %v1712 = vshrl.u32 %v1711, 7
    %v1713 = vsub.s32 %v1710, %v1712
    %v1714 = vrot.slane %v1658, %v1713
    %v1715 = vcombine.low %v1665, %v1693
    %v1716 = vcombine.high %v1665, %v1693
    %v1717 = vcombine.low %v1672, %v1700
    %v1718 = vcombine.high %v1672, %v1700
    %v1719 = vcombine.low %v1679, %v1707
    %v1720 = vcombine.high %v1679, %v1707
    %v1721 = vcombine.low %v1686, %v1714
    %v1722 = vcombine.high %v1686, %v1714
    %v1723 = vcombine.low %v33, %v40
    %v1724 = vcombine.high %v33, %v40
    %v1725 = vcombine.low %v47, %v54
    %v1726 = vcombine.high %v47, %v54
    %v1727 = vcombine.low %v61, %v68
    %v1728 = vcombine.high %v61, %v68
    %v1729 = vcombine.low %v75, %v82
    %v1730 = vcombine.high %v75, %v82
    %v1732 = vunpack.c.l.s4 1966171168
    %v1733 = vunpack.c.0.s8 %v1732
    %v1734 = vlaneseq
    %v1735 = vshrl.u32 %v1734, 7
    %v1736 = vsub.s32 %v1733, %v1735
    %v1737 = vrot.slane %v1723, %v1736
    %v1739 = vunpack.c.l.s4 1966171168
    %v1740 = vunpack.c.0.s8 %v1739
    %v1741 = vlaneseq
    %v1742 = vshrl.u32 %v1741, 7
    %v1743 = vsub.s32 %v1740, %v1742
    %v1744 = vrot.slane %v1724, %v1743
    %v1746 = vunpack.c.l.s4 1966171168
    %v1747 = vunpack.c.0.s8 %v1746
    %v1748 = vlaneseq
    %v1749 = vshrl.u32 %v1748, 7
    %v1750 = vsub.s32 %v1747, %v1749
    %v1751 = vrot.slane %v1725, %v1750
    %v1753 = vunpack.c.l.s4 1966171168
    %v1754 = vunpack.c.0.s8 %v1753
    %v1755 = vlaneseq
    %v1756 = vshrl.u32 %v1755, 7
    %v1757 = vsub.s32 %v1754, %v1756
    %v1758 = vrot.slane %v1726, %v1757
    %v1760 = vunpack.c.l.s4 1966171168
    %v1761 = vunpack.c.0.s8 %v1760
    %v1762 = vlaneseq
    %v1763 = vshrl.u32 %v1762, 7
    %v1764 = vsub.s32 %v1761, %v1763
    %v1765 = vrot.slane %v1727, %v1764
    %v1767 = vunpack.c.l.s4 1966171168
    %v1768 = vunpack.c.0.s8 %v1767
    %v1769 = vlaneseq
    %v1770 = vshrl.u32 %v1769, 7
    %v1771 = vsub.s32 %v1768, %v1770
    %v1772 = vrot.slane %v1728, %v1771
    %v1774 = vunpack.c.l.s4 1966171168
    %v1775 = vunpack.c.0.s8 %v1774
    %v1776 = vlaneseq
    %v1777 = vshrl.u32 %v1776, 7
    %v1778 = vsub.s32 %v1775, %v1777
    %v1779 = vrot.slane %v1729, %v1778
    %v1781 = vunpack.c.l.s4 1966171168
    %v1782 = vunpack.c.0.s8 %v1781
    %v1783 = vlaneseq
    %v1784 = vshrl.u32 %v1783, 7
    %v1785 = vsub.s32 %v1782, %v1784
    %v1786 = vrot.slane %v1730, %v1785
    %v1787 = vcombine.low %v1737, %v1751
    %v1788 = vcombine.high %v1737, %v1751
    %v1789 = vcombine.low %v1744, %v1758
    %v1790 = vcombine.high %v1744, %v1758
    %v1791 = vcombine.low %v1765, %v1779
    %v1792 = vcombine.high %v1765, %v1779
    %v1793 = vcombine.low %v1772, %v1786
    %v1794 = vcombine.high %v1772, %v1786
    %v1796 = vunpack.c.l.s4 1966171168
    %v1797 = vunpack.c.0.s8 %v1796
    %v1798 = vlaneseq
    %v1799 = vshrl.u32 %v1798, 7
    %v1800 = vsub.s32 %v1797, %v1799
    %v1801 = vrot.slane %v1787, %v1800
    %v1803 = vunpack.c.l.s4 1966171168
    %v1804 = vunpack.c.0.s8 %v1803
    %v1805 = vlaneseq
    %v1806 = vshrl.u32 %v1805, 7
    %v1807 = vsub.s32 %v1804, %v1806
    %v1808 = vrot.slane %v1789, %v1807
    %v1810 = vunpack.c.l.s4 1966171168
    %v1811 = vunpack.c.0.s8 %v1810
    %v1812 = vlaneseq
    %v1813 = vshrl.u32 %v1812, 7
    %v1814 = vsub.s32 %v1811, %v1813
    %v1815 = vrot.slane %v1788, %v1814
    %v1817 = vunpack.c.l.s4 1966171168
    %v1818 = vunpack.c.0.s8 %v1817
    %v1819 = vlaneseq
    %v1820 = vshrl.u32 %v1819, 7
    %v1821 = vsub.s32 %v1818, %v1820
    %v1822 = vrot.slane %v1790, %v1821
    %v1824 = vunpack.c.l.s4 1966171168
    %v1825 = vunpack.c.0.s8 %v1824
    %v1826 = vlaneseq
    %v1827 = vshrl.u32 %v1826, 7
    %v1828 = vsub.s32 %v1825, %v1827
    %v1829 = vrot.slane %v1791, %v1828
    %v1831 = vunpack.c.l.s4 1966171168
    %v1832 = vunpack.c.0.s8 %v1831
    %v1833 = vlaneseq
    %v1834 = vshrl.u32 %v1833, 7
    %v1835 = vsub.s32 %v1832, %v1834
    %v1836 = vrot.slane %v1793, %v1835
    %v1838 = vunpack.c.l.s4 1966171168
    %v1839 = vunpack.c.0.s8 %v1838
    %v1840 = vlaneseq
    %v1841 = vshrl.u32 %v1840, 7
    %v1842 = vsub.s32 %v1839, %v1841
    %v1843 = vrot.slane %v1792, %v1842
    %v1845 = vunpack.c.l.s4 1966171168
    %v1846 = vunpack.c.0.s8 %v1845
    %v1847 = vlaneseq
    %v1848 = vshrl.u32 %v1847, 7
    %v1849 = vsub.s32 %v1846, %v1848
    %v1850 = vrot.slane %v1794, %v1849
    %v1851 = vcombine.low %v1801, %v1829
    %v1852 = vcombine.high %v1801, %v1829
    %v1853 = vcombine.low %v1808, %v1836
    %v1854 = vcombine.high %v1808, %v1836
    %v1855 = vcombine.low %v1815, %v1843
    %v1856 = vcombine.high %v1815, %v1843
    %v1857 = vcombine.low %v1822, %v1850
    %v1858 = vcombine.high %v1822, %v1850
    %v1859 = vcombine.low %v34, %v41
    %v1860 = vcombine.high %v34, %v41
    %v1861 = vcombine.low %v48, %v55
    %v1862 = vcombine.high %v48, %v55
    %v1863 = vcombine.low %v62, %v69
    %v1864 = vcombine.high %v62, %v69
    %v1865 = vcombine.low %v76, %v83
    %v1866 = vcombine.high %v76, %v83
    %v1868 = vunpack.c.l.s4 1966171168
    %v1869 = vunpack.c.0.s8 %v1868
    %v1870 = vlaneseq
    %v1871 = vshrl.u32 %v1870, 7
    %v1872 = vsub.s32 %v1869, %v1871
    %v1873 = vrot.slane %v1859, %v1872
    %v1875 = vunpack.c.l.s4 1966171168
    %v1876 = vunpack.c.0.s8 %v1875
    %v1877 = vlaneseq
    %v1878 = vshrl.u32 %v1877, 7
    %v1879 = vsub.s32 %v1876, %v1878
    %v1880 = vrot.slane %v1860, %v1879
    %v1882 = vunpack.c.l.s4 1966171168
    %v1883 = vunpack.c.0.s8 %v1882
    %v1884 = vlaneseq
    %v1885 = vshrl.u32 %v1884, 7
    %v1886 = vsub.s32 %v1883, %v1885
    %v1887 = vrot.slane %v1861, %v1886
    %v1889 = vunpack.c.l.s4 1966171168
    %v1890 = vunpack.c.0.s8 %v1889
    %v1891 = vlaneseq
    %v1892 = vshrl.u32 %v1891, 7
    %v1893 = vsub.s32 %v1890, %v1892
    %v1894 = vrot.slane %v1862, %v1893
    %v1896 = vunpack.c.l.s4 1966171168
    %v1897 = vunpack.c.0.s8 %v1896
    %v1898 = vlaneseq
    %v1899 = vshrl.u32 %v1898, 7
    %v1900 = vsub.s32 %v1897, %v1899
    %v1901 = vrot.slane %v1863, %v1900
    %v1903 = vunpack.c.l.s4 1966171168
    %v1904 = vunpack.c.0.s8 %v1903
    %v1905 = vlaneseq
    %v1906 = vshrl.u32 %v1905, 7
    %v1907 = vsub.s32 %v1904, %v1906
    %v1908 = vrot.slane %v1864, %v1907
    %v1910 = vunpack.c.l.s4 1966171168
    %v1911 = vunpack.c.0.s8 %v1910
    %v1912 = vlaneseq
    %v1913 = vshrl.u32 %v1912, 7
    %v1914 = vsub.s32 %v1911, %v1913
    %v1915 = vrot.slane %v1865, %v1914
    %v1917 = vunpack.c.l.s4 1966171168
    %v1918 = vunpack.c.0.s8 %v1917
    %v1919 = vlaneseq
    %v1920 = vshrl.u32 %v1919, 7
    %v1921 = vsub.s32 %v1918, %v1920
    %v1922 = vrot.slane %v1866, %v1921
    %v1923 = vcombine.low %v1873, %v1887
    %v1924 = vcombine.high %v1873, %v1887
    %v1925 = vcombine.low %v1880, %v1894
    %v1926 = vcombine.high %v1880, %v1894
    %v1927 = vcombine.low %v1901, %v1915
    %v1928 = vcombine.high %v1901, %v1915
    %v1929 = vcombine.low %v1908, %v1922
    %v1930 = vcombine.high %v1908, %v1922
    %v1932 = vunpack.c.l.s4 1966171168
    %v1933 = vunpack.c.0.s8 %v1932
    %v1934 = vlaneseq
    %v1935 = vshrl.u32 %v1934, 7
    %v1936 = vsub.s32 %v1933, %v1935
    %v1937 = vrot.slane %v1923, %v1936
    %v1939 = vunpack.c.l.s4 1966171168
    %v1940 = vunpack.c.0.s8 %v1939
    %v1941 = vlaneseq
    %v1942 = vshrl.u32 %v1941, 7
    %v1943 = vsub.s32 %v1940, %v1942
    %v1944 = vrot.slane %v1925, %v1943
    %v1946 = vunpack.c.l.s4 1966171168
    %v1947 = vunpack.c.0.s8 %v1946
    %v1948 = vlaneseq
    %v1949 = vshrl.u32 %v1948, 7
    %v1950 = vsub.s32 %v1947, %v1949
    %v1951 = vrot.slane %v1924, %v1950
    %v1953 = vunpack.c.l.s4 1966171168
    %v1954 = vunpack.c.0.s8 %v1953
    %v1955 = vlaneseq
    %v1956 = vshrl.u32 %v1955, 7
    %v1957 = vsub.s32 %v1954, %v1956
    %v1958 = vrot.slane %v1926, %v1957
    %v1960 = vunpack.c.l.s4 1966171168
    %v1961 = vunpack.c.0.s8 %v1960
    %v1962 = vlaneseq
    %v1963 = vshrl.u32 %v1962, 7
    %v1964 = vsub.s32 %v1961, %v1963
    %v1965 = vrot.slane %v1927, %v1964
    %v1967 = vunpack.c.l.s4 1966171168
    %v1968 = vunpack.c.0.s8 %v1967
    %v1969 = vlaneseq
    %v1970 = vshrl.u32 %v1969, 7
    %v1971 = vsub.s32 %v1968, %v1970
    %v1972 = vrot.slane %v1929, %v1971
    %v1974 = vunpack.c.l.s4 1966171168
    %v1975 = vunpack.c.0.s8 %v1974
    %v1976 = vlaneseq
    %v1977 = vshrl.u32 %v1976, 7
    %v1978 = vsub.s32 %v1975, %v1977
    %v1979 = vrot.slane %v1928, %v1978
    %v1981 = vunpack.c.l.s4 1966171168
    %v1982 = vunpack.c.0.s8 %v1981
    %v1983 = vlaneseq
    %v1984 = vshrl.u32 %v1983, 7
    %v1985 = vsub.s32 %v1982, %v1984
    %v1986 = vrot.slane %v1930, %v1985
    %v1987 = vcombine.low %v1937, %v1965
    %v1988 = vcombine.high %v1937, %v1965
    %v1989 = vcombine.low %v1944, %v1972
    %v1990 = vcombine.high %v1944, %v1972
    %v1991 = vcombine.low %v1951, %v1979
    %v1992 = vcombine.high %v1951, %v1979
    %v1993 = vcombine.low %v1958, %v1986
    %v1994 = vcombine.high %v1958, %v1986
    %v2947 = vunpack.c.l.b16 %v84
    %v2948 = vunpack.c.l.b16 %v85
    %v2949 = vunpack.c.l.b16 %v86
    %v2950 = vunpack.c.l.b16 %v87
    %v2951 = vunpack.c.l.b16 %v88
    %v2952 = vunpack.c.l.b16 %v89
    %v2953 = vunpack.c.l.b16 %v90
    %v2954 = vunpack.c.l.b16 %v91
    %v2955 = vunpack.c.l.b16 %v92
    %v2956 = vunpack.c.l.b16 %v93
    %v2957 = vunpack.c.l.b16 %v94
    %v2958 = vunpack.c.l.b16 %v95
    %v2959 = vunpack.c.l.b16 %v96
    %v2960 = vunpack.c.l.b16 %v97
    %v2961 = vunpack.c.l.b16 %v98
    %v2962 = vunpack.c.l.b16 %v99
    %v2963 = vunpack.c.l.b16 %v100
    %v2964 = vunpack.c.l.b16 %v101
    %v2965 = vunpack.c.l.b16 %v102
    %v2966 = vunpack.c.l.b16 %v103
    %v2967 = vunpack.c.l.b16 %v104
    %v2968 = vunpack.c.l.b16 %v105
    %v2969 = vunpack.c.l.b16 %v106
    %v2970 = vunpack.c.l.b16 %v107
    %v2971 = vunpack.c.l.b16 %v108
    %v2972 = vunpack.c.l.b16 %v109
    %v2973 = vunpack.c.l.b16 %v110
    %v2974 = vunpack.c.l.b16 %v111
    %v2975 = vunpack.c.l.b16 %v112
    %v2976 = vunpack.c.l.b16 %v113
    %v2977 = vunpack.c.l.b16 %v114
    %v2978 = vunpack.c.l.b16 %v115
    %v2979 = vunpack.c.l.b16 %v116
    %v2980 = vunpack.c.l.b16 %v117
    %v2981 = vunpack.c.l.b16 %v118
    %v2982 = vunpack.c.l.b16 %v119
    %v2983 = vunpack.c.l.b16 %v120
    %v2984 = vunpack.c.l.b16 %v121
    %v2985 = vunpack.c.l.b16 %v122
    %v2986 = vunpack.c.l.b16 %v123
    %v2987 = vunpack.c.l.b16 %v124
    %v2988 = vunpack.c.l.b16 %v125
    %v2989 = vunpack.c.l.b16 %v126
    %v2990 = vunpack.c.l.b16 %v127
    %v2991 = vunpack.c.l.b16 %v128
    %v2992 = vunpack.c.l.b16 %v129
    %v2993 = vunpack.c.l.b16 %v130
    %v2994 = vunpack.c.l.b16 %v131
    %v2995 = vunpack.c.l.b16 %v132
    %v2996 = vunpack.c.l.b16 %v133
    %v2997 = vunpack.c.l.b16 %v134
    %v2998 = vunpack.c.l.b16 %v135
    %v2999 = vunpack.c.l.b16 %v136
    %v3000 = vunpack.c.l.b16 %v137
    %v3001 = vunpack.c.l.b16 %v138
    %v3002 = vunpack.c.l.b16 %v139
    %v3003 = vunpack.c.l.b16 %v140
    %v3004 = vunpack.c.l.b16 %v141
    %v3005 = vunpack.c.l.b16 %v142
    %v3006 = vunpack.c.l.b16 %v143
    %v3007 = vunpack.c.l.b16 %v144
    %v3008 = vunpack.c.l.b16 %v145
    %v3009 = vunpack.c.l.b16 %v146
    %v3010 = vunpack.c.l.b16 %v147
    %v3011 = vunpack.c.l.b16 %v148
    %v3012 = vunpack.c.l.b16 %v149
    %v3013 = vunpack.c.l.b16 %v150
    %v3014 = vunpack.c.l.b16 %v151
    %v3015 = vunpack.c.l.b16 %v152
    %v3016 = vunpack.c.l.b16 %v153
    %v3017 = vunpack.c.l.b16 %v154
    %v3018 = vunpack.c.l.b16 %v155
    %v3019 = vunpack.c.l.b16 %v156
    %v3020 = vunpack.c.l.b16 %v157
    %v3021 = vunpack.c.l.b16 %v158
    %v3022 = vunpack.c.l.b16 %v159
    %v3023 = vunpack.c.l.b16 %v160
    %v3024 = vunpack.c.l.b16 %v161
    %v3025 = vunpack.c.l.b16 %v162
    %v3026 = vunpack.c.l.b16 %v163
    %v3027 = vunpack.c.l.b16 %v164
    %v3028 = vunpack.c.l.b16 %v165
    %v3029 = vunpack.c.l.b16 %v166
    %v3030 = vunpack.c.l.b16 %v167
    %v3031 = vunpack.c.l.b16 %v168
    %v3032 = vunpack.c.l.b16 %v169
    %v3033 = vunpack.c.l.b16 %v170
    %v3034 = vunpack.c.l.b16 %v171
    %v3035 = vunpack.c.l.b16 %v172
    %v3036 = vunpack.c.l.b16 %v173
    %v3037 = vunpack.c.l.b16 %v174
    %v3038 = vunpack.c.l.b16 %v175
    %v3039 = vunpack.c.l.b16 %v176
    %v3040 = vunpack.c.l.b16 %v177
    %v3041 = vunpack.c.l.b16 %v178
    %v3042 = vunpack.c.l.b16 %v179
    %v3043 = vunpack.c.l.b16 %v180
    %v3044 = vunpack.c.l.b16 %v181
    %v3045 = vunpack.c.l.b16 %v182
    %v3046 = vunpack.c.l.b16 %v183
    %v3047 = vunpack.c.l.b16 %v184
    %v3048 = vunpack.c.l.b16 %v185
    %v3049 = vunpack.c.l.b16 %v186
    %v3050 = vunpack.c.l.b16 %v187
    %v3051 = vunpack.c.l.b16 %v188
    %v3052 = vunpack.c.l.b16 %v189
    %v3053 = vunpack.c.l.b16 %v190
    %v3054 = vunpack.c.l.b16 %v191
    %v3055 = vunpack.c.l.b16 %v192
    %v3056 = vunpack.c.l.b16 %v193
    %v3057 = vunpack.c.l.b16 %v194
    %v3058 = vunpack.c.l.b16 %v195
    %v3059 = vunpack.c.l.b16 %v196
    %v3060 = vunpack.c.l.b16 %v197
    %v3061 = vunpack.c.l.b16 %v198
    %v3062 = vunpack.c.l.b16 %v199
    %v3063 = vunpack.c.l.b16 %v200
    %v3064 = vunpack.c.l.b16 %v201
    %v3065 = vunpack.c.l.b16 %v202
    %v3066 = vunpack.c.l.b16 %v203
    %v3067 = vunpack.c.l.b16 %v204
    %v3068 = vunpack.c.l.b16 %v205
    %v3069 = vunpack.c.l.b16 %v206
    %v3070 = vunpack.c.l.b16 %v207
    %v3071 = vunpack.c.l.b16 %v208
    %v3072 = vunpack.c.l.b16 %v209
    %v3073 = vunpack.c.l.b16 %v210
    %v3074 = vunpack.c.l.b16 %v211
    %v3075 = vunpack.c.l.b16 %v212
    %v3076 = vunpack.c.l.b16 %v213
    %v3077 = vunpack.c.l.b16 %v214
    %v3078 = vunpack.c.l.b16 %v215
    %v3079 = vunpack.c.l.b16 %v216
    %v3080 = vunpack.c.l.b16 %v217
    %v3081 = vunpack.c.l.b16 %v218
    %v3082 = vunpack.c.l.b16 %v219
    %v3083 = vunpack.c.l.b16 %v220
    %v3084 = vunpack.c.l.b16 %v221
    %v3085 = vunpack.c.l.b16 %v222
    %v3086 = vunpack.c.l.b16 %v223
    %v3087 = vunpack.c.l.b16 %v224
    %v3088 = vunpack.c.l.b16 %v225
    %v3089 = vunpack.c.l.b16 %v226
    %v3090 = vunpack.c.l.b16 %v227
    %v3091 = vunpack.c.l.b16 %v228
    %v3092 = vunpack.c.l.b16 %v229
    %v3093 = vunpack.c.l.b16 %v230
    %v3094 = vunpack.c.l.b16 %v231
    %v3095 = vunpack.c.l.b16 %v232
    %v3096 = vunpack.c.l.b16 %v233
    %v3097 = vunpack.c.l.b16 %v234
    %v3098 = vunpack.c.l.b16 %v235
    %v3099 = vunpack.c.l.b16 %v236
    %v3100 = vunpack.c.l.b16 %v237
    %v3101 = vunpack.c.l.b16 %v238
    %v3102 = vunpack.c.l.b16 %v239
    %v3103 = vunpack.c.l.b16 %v240
    %v3104 = vunpack.c.l.b16 %v241
    %v3105 = vunpack.c.l.b16 %v242
    %v3106 = vunpack.c.l.b16 %v243
    %v3107 = vunpack.c.l.b16 %v244
    %v3108 = vunpack.c.l.b16 %v245
    %v3109 = vunpack.c.l.b16 %v246
    %v3110 = vunpack.c.l.b16 %v247
    %v3111 = vunpack.c.l.b16 %v248
    %v3112 = vunpack.c.l.b16 %v249
    %v3113 = vunpack.c.l.b16 %v250
    %v3114 = vunpack.c.l.b16 %v251
    %v3115 = vunpack.c.l.b16 %v252
    %v3116 = vunpack.c.l.b16 %v253
    %v3117 = vunpack.c.l.b16 %v254
    %v3118 = vunpack.c.l.b16 %v255
    %v3119 = vunpack.c.l.b16 %v256
    %v3120 = vunpack.c.l.b16 %v257
    %v3121 = vunpack.c.l.b16 %v258
    %v3122 = vunpack.c.l.b16 %v259
    %v3123 = vunpack.c.l.b16 %v260
    %v3124 = vunpack.c.l.b16 %v261
    %v3125 = vunpack.c.l.b16 %v262
    %v3126 = vunpack.c.l.b16 %v263
    %v3127 = vunpack.c.l.b16 %v264
    %v3128 = vunpack.c.l.b16 %v265
    %v3129 = vunpack.c.l.b16 %v266
    %v3130 = vunpack.c.l.b16 %v267
    %v3131 = vunpack.c.l.b16 %v268
    %v3132 = vunpack.c.l.b16 %v269
    %v3133 = vunpack.c.l.b16 %v270
    %v3134 = vunpack.c.l.b16 %v271
    %v3135 = vunpack.c.l.b16 %v272
    %v3136 = vunpack.c.l.b16 %v273
    %v3137 = vunpack.c.l.b16 %v274
    %v3138 = vunpack.c.l.b16 %v275
    %v3139 = vunpack.c.l.b16 %v276
    %v3140 = vunpack.c.l.b16 %v277
    %v3141 = vunpack.c.l.b16 %v278
    %v3142 = vunpack.c.l.b16 %v279
    %v3143 = vunpack.c.l.b16 %v280
    %v3144 = vunpack.c.l.b16 %v281
    %v3145 = vunpack.c.l.b16 %v282
    %v3146 = vunpack.c.l.b16 %v283
    %v3147 = vunpack.c.l.b16 %v284
    %v3148 = vunpack.c.l.b16 %v285
    %v3149 = vunpack.c.l.b16 %v286
    %v3150 = vunpack.c.l.b16 %v287
    %v3151 = vunpack.c.l.b16 %v288
    %v3152 = vunpack.c.l.b16 %v289
    %v3153 = vunpack.c.l.b16 %v290
    %v3154 = vunpack.c.l.b16 %v291
    %v3155 = vunpack.c.l.b16 %v292
    %v3156 = vunpack.c.l.b16 %v293
    %v3157 = vunpack.c.l.b16 %v294
    %v3158 = vunpack.c.l.b16 %v295
    %v3159 = vunpack.c.l.b16 %v296
    %v3160 = vunpack.c.l.b16 %v297
    %v3161 = vunpack.c.l.b16 %v298
    %v3162 = vunpack.c.l.b16 %v299
    %v3163 = vunpack.c.l.b16 %v300
    %v3164 = vunpack.c.l.b16 %v301
    %v3165 = vunpack.c.l.b16 %v302
    %v3166 = vunpack.c.l.b16 %v303
    %v3167 = vunpack.c.l.b16 %v304
    %v3168 = vunpack.c.l.b16 %v305
    %v3169 = vunpack.c.l.b16 %v306
    %v3170 = vunpack.c.l.b16 %v307
    %v3171 = vunpack.c.l.b16 %v308
    %v3172 = vunpack.c.l.b16 %v309
    %v3173 = vunpack.c.l.b16 %v310
    %v3174 = vunpack.c.l.b16 %v311
    %v3175 = vunpack.c.l.b16 %v312
    %v3176 = vunpack.c.l.b16 %v313
    %v3177 = vunpack.c.l.b16 %v314
    %v3178 = vunpack.c.l.b16 %v315
    %v3179 = vunpack.c.l.b16 %v316
    %v3180 = vunpack.c.l.b16 %v317
    %v3181 = vunpack.c.l.b16 %v318
    %v3182 = vunpack.c.l.b16 %v319
    %v3183 = vunpack.c.l.b16 %v320
    %v3184 = vunpack.c.l.b16 %v321
    %v3185 = vunpack.c.l.b16 %v322
    %v3186 = vunpack.c.l.b16 %v323
    %v3187 = vunpack.c.l.b16 %v324
    %v3188 = vunpack.c.l.b16 %v325
    %v3189 = vunpack.c.l.b16 %v326
    %v3190 = vunpack.c.l.b16 %v327
    %v3191 = vunpack.c.l.b16 %v328
    %v3192 = vunpack.c.l.b16 %v329
    %v3193 = vunpack.c.l.b16 %v330
    %v3194 = vunpack.c.l.b16 %v331
    %v3195 = vunpack.c.l.b16 %v332
    %v3196 = vunpack.c.l.b16 %v333
    %v3197 = vunpack.c.l.b16 %v334
    %v3198 = vunpack.c.l.b16 %v335
    %v3199 = vunpack.c.l.b16 %v336
    %v3200 = vunpack.c.l.b16 %v337
    %v3201 = vunpack.c.l.b16 %v338
    %v3202 = vunpack.c.l.b16 %v339
    %v3203 = vunpack.c.l.b16 %v340
    %v3204 = vunpack.c.l.b16 %v341
    %v3205 = vunpack.c.l.b16 %v342
    %v3206 = vunpack.c.l.b16 %v343
    %v3207 = vunpack.c.l.b16 %v344
    %v3208 = vunpack.c.l.b16 %v345
    %v3209 = vunpack.c.l.b16 %v346
    %v3210 = vunpack.c.l.b16 %v347
    %v3211 = vunpack.c.l.b16 %v348
    %v3212 = vunpack.c.l.b16 %v349
    %v3213 = vunpack.c.l.b16 %v350
    %v3214 = vunpack.c.l.b16 %v351
    %v3215 = vunpack.c.l.b16 %v352
    %v3216 = vunpack.c.l.b16 %v353
    %v3217 = vunpack.c.l.b16 %v354
    %v3218 = vunpack.c.l.b16 %v355
    %v3219 = vunpack.c.l.b16 %v356
    %v3220 = vunpack.c.l.b16 %v357
    %v3221 = vunpack.c.l.b16 %v358
    %v3222 = vunpack.c.l.b16 %v359
    %v3223 = vunpack.c.l.b16 %v360
    %v3224 = vunpack.c.l.b16 %v361
    %v3225 = vunpack.c.l.b16 %v362
    %v3226 = vunpack.c.l.b16 %v363
    %v3227 = vunpack.c.l.b16 %v364
    %v3228 = vunpack.c.l.b16 %v365
    %v3229 = vunpack.c.l.b16 %v366
    %v3230 = vunpack.c.l.b16 %v367
    %v3231 = vunpack.c.l.b16 %v368
    %v3232 = vunpack.c.l.b16 %v369
    %v3233 = vunpack.c.l.b16 %v370
    %v3234 = vunpack.c.l.b16 %v371
    %v3235 = vunpack.c.l.b16 %v372
    %v3236 = vunpack.c.l.b16 %v373
    %v3237 = vunpack.c.l.b16 %v374
    %v3238 = vunpack.c.l.b16 %v375
    %v3239 = vunpack.c.l.b16 %v376
    %v3240 = vunpack.c.l.b16 %v377
    %v3241 = vunpack.c.l.b16 %v378
    %v3242 = vunpack.c.l.b16 %v379
    %v3243 = vunpack.c.l.b16 %v380
    %v3244 = vunpack.c.l.b16 %v381
    %v3245 = vunpack.c.l.b16 %v382
    %v3246 = vunpack.c.l.b16 %v383
    %v3247 = vunpack.c.l.b16 %v384
    %v3248 = vunpack.c.l.b16 %v385
    %v3249 = vunpack.c.l.b16 %v386
    %v3250 = vunpack.c.l.b16 %v387
    %v3251 = vunpack.c.l.b16 %v388
    %v3252 = vunpack.c.l.b16 %v389
    %v3253 = vunpack.c.l.b16 %v390
    %v3254 = vunpack.c.l.b16 %v391
    %v3255 = vunpack.c.l.b16 %v392
    %v3256 = vunpack.c.l.b16 %v393
    %v3257 = vunpack.c.l.b16 %v394
    %v3258 = vunpack.c.l.b16 %v395
    %v3259 = vunpack.c.l.b16 %v396
    %v3260 = vunpack.c.l.b16 %v397
    %v3261 = vunpack.c.l.b16 %v398
    %v3262 = vunpack.c.l.b16 %v399
    %v3263 = vunpack.c.l.b16 %v400
    %v3264 = vunpack.c.l.b16 %v401
    %v3265 = vunpack.c.l.b16 %v402
    %v3266 = vunpack.c.l.b16 %v403
    %v3267 = vunpack.c.l.b16 %v404
    %v3268 = vunpack.c.l.b16 %v405
    %v3269 = vunpack.c.l.b16 %v406
    %v3270 = vunpack.c.l.b16 %v407
    %v3271 = vunpack.c.l.b16 %v408
    %v3272 = vunpack.c.l.b16 %v409
    %v3273 = vunpack.c.l.b16 %v410
    %v3274 = vunpack.c.l.b16 %v411
    %v3275 = vunpack.c.l.b16 %v412
    %v3276 = vunpack.c.l.b16 %v413
    %v3277 = vunpack.c.l.b16 %v414
    %v3278 = vunpack.c.l.b16 %v415
    %v3279 = vunpack.c.l.b16 %v416
    %v3280 = vunpack.c.l.b16 %v417
    %v3281 = vunpack.c.l.b16 %v418
    %v3282 = vunpack.c.l.b16 %v419
    %v3283 = vunpack.c.l.b16 %v420
    %v3284 = vunpack.c.l.b16 %v421
    %v3285 = vunpack.c.l.b16 %v422
    %v3286 = vunpack.c.l.b16 %v423
    %v3287 = vunpack.c.l.b16 %v424
    %v3288 = vunpack.c.l.b16 %v425
    %v3289 = vunpack.c.l.b16 %v426
    %v3290 = vunpack.c.l.b16 %v427
    %v3291 = vunpack.c.l.b16 %v428
    %v3292 = vunpack.c.l.b16 %v429
    %v3293 = vunpack.c.l.b16 %v430
    %v3294 = vunpack.c.l.b16 %v431
    %v3295 = vunpack.c.l.b16 %v432
    %v3296 = vunpack.c.l.b16 %v433
    %v3297 = vunpack.c.l.b16 %v434
    %v3298 = vunpack.c.l.b16 %v435
    %v3299 = vunpack.c.l.b16 %v436
    %v3300 = vunpack.c.l.b16 %v437
    %v3301 = vunpack.c.l.b16 %v438
    %v3302 = vunpack.c.l.b16 %v439
    %v3303 = vunpack.c.l.b16 %v440
    %v3304 = vunpack.c.l.b16 %v441
    %v3305 = vunpack.c.l.b16 %v442
    %v3306 = vunpack.c.l.b16 %v443
    %v3307 = vunpack.c.l.b16 %v444
    %v3308 = vunpack.c.l.b16 %v445
    %v3309 = vunpack.c.l.b16 %v446
    %v3310 = vunpack.c.l.b16 %v447
    %v3311 = vunpack.c.l.b16 %v448
    %v3312 = vunpack.c.l.b16 %v449
    %v3313 = vunpack.c.l.b16 %v450
    %v3314 = vunpack.c.l.b16 %v451
    %v3315 = vunpack.c.l.b16 %v452
    %v3316 = vunpack.c.l.b16 %v453
    %v3317 = vunpack.c.l.b16 %v454
    %v3318 = vunpack.c.l.b16 %v455
    %v3319 = vunpack.c.l.b16 %v456
    %v3320 = vunpack.c.l.b16 %v457
    %v3321 = vunpack.c.l.b16 %v458
    %v3322 = vunpack.c.l.b16 %v459
    %v3323 = vunpack.c.l.b16 %v460
    %v3324 = vunpack.c.l.b16 %v461
    %v3325 = vunpack.c.l.b16 %v462
    %v3326 = vunpack.c.l.b16 %v463
    %v3327 = vunpack.c.l.b16 %v464
    %v3328 = vunpack.c.l.b16 %v465
    %v3329 = vunpack.c.l.b16 %v466
    %v3330 = vunpack.c.l.b16 %v467
    %v3331 = vunpack.c.l.b16 %v468
    %v3332 = vunpack.c.l.b16 %v469
    %v3333 = vunpack.c.l.b16 %v470
    %v3334 = vunpack.c.l.b16 %v471
    %v3335 = vunpack.c.l.b16 %v472
    %v3336 = vunpack.c.l.b16 %v473
    %v3337 = vunpack.c.l.b16 %v474
    %v3338 = vunpack.c.l.b16 %v475
    %v3339 = vunpack.c.l.b16 %v476
    %v3340 = vunpack.c.l.b16 %v477
    %v3341 = vunpack.c.l.b16 %v478
    %v3342 = vunpack.c.l.b16 %v479
    %v3343 = vunpack.c.l.b16 %v480
    %v3344 = vunpack.c.l.b16 %v481
    %v3345 = vunpack.c.l.b16 %v482
    %v3346 = vunpack.c.l.b16 %v483
    %v3347 = vunpack.c.l.b16 %v484
    %v3348 = vunpack.c.l.b16 %v485
    %v3349 = vunpack.c.l.b16 %v486
    %v3350 = vunpack.c.l.b16 %v487
    %v3351 = vunpack.c.l.b16 %v488
    %v3352 = vunpack.c.l.b16 %v489
    %v3353 = vunpack.c.l.b16 %v490
    %v3354 = vunpack.c.l.b16 %v491
    %v3355 = vunpack.c.l.b16 %v492
    %v3356 = vunpack.c.l.b16 %v493
    %v3357 = vunpack.c.l.b16 %v494
    %v3358 = vunpack.c.l.b16 %v495
    %v3359 = vunpack.c.l.b16 %v496
    %v3360 = vunpack.c.l.b16 %v497
    %v3361 = vunpack.c.l.b16 %v498
    %v3362 = vunpack.c.l.b16 %v499
    %v3363 = vunpack.c.l.b16 %v500
    %v3364 = vunpack.c.l.b16 %v501
    %v3365 = vunpack.c.l.b16 %v502
    %v3366 = vunpack.c.l.b16 %v503
    %v3367 = vunpack.c.l.b16 %v504
    %v3368 = vunpack.c.l.b16 %v505
    %v3369 = vunpack.c.l.b16 %v506
    %v3370 = vunpack.c.l.b16 %v507
    %v3371 = vunpack.c.l.b16 %v508
    %v3372 = vunpack.c.l.b16 %v509
    %v3373 = vunpack.c.l.b16 %v510
    %v3374 = vunpack.c.l.b16 %v511
    %v3375 = vunpack.c.l.b16 %v512
    %v3376 = vunpack.c.l.b16 %v513
    %v3377 = vunpack.c.l.b16 %v514
    %v3378 = vunpack.c.l.b16 %v515
    %v3379 = vunpack.c.l.b16 %v516
    %v3380 = vunpack.c.l.b16 %v517
    %v3381 = vunpack.c.l.b16 %v518
    %v3382 = vunpack.c.l.b16 %v519
    %v3383 = vunpack.c.l.b16 %v520
    %v3384 = vunpack.c.l.b16 %v521
    %v3385 = vunpack.c.l.b16 %v522
    %v3386 = vunpack.c.l.b16 %v523
    %v3387 = vunpack.c.l.b16 %v524
    %v3388 = vunpack.c.l.b16 %v525
    %v3389 = vunpack.c.l.b16 %v526
    %v3390 = vunpack.c.l.b16 %v527
    %v3391 = vunpack.c.l.b16 %v528
    %v3392 = vunpack.c.l.b16 %v529
    %v3393 = vunpack.c.l.b16 %v530
    %v3394 = vunpack.c.l.b16 %v531
    %v3395 = vunpack.c.l.b16 %v532
    %v3396 = vunpack.c.l.b16 %v533
    %v3397 = vunpack.c.l.b16 %v534
    %v3398 = vunpack.c.l.b16 %v535
    %v3399 = vunpack.c.l.b16 %v536
    %v3400 = vunpack.c.l.b16 %v537
    %v3401 = vunpack.c.l.b16 %v538
    %v3402 = vunpack.c.l.b16 %v539
    %v3403 = vunpack.c.l.b16 %v540
    %v3404 = vunpack.c.l.b16 %v541
    %v3405 = vunpack.c.l.b16 %v542
    %v3406 = vunpack.c.l.b16 %v543
    %v3407 = vunpack.c.l.b16 %v544
    %v3408 = vunpack.c.l.b16 %v545
    %v3409 = vunpack.c.l.b16 %v546
    %v3410 = vunpack.c.l.b16 %v547
    %v3411 = vunpack.c.l.b16 %v548
    %v3412 = vunpack.c.l.b16 %v549
    %v3413 = vunpack.c.l.b16 %v550
    %v3414 = vunpack.c.l.b16 %v551
    %v3415 = vunpack.c.l.b16 %v552
    %v3416 = vunpack.c.l.b16 %v553
    %v3417 = vunpack.c.l.b16 %v554
    %v3418 = vunpack.c.l.b16 %v555
    %v3419 = vunpack.c.l.b16 %v556
    %v3420 = vunpack.c.l.b16 %v557
    %v3421 = vunpack.c.l.b16 %v558
    %v3422 = vunpack.c.l.b16 %v559
    %v3423 = vunpack.c.l.b16 %v560
    %v3424 = vunpack.c.l.b16 %v561
    %v3425 = vunpack.c.l.b16 %v562
    %v3426 = vunpack.c.l.b16 %v563
    %v3427 = vunpack.c.l.b16 %v564
    %v3428 = vunpack.c.l.b16 %v565
    %v3429 = vunpack.c.l.b16 %v566
    %v3430 = vunpack.c.l.b16 %v567
    %v3431 = vunpack.c.l.b16 %v568
    %v3432 = vunpack.c.l.b16 %v569
    %v3433 = vunpack.c.l.b16 %v570
    %v3434 = vunpack.c.l.b16 %v571
    %v3435 = vunpack.c.l.b16 %v572
    %v3436 = vunpack.c.l.b16 %v573
    %v3437 = vunpack.c.l.b16 %v574
    %v3438 = vunpack.c.l.b16 %v575
    %v3439 = vunpack.c.l.b16 %v576
    %v3440 = vunpack.c.l.b16 %v577
    %v3441 = vunpack.c.l.b16 %v578
    %v3442 = vunpack.c.l.b16 %v579
    %v3443 = vunpack.c.l.b16 %v580
    %v3444 = vunpack.c.l.b16 %v581
    %v3445 = vunpack.c.l.b16 %v582
    %v3446 = vunpack.c.l.b16 %v583
    %v3447 = vunpack.c.l.b16 %v584
    %v3448 = vunpack.c.l.b16 %v585
    %v3449 = vunpack.c.l.b16 %v586
    %v3450 = vunpack.c.l.b16 %v587
    %v3451 = vunpack.c.l.b16 %v588
    %v3452 = vunpack.c.l.b16 %v589
    %v3453 = vunpack.c.l.b16 %v590
    %v3454 = vunpack.c.l.b16 %v591
    %v3455 = vunpack.c.l.b16 %v592
    %v3456 = vunpack.c.l.b16 %v593
    %v3457 = vunpack.c.l.b16 %v594
    %v3458 = vunpack.c.l.b16 %v595
    %v3459 = vunpack.c.l.b16 %v596
    %v3460 = vunpack.c.l.b16 %v597
    %v3461 = vunpack.c.l.b16 %v598
    %v3462 = vunpack.c.l.b16 %v599
    %v3463 = vunpack.c.l.b16 %v600
    %v3464 = vunpack.c.l.b16 %v601
    %v3465 = vunpack.c.l.b16 %v602
    %v3466 = vunpack.c.l.b16 %v603
    %v3467 = vunpack.c.l.b16 %v604
    %v3468 = vunpack.c.l.b16 %v605
    %v3469 = vunpack.c.l.b16 %v606
    %v3470 = vunpack.c.l.b16 %v607
    %v3471 = vunpack.c.l.b16 %v608
    %v3472 = vunpack.c.l.b16 %v609
    %v3473 = vunpack.c.l.b16 %v610
    %v3474 = vunpack.c.l.b16 %v611
    %v3475 = vunpack.c.l.b16 %v612
    %v3476 = vunpack.c.l.b16 %v613
    %v3477 = vunpack.c.l.b16 %v614
    %v3478 = vunpack.c.l.b16 %v615
    %v3479 = vunpack.c.l.b16 %v616
    %v3480 = vunpack.c.l.b16 %v617
    %v3481 = vunpack.c.l.b16 %v618
    %v3482 = vunpack.c.l.b16 %v619
    %v3483 = vunpack.c.l.b16 %v620
    %v3484 = vunpack.c.l.b16 %v621
    %v3485 = vunpack.c.l.b16 %v622
    %v3486 = vunpack.c.l.b16 %v623
    %v3487 = vunpack.c.l.b16 %v624
    %v3488 = vunpack.c.l.b16 %v625
    %v3489 = vunpack.c.l.b16 %v626
    %v3490 = vunpack.c.l.b16 %v627
    %v3491 = vunpack.c.l.b16 %v628
    %v3492 = vunpack.c.l.b16 %v629
    %v3493 = vunpack.c.l.b16 %v630
    %v3494 = vunpack.c.l.b16 %v631
    %v3495 = vunpack.c.l.b16 %v632
    %v3496 = vunpack.c.l.b16 %v633
    %v3497 = vunpack.c.l.b16 %v634
    %v3498 = vunpack.c.l.b16 %v635
    %v3499 = vunpack.c.l.b16 %v636
    %v3500 = vunpack.c.l.b16 %v637
    %v3501 = vunpack.c.l.b16 %v638
    %v3502 = vunpack.c.l.b16 %v639
    %v3503 = vunpack.c.l.b16 %v640
    %v3504 = vunpack.c.l.b16 %v641
    %v3505 = vunpack.c.l.b16 %v642
    %v3506 = vunpack.c.l.b16 %v643
    %v3507 = vunpack.c.l.b16 %v644
    %v3508 = vunpack.c.l.b16 %v645
    %v3509 = vunpack.c.l.b16 %v646
    %v3510 = vunpack.c.l.b16 %v647
    %v3511 = vunpack.c.l.b16 %v648
    %v3512 = vunpack.c.l.b16 %v649
    %v3513 = vunpack.c.l.b16 %v650
    %v3514 = vunpack.c.l.b16 %v651
    %v3515 = vunpack.c.l.b16 %v652
    %v3516 = vunpack.c.l.b16 %v653
    %v3517 = vunpack.c.l.b16 %v654
    %v3518 = vunpack.c.l.b16 %v655
    %v3519 = vunpack.c.l.b16 %v656
    %v3520 = vunpack.c.l.b16 %v657
    %v3521 = vunpack.c.l.b16 %v658
    %v3522 = vunpack.c.l.b16 %v659
    %v3523 = vunpack.c.l.b16 %v660
    %v3524 = vunpack.c.l.b16 %v661
    %v3525 = vunpack.c.l.b16 %v662
    %v3526 = vunpack.c.l.b16 %v663
    %v3527 = vunpack.c.l.b16 %v664
    %v3528 = vunpack.c.l.b16 %v665
    %v3529 = vunpack.c.l.b16 %v666
    %v3530 = vunpack.c.l.b16 %v667
    %v3531 = vunpack.c.l.b16 %v668
    %v3532 = vunpack.c.l.b16 %v669
    %v3533 = vunpack.c.l.b16 %v670
    %v3534 = vunpack.c.l.b16 %v671
    %v3535 = vunpack.c.l.b16 %v672
    %v3536 = vunpack.c.l.b16 %v673
    %v3537 = vunpack.c.l.b16 %v674
    %v3538 = vunpack.c.l.b16 %v675
    %v3539 = vunpack.c.l.b16 %v676
    %v3540 = vunpack.c.l.b16 %v677
    %v3541 = vunpack.c.l.b16 %v678
    %v3542 = vunpack.c.l.b16 %v679
    %v3543 = vunpack.c.l.b16 %v680
    %v3544 = vunpack.c.l.b16 %v681
    %v3545 = vunpack.c.l.b16 %v682
    %v3546 = vunpack.c.l.b16 %v683
    %v3547 = vunpack.c.l.b16 %v684
    %v3548 = vunpack.c.l.b16 %v685
    %v3549 = vunpack.c.l.b16 %v686
    %v3550 = vunpack.c.l.b16 %v687
    %v3551 = vunpack.c.l.b16 %v688
    %v3552 = vunpack.c.l.b16 %v689
    %v3553 = vunpack.c.l.b16 %v690
    %v3554 = vunpack.c.l.b16 %v691
    %v3555 = vunpack.c.l.b16 %v692
    %v3556 = vunpack.c.l.b16 %v693
    %v3557 = vunpack.c.l.b16 %v694
    %v3558 = vunpack.c.l.b16 %v695
    %v3559 = vunpack.c.l.b16 %v696
    %v3560 = vunpack.c.l.b16 %v697
    %v3561 = vunpack.c.l.b16 %v698
    %v3562 = vunpack.c.l.b16 %v699
    %v3563 = vunpack.c.l.b16 %v700
    %v3564 = vunpack.c.l.b16 %v701
    %v3565 = vunpack.c.l.b16 %v702
    %v3566 = vunpack.c.l.b16 %v703
    %v3567 = vunpack.c.l.b16 %v704
    %v3568 = vunpack.c.l.b16 %v705
    %v3569 = vunpack.c.l.b16 %v706
    %v3570 = vunpack.c.l.b16 %v707
    %v3571 = vunpack.c.l.b16 %v708
    %v3572 = vunpack.c.l.b16 %v709
    %v3573 = vunpack.c.l.b16 %v710
    %v3574 = vunpack.c.l.b16 %v711
    %v3575 = vunpack.c.l.b16 %v712
    %v3576 = vunpack.c.l.b16 %v713
    %v3577 = vunpack.c.l.b16 %v714
    %v3578 = vunpack.c.l.b16 %v715
    %v3579 = vunpack.c.l.b16 %v716
    %v3580 = vunpack.c.l.b16 %v717
    %v3581 = vunpack.c.l.b16 %v718
    %v3582 = vunpack.c.l.b16 %v719
    %v3583 = vunpack.c.l.b16 %v720
    %v3584 = vunpack.c.l.b16 %v721
    %v3585 = vunpack.c.l.b16 %v722
    %v3586 = vunpack.c.l.b16 %v723
    %v3587 = vunpack.c.l.b16 %v724
    %v3588 = vunpack.c.l.b16 %v725
    %v3589 = vunpack.c.l.b16 %v726
    %v3590 = vunpack.c.l.b16 %v727
    %v3591 = vunpack.c.l.b16 %v728
    %v3592 = vunpack.c.l.b16 %v729
    %v3593 = vunpack.c.l.b16 %v730
    %v3594 = vunpack.c.l.b16 %v731
    %v3595 = vunpack.c.l.b16 %v732
    %v3596 = vunpack.c.l.b16 %v733
    %v3597 = vunpack.c.l.b16 %v734
    %v3598 = vunpack.c.l.b16 %v735
    %v3599 = vunpack.c.l.b16 %v736
    %v3600 = vunpack.c.l.b16 %v737
    %v3601 = vunpack.c.l.b16 %v738
    %v3602 = vunpack.c.l.b16 %v739
    %v3603 = vunpack.c.l.b16 %v740
    %v3604 = vunpack.c.l.b16 %v741
    %v3605 = vunpack.c.l.b16 %v742
    %v3606 = vunpack.c.l.b16 %v743
    %v3607 = vunpack.c.l.b16 %v744
    %v3608 = vunpack.c.l.b16 %v745
    %v3609 = vunpack.c.l.b16 %v746
    %v3610 = vunpack.c.l.b16 %v747
    %v3611 = vunpack.c.l.b16 %v748
    %v3612 = vunpack.c.l.b16 %v749
    %v3613 = vunpack.c.l.b16 %v750
    %v3614 = vunpack.c.l.b16 %v751
    %v3615 = vunpack.c.l.b16 %v752
    %v3616 = vunpack.c.l.b16 %v753
    %v3617 = vunpack.c.l.b16 %v754
    %v3618 = vunpack.c.l.b16 %v755
    %v3619 = vunpack.c.l.b16 %v756
    %v3620 = vunpack.c.l.b16 %v757
    %v3621 = vunpack.c.l.b16 %v758
    %v3622 = vunpack.c.l.b16 %v759
    %v3623 = vunpack.c.l.b16 %v760
    %v3624 = vunpack.c.l.b16 %v761
    %v3625 = vunpack.c.l.b16 %v762
    %v3626 = vunpack.c.l.b16 %v763
    %v3627 = vunpack.c.l.b16 %v764
    %v3628 = vunpack.c.l.b16 %v765
    %v3629 = vunpack.c.l.b16 %v766
    %v3630 = vunpack.c.l.b16 %v767
    %v3631 = vunpack.c.l.b16 %v768
    %v3632 = vunpack.c.l.b16 %v769
    %v3633 = vunpack.c.l.b16 %v770
    %v3634 = vunpack.c.l.b16 %v771
    %v3635 = vunpack.c.l.b16 %v772
    %v3636 = vunpack.c.l.b16 %v773
    %v3637 = vunpack.c.l.b16 %v774
    %v3638 = vunpack.c.l.b16 %v775
    %v3639 = vunpack.c.l.b16 %v776
    %v3640 = vunpack.c.l.b16 %v777
    %v3641 = vunpack.c.l.b16 %v778
    %v3642 = vunpack.c.l.b16 %v779
    %v3643 = vunpack.c.l.b16 %v780
    %v3644 = vunpack.c.l.b16 %v781
    %v3645 = vunpack.c.l.b16 %v782
    %v3646 = vunpack.c.l.b16 %v783
    %v3647 = vunpack.c.l.b16 %v784
    %v3648 = vunpack.c.l.b16 %v785
    %v3649 = vunpack.c.l.b16 %v786
    %v3650 = vunpack.c.l.b16 %v787
    %v3651 = vunpack.c.l.b16 %v788
    %v3652 = vunpack.c.l.b16 %v789
    %v3653 = vunpack.c.l.b16 %v790
    %v3654 = vunpack.c.l.b16 %v791
    %v3655 = vunpack.c.l.b16 %v792
    %v3656 = vunpack.c.l.b16 %v793
    %v3657 = vunpack.c.l.b16 %v794
    %v3658 = vunpack.c.l.b16 %v795
    %v3659 = vunpack.c.l.b16 %v796
    %v3660 = vunpack.c.l.b16 %v797
    %v3661 = vunpack.c.l.b16 %v798
    %v3662 = vunpack.c.l.b16 %v799
    %v3663 = vunpack.c.l.b16 %v800
    %v3664 = vunpack.c.l.b16 %v801
    %v3665 = vunpack.c.l.b16 %v802
    %v3666 = vunpack.c.l.b16 %v803
    %v3667 = vunpack.c.l.b16 %v804
    %v3668 = vunpack.c.l.b16 %v805
    %v3669 = vunpack.c.l.b16 %v806
    %v3670 = vunpack.c.l.b16 %v807
    %v3671 = vunpack.c.l.b16 %v808
    %v3672 = vunpack.c.l.b16 %v809
    %v3673 = vunpack.c.l.b16 %v810
    %v3674 = vunpack.c.l.b16 %v811
    %v3675 = vunpack.c.l.b16 %v812
    %v3676 = vunpack.c.l.b16 %v813
    %v3677 = vunpack.c.l.b16 %v814
    %v3678 = vunpack.c.l.b16 %v815
    %v3679 = vunpack.c.l.b16 %v816
    %v3680 = vunpack.c.l.b16 %v817
    %v3681 = vunpack.c.l.b16 %v818
    %v3682 = vunpack.c.l.b16 %v819
    %v3683 = vunpack.c.l.b16 %v820
    %v3684 = vunpack.c.l.b16 %v821
    %v3685 = vunpack.c.l.b16 %v822
    %v3686 = vunpack.c.l.b16 %v823
    %v3687 = vunpack.c.l.b16 %v824
    %v3688 = vunpack.c.l.b16 %v825
    %v3689 = vunpack.c.l.b16 %v826
    %v3690 = vunpack.c.l.b16 %v827
    %v3691 = vunpack.c.l.b16 %v828
    %v3692 = vunpack.c.l.b16 %v829
    %v3693 = vunpack.c.l.b16 %v830
    %v3694 = vunpack.c.l.b16 %v831
    %v3695 = vunpack.c.l.b16 %v832
    %v3696 = vunpack.c.l.b16 %v833
    %v3697 = vunpack.c.l.b16 %v834
    %v3698 = vunpack.c.l.b16 %v835
    %v3699 = vunpack.c.l.b16 %v836
    %v3700 = vunpack.c.l.b16 %v837
    %v3701 = vunpack.c.l.b16 %v838
    %v3702 = vunpack.c.l.b16 %v839
    %v3703 = vunpack.c.l.b16 %v840
    %v3704 = vunpack.c.l.b16 %v841
    %v3705 = vunpack.c.l.b16 %v842
    %v3706 = vunpack.c.l.b16 %v843
    %v3707 = vunpack.c.l.b16 %v844
    %v3708 = vunpack.c.l.b16 %v845
    %v3709 = vunpack.c.l.b16 %v846
    %v3710 = vunpack.c.l.b16 %v847
    %v3711 = vunpack.c.l.b16 %v848
    %v3712 = vunpack.c.l.b16 %v849
    %v3713 = vunpack.c.l.b16 %v850
    %v3714 = vunpack.c.l.b16 %v851
    %v3715 = vunpack.c.l.b16 %v852
    %v3716 = vunpack.c.l.b16 %v853
    %v3717 = vunpack.c.l.b16 %v854
    %v3718 = vunpack.c.l.b16 %v855
    %v3719 = vunpack.c.l.b16 %v856
    %v3720 = vunpack.c.l.b16 %v857
    %v3721 = vunpack.c.l.b16 %v858
    %v3722 = vunpack.c.l.b16 %v859
    %v3723 = vunpack.c.l.b16 %v860
    %v3724 = vunpack.c.l.b16 %v861
    %v3725 = vunpack.c.l.b16 %v862
    %v3726 = vunpack.c.l.b16 %v863
    %v3727 = vunpack.c.l.b16 %v864
    %v3728 = vunpack.c.l.b16 %v865
    %v3729 = vunpack.c.l.b16 %v866
    %v3730 = vunpack.c.l.b16 %v867
    %v3731 = vunpack.c.l.b16 %v868
    %v3732 = vunpack.c.l.b16 %v869
    %v3733 = vunpack.c.l.b16 %v870
    %v3734 = vunpack.c.l.b16 %v871
    %v3735 = vunpack.c.l.b16 %v872
    %v3736 = vunpack.c.l.b16 %v873
    %v3737 = vunpack.c.l.b16 %v874
    %v3738 = vunpack.c.l.b16 %v875
    %v3739 = vunpack.c.l.b16 %v876
    %v3740 = vunpack.c.l.b16 %v877
    %v3741 = vunpack.c.l.b16 %v878
    %v3742 = vunpack.c.l.b16 %v879
    %v3743 = vunpack.c.l.b16 %v880
    %v3744 = vunpack.c.l.b16 %v881
    %v3745 = vunpack.c.l.b16 %v882
    %v3746 = vunpack.c.l.b16 %v883
    %v3747 = vunpack.c.l.b16 %v884
    %v3748 = vunpack.c.l.b16 %v885
    %v3749 = vunpack.c.l.b16 %v886
    %v3750 = vunpack.c.l.b16 %v887
    %v3751 = vunpack.c.l.b16 %v888
    %v3752 = vunpack.c.l.b16 %v889
    %v3753 = vunpack.c.l.b16 %v890
    %v3754 = vunpack.c.l.b16 %v891
    %v3755 = vunpack.c.l.b16 %v892
    %v3756 = vunpack.c.l.b16 %v893
    %v3757 = vunpack.c.l.b16 %v894
    %v3758 = vunpack.c.l.b16 %v895
    %v3759 = vunpack.c.l.b16 %v896
    %v3760 = vunpack.c.l.b16 %v897
    %v3761 = vunpack.c.l.b16 %v898
    %v3762 = vunpack.c.l.b16 %v899
    %v3763 = vunpack.c.l.b16 %v900
    %v3764 = vunpack.c.l.b16 %v901
    %v3765 = vunpack.c.l.b16 %v902
    %v3766 = vunpack.c.l.b16 %v903
    %v3767 = vunpack.c.l.b16 %v904
    %v3768 = vunpack.c.l.b16 %v905
    %v3769 = vunpack.c.l.b16 %v906
    %v3770 = vunpack.c.l.b16 %v907
    %v3771 = vunpack.c.l.b16 %v908
    %v3772 = vunpack.c.l.b16 %v909
    %v3773 = vunpack.c.l.b16 %v910
    %v3774 = vunpack.c.l.b16 %v911
    %v3775 = vunpack.c.l.b16 %v912
    %v3776 = vunpack.c.l.b16 %v913
    %v3777 = vunpack.c.l.b16 %v914
    %v3778 = vunpack.c.l.b16 %v915
    %v3779 = vunpack.c.l.b16 %v916
    %v3780 = vunpack.c.l.b16 %v917
    %v3781 = vunpack.c.l.b16 %v918
    %v3782 = vunpack.c.l.b16 %v919
    %v3783 = vunpack.c.l.b16 %v920
    %v3784 = vunpack.c.l.b16 %v921
    %v3785 = vunpack.c.l.b16 %v922
    %v3786 = vunpack.c.l.b16 %v923
    %v3787 = vunpack.c.l.b16 %v924
    %v3788 = vunpack.c.l.b16 %v925
    %v3789 = vunpack.c.l.b16 %v926
    %v3790 = vunpack.c.l.b16 %v927
    %v3791 = vunpack.c.l.b16 %v928
    %v3792 = vunpack.c.l.b16 %v929
    %v3793 = vunpack.c.l.b16 %v930
    %v3794 = vunpack.c.l.b16 %v931
    %v3795 = vunpack.c.l.b16 %v932
    %v3796 = vunpack.c.l.b16 %v933
    %v3797 = vunpack.c.l.b16 %v934
    %v3798 = vunpack.c.l.b16 %v935
    %v3799 = vunpack.c.l.b16 %v936
    %v3800 = vunpack.c.l.b16 %v937
    %v3801 = vunpack.c.l.b16 %v938
    %v3802 = vunpack.c.l.b16 %v939
    %v3803 = vunpack.c.l.b16 %v940
    %v3804 = vunpack.c.l.b16 %v941
    %v3805 = vunpack.c.l.b16 %v942
    %v3806 = vunpack.c.l.b16 %v943
    %v3807 = vunpack.c.l.b16 %v944
    %v3808 = vunpack.c.l.b16 %v945
    %v3809 = vunpack.c.l.b16 %v946
    %v3810 = vunpack.c.l.b16 %v947
    %v3811 = vunpack.c.l.b16 %v948
    %v3812 = vunpack.c.l.b16 %v949
    %v3813 = vunpack.c.l.b16 %v950
    %v3814 = vunpack.c.l.b16 %v951
    %v3815 = vunpack.c.l.b16 %v952
    %v3816 = vunpack.c.l.b16 %v953
    %v3817 = vunpack.c.l.b16 %v954
    %v3818 = vunpack.c.l.b16 %v955
    %v3819 = vunpack.c.l.b16 %v956
    %v3820 = vunpack.c.l.b16 %v957
    %v3821 = vunpack.c.l.b16 %v958
    %v3822 = vunpack.c.l.b16 %v959
    %v3823 = vunpack.c.l.b16 %v960
    %v3824 = vunpack.c.l.b16 %v961
    %v3825 = vunpack.c.l.b16 %v962
    %v3826 = vunpack.c.l.b16 %v963
    %v3827 = vunpack.c.l.b16 %v964
    %v3828 = vunpack.c.l.b16 %v965
    %v3829 = vunpack.c.l.b16 %v966
    %v3830 = vunpack.c.l.b16 %v967
    %v3831 = vunpack.c.l.b16 %v968
    %v3832 = vunpack.c.l.b16 %v969
    %v3833 = vunpack.c.l.b16 %v970
    %v3834 = vunpack.c.l.b16 %v971
    %v3835 = vunpack.c.l.b16 %v972
    %v3836 = vunpack.c.l.b16 %v973
    %v3837 = vunpack.c.l.b16 %v974
    %v3838 = vunpack.c.l.b16 %v975
    %v3839 = vunpack.c.l.b16 %v976
    %v3840 = vunpack.c.l.b16 %v977
    %v3841 = vunpack.c.l.b16 %v978
    %v3842 = vunpack.c.l.b16 %v979
    %v3843 = vpack.c.b16 %v2948, %v2947
    %v3844 = vpack.c.b16 %v2950, %v2949
    %v3845 = vpack.c.b16 %v2952, %v2951
    %v3846 = vpack.c.b16 %v2954, %v2953
    %v3847 = vpack.c.b16 %v2956, %v2955
    %v3848 = vpack.c.b16 %v2958, %v2957
    %v3849 = vpack.c.b16 %v2960, %v2959
    %v3850 = vpack.c.b16 %v2962, %v2961
    %v3851 = vpack.c.b16 %v2964, %v2963
    %v3852 = vpack.c.b16 %v2966, %v2965
    %v3853 = vpack.c.b16 %v2968, %v2967
    %v3854 = vpack.c.b16 %v2970, %v2969
    %v3855 = vpack.c.b16 %v2972, %v2971
    %v3856 = vpack.c.b16 %v2974, %v2973
    %v3857 = vpack.c.b16 %v2976, %v2975
    %v3858 = vpack.c.b16 %v2978, %v2977
    %v3859 = vpack.c.b16 %v2980, %v2979
    %v3860 = vpack.c.b16 %v2982, %v2981
    %v3861 = vpack.c.b16 %v2984, %v2983
    %v3862 = vpack.c.b16 %v2986, %v2985
    %v3863 = vpack.c.b16 %v2988, %v2987
    %v3864 = vpack.c.b16 %v2990, %v2989
    %v3865 = vpack.c.b16 %v2992, %v2991
    %v3866 = vpack.c.b16 %v2994, %v2993
    %v3867 = vpack.c.b16 %v2996, %v2995
    %v3868 = vpack.c.b16 %v2998, %v2997
    %v3869 = vpack.c.b16 %v3000, %v2999
    %v3870 = vpack.c.b16 %v3002, %v3001
    %v3871 = vpack.c.b16 %v3004, %v3003
    %v3872 = vpack.c.b16 %v3006, %v3005
    %v3873 = vpack.c.b16 %v3008, %v3007
    %v3874 = vpack.c.b16 %v3010, %v3009
    %v3875 = vpack.c.b16 %v3012, %v3011
    %v3876 = vpack.c.b16 %v3014, %v3013
    %v3877 = vpack.c.b16 %v3016, %v3015
    %v3878 = vpack.c.b16 %v3018, %v3017
    %v3879 = vpack.c.b16 %v3020, %v3019
    %v3880 = vpack.c.b16 %v3022, %v3021
    %v3881 = vpack.c.b16 %v3024, %v3023
    %v3882 = vpack.c.b16 %v3026, %v3025
    %v3883 = vpack.c.b16 %v3028, %v3027
    %v3884 = vpack.c.b16 %v3030, %v3029
    %v3885 = vpack.c.b16 %v3032, %v3031
    %v3886 = vpack.c.b16 %v3034, %v3033
    %v3887 = vpack.c.b16 %v3036, %v3035
    %v3888 = vpack.c.b16 %v3038, %v3037
    %v3889 = vpack.c.b16 %v3040, %v3039
    %v3890 = vpack.c.b16 %v3042, %v3041
    %v3891 = vpack.c.b16 %v3044, %v3043
    %v3892 = vpack.c.b16 %v3046, %v3045
    %v3893 = vpack.c.b16 %v3048, %v3047
    %v3894 = vpack.c.b16 %v3050, %v3049
    %v3895 = vpack.c.b16 %v3052, %v3051
    %v3896 = vpack.c.b16 %v3054, %v3053
    %v3897 = vpack.c.b16 %v3056, %v3055
    %v3898 = vpack.c.b16 %v3058, %v3057
    %v3899 = vpack.c.b16 %v3060, %v3059
    %v3900 = vpack.c.b16 %v3062, %v3061
    %v3901 = vpack.c.b16 %v3064, %v3063
    %v3902 = vpack.c.b16 %v3066, %v3065
    %v3903 = vpack.c.b16 %v3068, %v3067
    %v3904 = vpack.c.b16 %v3070, %v3069
    %v3905 = vpack.c.b16 %v3072, %v3071
    %v3906 = vpack.c.b16 %v3074, %v3073
    %v3907 = vpack.c.b16 %v3076, %v3075
    %v3908 = vpack.c.b16 %v3078, %v3077
    %v3909 = vpack.c.b16 %v3080, %v3079
    %v3910 = vpack.c.b16 %v3082, %v3081
    %v3911 = vpack.c.b16 %v3084, %v3083
    %v3912 = vpack.c.b16 %v3086, %v3085
    %v3913 = vpack.c.b16 %v3088, %v3087
    %v3914 = vpack.c.b16 %v3090, %v3089
    %v3915 = vpack.c.b16 %v3092, %v3091
    %v3916 = vpack.c.b16 %v3094, %v3093
    %v3917 = vpack.c.b16 %v3096, %v3095
    %v3918 = vpack.c.b16 %v3098, %v3097
    %v3919 = vpack.c.b16 %v3100, %v3099
    %v3920 = vpack.c.b16 %v3102, %v3101
    %v3921 = vpack.c.b16 %v3104, %v3103
    %v3922 = vpack.c.b16 %v3106, %v3105
    %v3923 = vpack.c.b16 %v3108, %v3107
    %v3924 = vpack.c.b16 %v3110, %v3109
    %v3925 = vpack.c.b16 %v3112, %v3111
    %v3926 = vpack.c.b16 %v3114, %v3113
    %v3927 = vpack.c.b16 %v3116, %v3115
    %v3928 = vpack.c.b16 %v3118, %v3117
    %v3929 = vpack.c.b16 %v3120, %v3119
    %v3930 = vpack.c.b16 %v3122, %v3121
    %v3931 = vpack.c.b16 %v3124, %v3123
    %v3932 = vpack.c.b16 %v3126, %v3125
    %v3933 = vpack.c.b16 %v3128, %v3127
    %v3934 = vpack.c.b16 %v3130, %v3129
    %v3935 = vpack.c.b16 %v3132, %v3131
    %v3936 = vpack.c.b16 %v3134, %v3133
    %v3937 = vpack.c.b16 %v3136, %v3135
    %v3938 = vpack.c.b16 %v3138, %v3137
    %v3939 = vpack.c.b16 %v3140, %v3139
    %v3940 = vpack.c.b16 %v3142, %v3141
    %v3941 = vpack.c.b16 %v3144, %v3143
    %v3942 = vpack.c.b16 %v3146, %v3145
    %v3943 = vpack.c.b16 %v3148, %v3147
    %v3944 = vpack.c.b16 %v3150, %v3149
    %v3945 = vpack.c.b16 %v3152, %v3151
    %v3946 = vpack.c.b16 %v3154, %v3153
    %v3947 = vpack.c.b16 %v3156, %v3155
    %v3948 = vpack.c.b16 %v3158, %v3157
    %v3949 = vpack.c.b16 %v3160, %v3159
    %v3950 = vpack.c.b16 %v3162, %v3161
    %v3951 = vpack.c.b16 %v3164, %v3163
    %v3952 = vpack.c.b16 %v3166, %v3165
    %v3953 = vpack.c.b16 %v3168, %v3167
    %v3954 = vpack.c.b16 %v3170, %v3169
    %v3955 = vpack.c.b16 %v3172, %v3171
    %v3956 = vpack.c.b16 %v3174, %v3173
    %v3957 = vpack.c.b16 %v3176, %v3175
    %v3958 = vpack.c.b16 %v3178, %v3177
    %v3959 = vpack.c.b16 %v3180, %v3179
    %v3960 = vpack.c.b16 %v3182, %v3181
    %v3961 = vpack.c.b16 %v3184, %v3183
    %v3962 = vpack.c.b16 %v3186, %v3185
    %v3963 = vpack.c.b16 %v3188, %v3187
    %v3964 = vpack.c.b16 %v3190, %v3189
    %v3965 = vpack.c.b16 %v3192, %v3191
    %v3966 = vpack.c.b16 %v3194, %v3193
    %v3967 = vpack.c.b16 %v3196, %v3195
    %v3968 = vpack.c.b16 %v3198, %v3197
    %v3969 = vpack.c.b16 %v3200, %v3199
    %v3970 = vpack.c.b16 %v3202, %v3201
    %v3971 = vpack.c.b16 %v3204, %v3203
    %v3972 = vpack.c.b16 %v3206, %v3205
    %v3973 = vpack.c.b16 %v3208, %v3207
    %v3974 = vpack.c.b16 %v3210, %v3209
    %v3975 = vpack.c.b16 %v3212, %v3211
    %v3976 = vpack.c.b16 %v3214, %v3213
    %v3977 = vpack.c.b16 %v3216, %v3215
    %v3978 = vpack.c.b16 %v3218, %v3217
    %v3979 = vpack.c.b16 %v3220, %v3219
    %v3980 = vpack.c.b16 %v3222, %v3221
    %v3981 = vpack.c.b16 %v3224, %v3223
    %v3982 = vpack.c.b16 %v3226, %v3225
    %v3983 = vpack.c.b16 %v3228, %v3227
    %v3984 = vpack.c.b16 %v3230, %v3229
    %v3985 = vpack.c.b16 %v3232, %v3231
    %v3986 = vpack.c.b16 %v3234, %v3233
    %v3987 = vpack.c.b16 %v3236, %v3235
    %v3988 = vpack.c.b16 %v3238, %v3237
    %v3989 = vpack.c.b16 %v3240, %v3239
    %v3990 = vpack.c.b16 %v3242, %v3241
    %v3991 = vpack.c.b16 %v3244, %v3243
    %v3992 = vpack.c.b16 %v3246, %v3245
    %v3993 = vpack.c.b16 %v3248, %v3247
    %v3994 = vpack.c.b16 %v3250, %v3249
    %v3995 = vpack.c.b16 %v3252, %v3251
    %v3996 = vpack.c.b16 %v3254, %v3253
    %v3997 = vpack.c.b16 %v3256, %v3255
    %v3998 = vpack.c.b16 %v3258, %v3257
    %v3999 = vpack.c.b16 %v3260, %v3259
    %v4000 = vpack.c.b16 %v3262, %v3261
    %v4001 = vpack.c.b16 %v3264, %v3263
    %v4002 = vpack.c.b16 %v3266, %v3265
    %v4003 = vpack.c.b16 %v3268, %v3267
    %v4004 = vpack.c.b16 %v3270, %v3269
    %v4005 = vpack.c.b16 %v3272, %v3271
    %v4006 = vpack.c.b16 %v3274, %v3273
    %v4007 = vpack.c.b16 %v3276, %v3275
    %v4008 = vpack.c.b16 %v3278, %v3277
    %v4009 = vpack.c.b16 %v3280, %v3279
    %v4010 = vpack.c.b16 %v3282, %v3281
    %v4011 = vpack.c.b16 %v3284, %v3283
    %v4012 = vpack.c.b16 %v3286, %v3285
    %v4013 = vpack.c.b16 %v3288, %v3287
    %v4014 = vpack.c.b16 %v3290, %v3289
    %v4015 = vpack.c.b16 %v3292, %v3291
    %v4016 = vpack.c.b16 %v3294, %v3293
    %v4017 = vpack.c.b16 %v3296, %v3295
    %v4018 = vpack.c.b16 %v3298, %v3297
    %v4019 = vpack.c.b16 %v3300, %v3299
    %v4020 = vpack.c.b16 %v3302, %v3301
    %v4021 = vpack.c.b16 %v3304, %v3303
    %v4022 = vpack.c.b16 %v3306, %v3305
    %v4023 = vpack.c.b16 %v3308, %v3307
    %v4024 = vpack.c.b16 %v3310, %v3309
    %v4025 = vpack.c.b16 %v3312, %v3311
    %v4026 = vpack.c.b16 %v3314, %v3313
    %v4027 = vpack.c.b16 %v3316, %v3315
    %v4028 = vpack.c.b16 %v3318, %v3317
    %v4029 = vpack.c.b16 %v3320, %v3319
    %v4030 = vpack.c.b16 %v3322, %v3321
    %v4031 = vpack.c.b16 %v3324, %v3323
    %v4032 = vpack.c.b16 %v3326, %v3325
    %v4033 = vpack.c.b16 %v3328, %v3327
    %v4034 = vpack.c.b16 %v3330, %v3329
    %v4035 = vpack.c.b16 %v3332, %v3331
    %v4036 = vpack.c.b16 %v3334, %v3333
    %v4037 = vpack.c.b16 %v3336, %v3335
    %v4038 = vpack.c.b16 %v3338, %v3337
    %v4039 = vpack.c.b16 %v3340, %v3339
    %v4040 = vpack.c.b16 %v3342, %v3341
    %v4041 = vpack.c.b16 %v3344, %v3343
    %v4042 = vpack.c.b16 %v3346, %v3345
    %v4043 = vpack.c.b16 %v3348, %v3347
    %v4044 = vpack.c.b16 %v3350, %v3349
    %v4045 = vpack.c.b16 %v3352, %v3351
    %v4046 = vpack.c.b16 %v3354, %v3353
    %v4047 = vpack.c.b16 %v3356, %v3355
    %v4048 = vpack.c.b16 %v3358, %v3357
    %v4049 = vpack.c.b16 %v3360, %v3359
    %v4050 = vpack.c.b16 %v3362, %v3361
    %v4051 = vpack.c.b16 %v3364, %v3363
    %v4052 = vpack.c.b16 %v3366, %v3365
    %v4053 = vpack.c.b16 %v3368, %v3367
    %v4054 = vpack.c.b16 %v3370, %v3369
    %v4055 = vpack.c.b16 %v3372, %v3371
    %v4056 = vpack.c.b16 %v3374, %v3373
    %v4057 = vpack.c.b16 %v3376, %v3375
    %v4058 = vpack.c.b16 %v3378, %v3377
    %v4059 = vpack.c.b16 %v3380, %v3379
    %v4060 = vpack.c.b16 %v3382, %v3381
    %v4061 = vpack.c.b16 %v3384, %v3383
    %v4062 = vpack.c.b16 %v3386, %v3385
    %v4063 = vpack.c.b16 %v3388, %v3387
    %v4064 = vpack.c.b16 %v3390, %v3389
    %v4065 = vpack.c.b16 %v3392, %v3391
    %v4066 = vpack.c.b16 %v3394, %v3393
    %v4067 = vpack.c.b16 %v3396, %v3395
    %v4068 = vpack.c.b16 %v3398, %v3397
    %v4069 = vpack.c.b16 %v3400, %v3399
    %v4070 = vpack.c.b16 %v3402, %v3401
    %v4071 = vpack.c.b16 %v3404, %v3403
    %v4072 = vpack.c.b16 %v3406, %v3405
    %v4073 = vpack.c.b16 %v3408, %v3407
    %v4074 = vpack.c.b16 %v3410, %v3409
    %v4075 = vpack.c.b16 %v3412, %v3411
    %v4076 = vpack.c.b16 %v3414, %v3413
    %v4077 = vpack.c.b16 %v3416, %v3415
    %v4078 = vpack.c.b16 %v3418, %v3417
    %v4079 = vpack.c.b16 %v3420, %v3419
    %v4080 = vpack.c.b16 %v3422, %v3421
    %v4081 = vpack.c.b16 %v3424, %v3423
    %v4082 = vpack.c.b16 %v3426, %v3425
    %v4083 = vpack.c.b16 %v3428, %v3427
    %v4084 = vpack.c.b16 %v3430, %v3429
    %v4085 = vpack.c.b16 %v3432, %v3431
    %v4086 = vpack.c.b16 %v3434, %v3433
    %v4087 = vpack.c.b16 %v3436, %v3435
    %v4088 = vpack.c.b16 %v3438, %v3437
    %v4089 = vpack.c.b16 %v3440, %v3439
    %v4090 = vpack.c.b16 %v3442, %v3441
    %v4091 = vpack.c.b16 %v3444, %v3443
    %v4092 = vpack.c.b16 %v3446, %v3445
    %v4093 = vpack.c.b16 %v3448, %v3447
    %v4094 = vpack.c.b16 %v3450, %v3449
    %v4095 = vpack.c.b16 %v3452, %v3451
    %v4096 = vpack.c.b16 %v3454, %v3453
    %v4097 = vpack.c.b16 %v3456, %v3455
    %v4098 = vpack.c.b16 %v3458, %v3457
    %v4099 = vpack.c.b16 %v3460, %v3459
    %v4100 = vpack.c.b16 %v3462, %v3461
    %v4101 = vpack.c.b16 %v3464, %v3463
    %v4102 = vpack.c.b16 %v3466, %v3465
    %v4103 = vpack.c.b16 %v3468, %v3467
    %v4104 = vpack.c.b16 %v3470, %v3469
    %v4105 = vpack.c.b16 %v3472, %v3471
    %v4106 = vpack.c.b16 %v3474, %v3473
    %v4107 = vpack.c.b16 %v3476, %v3475
    %v4108 = vpack.c.b16 %v3478, %v3477
    %v4109 = vpack.c.b16 %v3480, %v3479
    %v4110 = vpack.c.b16 %v3482, %v3481
    %v4111 = vpack.c.b16 %v3484, %v3483
    %v4112 = vpack.c.b16 %v3486, %v3485
    %v4113 = vpack.c.b16 %v3488, %v3487
    %v4114 = vpack.c.b16 %v3490, %v3489
    %v4115 = vpack.c.b16 %v3492, %v3491
    %v4116 = vpack.c.b16 %v3494, %v3493
    %v4117 = vpack.c.b16 %v3496, %v3495
    %v4118 = vpack.c.b16 %v3498, %v3497
    %v4119 = vpack.c.b16 %v3500, %v3499
    %v4120 = vpack.c.b16 %v3502, %v3501
    %v4121 = vpack.c.b16 %v3504, %v3503
    %v4122 = vpack.c.b16 %v3506, %v3505
    %v4123 = vpack.c.b16 %v3508, %v3507
    %v4124 = vpack.c.b16 %v3510, %v3509
    %v4125 = vpack.c.b16 %v3512, %v3511
    %v4126 = vpack.c.b16 %v3514, %v3513
    %v4127 = vpack.c.b16 %v3516, %v3515
    %v4128 = vpack.c.b16 %v3518, %v3517
    %v4129 = vpack.c.b16 %v3520, %v3519
    %v4130 = vpack.c.b16 %v3522, %v3521
    %v4131 = vpack.c.b16 %v3524, %v3523
    %v4132 = vpack.c.b16 %v3526, %v3525
    %v4133 = vpack.c.b16 %v3528, %v3527
    %v4134 = vpack.c.b16 %v3530, %v3529
    %v4135 = vpack.c.b16 %v3532, %v3531
    %v4136 = vpack.c.b16 %v3534, %v3533
    %v4137 = vpack.c.b16 %v3536, %v3535
    %v4138 = vpack.c.b16 %v3538, %v3537
    %v4139 = vpack.c.b16 %v3540, %v3539
    %v4140 = vpack.c.b16 %v3542, %v3541
    %v4141 = vpack.c.b16 %v3544, %v3543
    %v4142 = vpack.c.b16 %v3546, %v3545
    %v4143 = vpack.c.b16 %v3548, %v3547
    %v4144 = vpack.c.b16 %v3550, %v3549
    %v4145 = vpack.c.b16 %v3552, %v3551
    %v4146 = vpack.c.b16 %v3554, %v3553
    %v4147 = vpack.c.b16 %v3556, %v3555
    %v4148 = vpack.c.b16 %v3558, %v3557
    %v4149 = vpack.c.b16 %v3560, %v3559
    %v4150 = vpack.c.b16 %v3562, %v3561
    %v4151 = vpack.c.b16 %v3564, %v3563
    %v4152 = vpack.c.b16 %v3566, %v3565
    %v4153 = vpack.c.b16 %v3568, %v3567
    %v4154 = vpack.c.b16 %v3570, %v3569
    %v4155 = vpack.c.b16 %v3572, %v3571
    %v4156 = vpack.c.b16 %v3574, %v3573
    %v4157 = vpack.c.b16 %v3576, %v3575
    %v4158 = vpack.c.b16 %v3578, %v3577
    %v4159 = vpack.c.b16 %v3580, %v3579
    %v4160 = vpack.c.b16 %v3582, %v3581
    %v4161 = vpack.c.b16 %v3584, %v3583
    %v4162 = vpack.c.b16 %v3586, %v3585
    %v4163 = vpack.c.b16 %v3588, %v3587
    %v4164 = vpack.c.b16 %v3590, %v3589
    %v4165 = vpack.c.b16 %v3592, %v3591
    %v4166 = vpack.c.b16 %v3594, %v3593
    %v4167 = vpack.c.b16 %v3596, %v3595
    %v4168 = vpack.c.b16 %v3598, %v3597
    %v4169 = vpack.c.b16 %v3600, %v3599
    %v4170 = vpack.c.b16 %v3602, %v3601
    %v4171 = vpack.c.b16 %v3604, %v3603
    %v4172 = vpack.c.b16 %v3606, %v3605
    %v4173 = vpack.c.b16 %v3608, %v3607
    %v4174 = vpack.c.b16 %v3610, %v3609
    %v4175 = vpack.c.b16 %v3612, %v3611
    %v4176 = vpack.c.b16 %v3614, %v3613
    %v4177 = vpack.c.b16 %v3616, %v3615
    %v4178 = vpack.c.b16 %v3618, %v3617
    %v4179 = vpack.c.b16 %v3620, %v3619
    %v4180 = vpack.c.b16 %v3622, %v3621
    %v4181 = vpack.c.b16 %v3624, %v3623
    %v4182 = vpack.c.b16 %v3626, %v3625
    %v4183 = vpack.c.b16 %v3628, %v3627
    %v4184 = vpack.c.b16 %v3630, %v3629
    %v4185 = vpack.c.b16 %v3632, %v3631
    %v4186 = vpack.c.b16 %v3634, %v3633
    %v4187 = vpack.c.b16 %v3636, %v3635
    %v4188 = vpack.c.b16 %v3638, %v3637
    %v4189 = vpack.c.b16 %v3640, %v3639
    %v4190 = vpack.c.b16 %v3642, %v3641
    %v4191 = vpack.c.b16 %v3644, %v3643
    %v4192 = vpack.c.b16 %v3646, %v3645
    %v4193 = vpack.c.b16 %v3648, %v3647
    %v4194 = vpack.c.b16 %v3650, %v3649
    %v4195 = vpack.c.b16 %v3652, %v3651
    %v4196 = vpack.c.b16 %v3654, %v3653
    %v4197 = vpack.c.b16 %v3656, %v3655
    %v4198 = vpack.c.b16 %v3658, %v3657
    %v4199 = vpack.c.b16 %v3660, %v3659
    %v4200 = vpack.c.b16 %v3662, %v3661
    %v4201 = vpack.c.b16 %v3664, %v3663
    %v4202 = vpack.c.b16 %v3666, %v3665
    %v4203 = vpack.c.b16 %v3668, %v3667
    %v4204 = vpack.c.b16 %v3670, %v3669
    %v4205 = vpack.c.b16 %v3672, %v3671
    %v4206 = vpack.c.b16 %v3674, %v3673
    %v4207 = vpack.c.b16 %v3676, %v3675
    %v4208 = vpack.c.b16 %v3678, %v3677
    %v4209 = vpack.c.b16 %v3680, %v3679
    %v4210 = vpack.c.b16 %v3682, %v3681
    %v4211 = vpack.c.b16 %v3684, %v3683
    %v4212 = vpack.c.b16 %v3686, %v3685
    %v4213 = vpack.c.b16 %v3688, %v3687
    %v4214 = vpack.c.b16 %v3690, %v3689
    %v4215 = vpack.c.b16 %v3692, %v3691
    %v4216 = vpack.c.b16 %v3694, %v3693
    %v4217 = vpack.c.b16 %v3696, %v3695
    %v4218 = vpack.c.b16 %v3698, %v3697
    %v4219 = vpack.c.b16 %v3700, %v3699
    %v4220 = vpack.c.b16 %v3702, %v3701
    %v4221 = vpack.c.b16 %v3704, %v3703
    %v4222 = vpack.c.b16 %v3706, %v3705
    %v4223 = vpack.c.b16 %v3708, %v3707
    %v4224 = vpack.c.b16 %v3710, %v3709
    %v4225 = vpack.c.b16 %v3712, %v3711
    %v4226 = vpack.c.b16 %v3714, %v3713
    %v4227 = vpack.c.b16 %v3716, %v3715
    %v4228 = vpack.c.b16 %v3718, %v3717
    %v4229 = vpack.c.b16 %v3720, %v3719
    %v4230 = vpack.c.b16 %v3722, %v3721
    %v4231 = vpack.c.b16 %v3724, %v3723
    %v4232 = vpack.c.b16 %v3726, %v3725
    %v4233 = vpack.c.b16 %v3728, %v3727
    %v4234 = vpack.c.b16 %v3730, %v3729
    %v4235 = vpack.c.b16 %v3732, %v3731
    %v4236 = vpack.c.b16 %v3734, %v3733
    %v4237 = vpack.c.b16 %v3736, %v3735
    %v4238 = vpack.c.b16 %v3738, %v3737
    %v4239 = vpack.c.b16 %v3740, %v3739
    %v4240 = vpack.c.b16 %v3742, %v3741
    %v4241 = vpack.c.b16 %v3744, %v3743
    %v4242 = vpack.c.b16 %v3746, %v3745
    %v4243 = vpack.c.b16 %v3748, %v3747
    %v4244 = vpack.c.b16 %v3750, %v3749
    %v4245 = vpack.c.b16 %v3752, %v3751
    %v4246 = vpack.c.b16 %v3754, %v3753
    %v4247 = vpack.c.b16 %v3756, %v3755
    %v4248 = vpack.c.b16 %v3758, %v3757
    %v4249 = vpack.c.b16 %v3760, %v3759
    %v4250 = vpack.c.b16 %v3762, %v3761
    %v4251 = vpack.c.b16 %v3764, %v3763
    %v4252 = vpack.c.b16 %v3766, %v3765
    %v4253 = vpack.c.b16 %v3768, %v3767
    %v4254 = vpack.c.b16 %v3770, %v3769
    %v4255 = vpack.c.b16 %v3772, %v3771
    %v4256 = vpack.c.b16 %v3774, %v3773
    %v4257 = vpack.c.b16 %v3776, %v3775
    %v4258 = vpack.c.b16 %v3778, %v3777
    %v4259 = vpack.c.b16 %v3780, %v3779
    %v4260 = vpack.c.b16 %v3782, %v3781
    %v4261 = vpack.c.b16 %v3784, %v3783
    %v4262 = vpack.c.b16 %v3786, %v3785
    %v4263 = vpack.c.b16 %v3788, %v3787
    %v4264 = vpack.c.b16 %v3790, %v3789
    %v4265 = vpack.c.b16 %v3792, %v3791
    %v4266 = vpack.c.b16 %v3794, %v3793
    %v4267 = vpack.c.b16 %v3796, %v3795
    %v4268 = vpack.c.b16 %v3798, %v3797
    %v4269 = vpack.c.b16 %v3800, %v3799
    %v4270 = vpack.c.b16 %v3802, %v3801
    %v4271 = vpack.c.b16 %v3804, %v3803
    %v4272 = vpack.c.b16 %v3806, %v3805
    %v4273 = vpack.c.b16 %v3808, %v3807
    %v4274 = vpack.c.b16 %v3810, %v3809
    %v4275 = vpack.c.b16 %v3812, %v3811
    %v4276 = vpack.c.b16 %v3814, %v3813
    %v4277 = vpack.c.b16 %v3816, %v3815
    %v4278 = vpack.c.b16 %v3818, %v3817
    %v4279 = vpack.c.b16 %v3820, %v3819
    %v4280 = vpack.c.b16 %v3822, %v3821
    %v4281 = vpack.c.b16 %v3824, %v3823
    %v4282 = vpack.c.b16 %v3826, %v3825
    %v4283 = vpack.c.b16 %v3828, %v3827
    %v4284 = vpack.c.b16 %v3830, %v3829
    %v4285 = vpack.c.b16 %v3832, %v3831
    %v4286 = vpack.c.b16 %v3834, %v3833
    %v4287 = vpack.c.b16 %v3836, %v3835
    %v4288 = vpack.c.b16 %v3838, %v3837
    %v4289 = vpack.c.b16 %v3840, %v3839
    %v4290 = vpack.c.b16 %v3842, %v3841
    %4739 = vmatprep.subr.bf16.mxu0 0
    %4740 = vmatpush1.bf16.msra.mxu0 %v3843
    %4741 = vmatprep.subr.bf16.mxu0 0
    %4742 = vmatpush1.bf16.msra.mxu0 %v3844
    %4743 = vmatprep.subr.bf16.mxu0 0
    %4744 = vmatpush1.bf16.msra.mxu0 %v3845
    %4745 = vmatprep.subr.bf16.mxu0 0
    %4746 = vmatpush1.bf16.msra.mxu0 %v3846
    %4747 = vmatprep.subr.bf16.mxu0 0
    %4748 = vmatpush1.bf16.msra.mxu0 %v3847
    %4749 = vmatprep.subr.bf16.mxu0 0
    %4750 = vmatpush1.bf16.msra.mxu0 %v3848
    %4751 = vmatprep.subr.bf16.mxu0 0
    %4752 = vmatpush1.bf16.msra.mxu0 %v3849
    %4753 = vmatprep.subr.bf16.mxu0 0
    %4754 = vmatpush1.bf16.msra.mxu0 %v3850
    %4755 = vmatprep.subr.bf16.mxu0 0
    %4756 = vmatpush1.bf16.msra.mxu0 %v3851
    %4757 = vmatprep.subr.bf16.mxu0 0
    %4758 = vmatpush1.bf16.msra.mxu0 %v3852
    %4759 = vmatprep.subr.bf16.mxu0 0
    %4760 = vmatpush1.bf16.msra.mxu0 %v3853
    %4761 = vmatprep.subr.bf16.mxu0 0
    %4762 = vmatpush1.bf16.msra.mxu0 %v3854
    %4763 = vmatprep.subr.bf16.mxu0 0
    %4764 = vmatpush1.bf16.msra.mxu0 %v3855
    %4765 = vmatprep.subr.bf16.mxu0 0
    %4766 = vmatpush1.bf16.msra.mxu0 %v3856
    %4767 = vmatprep.subr.bf16.mxu0 0
    %4768 = vmatpush1.bf16.msra.mxu0 %v3857
    %4769 = vmatprep.subr.bf16.mxu0 0
    %4770 = vmatpush1.bf16.msra.mxu0 %v3858
    %4771 = vmatprep.mubr.bf16.mxu0 %v1175
    %4772 = vmatmul.mubr.bf16.gmra.mrb[0].mxu0 %v1171
    %v4773 = vpop.f32.mrb[0].mxu0
    %v4774 = vadd.f32 %v985, %v4773
    %v4775 = vpop.f32.mrb[0].mxu0
    %v4776 = vpop.f32.mrb[0].mxu0
    %v4777 = vadd.f32 %v985, %v4776
    %v4778 = vpop.f32.mrb[0].mxu0
    %4779 = vdwg.mxu0
    %4780 = vmatprep.subr.bf16.mxu0 0
    %4781 = vmatpush1.bf16.msra.mxu0 %v3859
    %4782 = vmatprep.subr.bf16.mxu0 0
    %4783 = vmatpush1.bf16.msra.mxu0 %v3860
    %4784 = vmatprep.subr.bf16.mxu0 0
    %4785 = vmatpush1.bf16.msra.mxu0 %v3861
    %4786 = vmatprep.subr.bf16.mxu0 0
    %4787 = vmatpush1.bf16.msra.mxu0 %v3862
    %4788 = vmatprep.subr.bf16.mxu0 0
    %4789 = vmatpush1.bf16.msra.mxu0 %v3863
    %4790 = vmatprep.subr.bf16.mxu0 0
    %4791 = vmatpush1.bf16.msra.mxu0 %v3864
    %4792 = vmatprep.subr.bf16.mxu0 0
    %4793 = vmatpush1.bf16.msra.mxu0 %v3865
    %4794 = vmatprep.subr.bf16.mxu0 0
    %4795 = vmatpush1.bf16.msra.mxu0 %v3866
    %4796 = vmatprep.subr.bf16.mxu0 0
    %4797 = vmatpush1.bf16.msra.mxu0 %v3867
    %4798 = vmatprep.subr.bf16.mxu0 0
    %4799 = vmatpush1.bf16.msra.mxu0 %v3868
    %4800 = vmatprep.subr.bf16.mxu0 0
    %4801 = vmatpush1.bf16.msra.mxu0 %v3869
    %4802 = vmatprep.subr.bf16.mxu0 0
    %4803 = vmatpush1.bf16.msra.mxu0 %v3870
    %4804 = vmatprep.subr.bf16.mxu0 0
    %4805 = vmatpush1.bf16.msra.mxu0 %v3871
    %4806 = vmatprep.subr.bf16.mxu0 0
    %4807 = vmatpush1.bf16.msra.mxu0 %v3872
    %4808 = vmatprep.subr.bf16.mxu0 0
    %4809 = vmatpush1.bf16.msra.mxu0 %v3873
    %4810 = vmatprep.subr.bf16.mxu0 0
    %4811 = vmatpush1.bf16.msra.mxu0 %v3874
    %4812 = vmatprep.mubr.bf16.mxu0 %v1176
    %4813 = vmatmul.mubr.bf16.gmra.mrb[0].mxu0 %v1172
    %v4814 = vpop.f32.mrb[0].mxu0
    %v4815 = vadd.f32 %v4774, %v4814
    %v4816 = vpop.f32.mrb[0].mxu0
    %v4817 = vpop.f32.mrb[0].mxu0
    %v4818 = vadd.f32 %v4777, %v4817
    %v4819 = vpop.f32.mrb[0].mxu0
    %4820 = vdwg.mxu0
    %4821 = vmatprep.subr.bf16.mxu0 0
    %4822 = vmatpush1.bf16.msra.mxu0 %v3875
    %4823 = vmatprep.subr.bf16.mxu0 0
    %4824 = vmatpush1.bf16.msra.mxu0 %v3876
    %4825 = vmatprep.subr.bf16.mxu0 0
    %4826 = vmatpush1.bf16.msra.mxu0 %v3877
    %4827 = vmatprep.subr.bf16.mxu0 0
    %4828 = vmatpush1.bf16.msra.mxu0 %v3878
    %4829 = vmatprep.subr.bf16.mxu0 0
    %4830 = vmatpush1.bf16.msra.mxu0 %v3879
    %4831 = vmatprep.subr.bf16.mxu0 0
    %4832 = vmatpush1.bf16.msra.mxu0 %v3880
    %4833 = vmatprep.subr.bf16.mxu0 0
    %4834 = vmatpush1.bf16.msra.mxu0 %v3881
    %4835 = vmatprep.subr.bf16.mxu0 0
    %4836 = vmatpush1.bf16.msra.mxu0 %v3882
    %4837 = vmatprep.subr.bf16.mxu0 0
    %4838 = vmatpush1.bf16.msra.mxu0 %v3883
    %4839 = vmatprep.subr.bf16.mxu0 0
    %4840 = vmatpush1.bf16.msra.mxu0 %v3884
    %4841 = vmatprep.subr.bf16.mxu0 0
    %4842 = vmatpush1.bf16.msra.mxu0 %v3885
    %4843 = vmatprep.subr.bf16.mxu0 0
    %4844 = vmatpush1.bf16.msra.mxu0 %v3886
    %4845 = vmatprep.subr.bf16.mxu0 0
    %4846 = vmatpush1.bf16.msra.mxu0 %v3887
    %4847 = vmatprep.subr.bf16.mxu0 0
    %4848 = vmatpush1.bf16.msra.mxu0 %v3888
    %4849 = vmatprep.subr.bf16.mxu0 0
    %4850 = vmatpush1.bf16.msra.mxu0 %v3889
    %4851 = vmatprep.subr.bf16.mxu0 0
    %4852 = vmatpush1.bf16.msra.mxu0 %v3890
    %4853 = vmatprep.mubr.bf16.mxu0 %v1177
    %4854 = vmatmul.mubr.bf16.gmra.mrb[0].mxu0 %v1173
    %v4855 = vpop.f32.mrb[0].mxu0
    %v4856 = vadd.f32 %v4815, %v4855
    %v4857 = vpop.f32.mrb[0].mxu0
    %v4858 = vpop.f32.mrb[0].mxu0
    %v4859 = vadd.f32 %v4818, %v4858
    %v4860 = vpop.f32.mrb[0].mxu0
    %4861 = vdwg.mxu0
    %4862 = vmatprep.subr.bf16.mxu0 0
    %4863 = vmatpush1.bf16.msra.mxu0 %v3891
    %4864 = vmatprep.subr.bf16.mxu0 0
    %4865 = vmatpush1.bf16.msra.mxu0 %v3892
    %4866 = vmatprep.subr.bf16.mxu0 0
    %4867 = vmatpush1.bf16.msra.mxu0 %v3893
    %4868 = vmatprep.subr.bf16.mxu0 0
    %4869 = vmatpush1.bf16.msra.mxu0 %v3894
    %4870 = vmatprep.subr.bf16.mxu0 0
    %4871 = vmatpush1.bf16.msra.mxu0 %v3895
    %4872 = vmatprep.subr.bf16.mxu0 0
    %4873 = vmatpush1.bf16.msra.mxu0 %v3896
    %4874 = vmatprep.subr.bf16.mxu0 0
    %4875 = vmatpush1.bf16.msra.mxu0 %v3897
    %4876 = vmatprep.subr.bf16.mxu0 0
    %4877 = vmatpush1.bf16.msra.mxu0 %v3898
    %4878 = vmatprep.subr.bf16.mxu0 0
    %4879 = vmatpush1.bf16.msra.mxu0 %v3899
    %4880 = vmatprep.subr.bf16.mxu0 0
    %4881 = vmatpush1.bf16.msra.mxu0 %v3900
    %4882 = vmatprep.subr.bf16.mxu0 0
    %4883 = vmatpush1.bf16.msra.mxu0 %v3901
    %4884 = vmatprep.subr.bf16.mxu0 0
    %4885 = vmatpush1.bf16.msra.mxu0 %v3902
    %4886 = vmatprep.subr.bf16.mxu0 0
    %4887 = vmatpush1.bf16.msra.mxu0 %v3903
    %4888 = vmatprep.subr.bf16.mxu0 0
    %4889 = vmatpush1.bf16.msra.mxu0 %v3904
    %4890 = vmatprep.subr.bf16.mxu0 0
    %4891 = vmatpush1.bf16.msra.mxu0 %v3905
    %4892 = vmatprep.subr.bf16.mxu0 0
    %4893 = vmatpush1.bf16.msra.mxu0 %v3906
    %4894 = vmatprep.mubr.bf16.mxu0 %v1178
    %4895 = vmatmul.mubr.bf16.gmra.mrb[0].mxu0 %v1174
    %v4896 = vpop.f32.mrb[0].mxu0
    %v4897 = vadd.f32 %v4856, %v4896
    %v4898 = vpop.f32.mrb[0].mxu0
    %v4899 = vpop.f32.mrb[0].mxu0
    %v4900 = vadd.f32 %v4859, %v4899
    %v4901 = vpop.f32.mrb[0].mxu0
    %4902 = vdwg.mxu0
    %4903 = vmatprep.subr.bf16.mxu0 0
    %4904 = vmatpush1.bf16.msra.mxu0 %v3907
    %4905 = vmatprep.subr.bf16.mxu0 0
    %4906 = vmatpush1.bf16.msra.mxu0 %v3908
    %4907 = vmatprep.subr.bf16.mxu0 0
    %4908 = vmatpush1.bf16.msra.mxu0 %v3909
    %4909 = vmatprep.subr.bf16.mxu0 0
    %4910 = vmatpush1.bf16.msra.mxu0 %v3910
    %4911 = vmatprep.subr.bf16.mxu0 0
    %4912 = vmatpush1.bf16.msra.mxu0 %v3911
    %4913 = vmatprep.subr.bf16.mxu0 0
    %4914 = vmatpush1.bf16.msra.mxu0 %v3912
    %4915 = vmatprep.subr.bf16.mxu0 0
    %4916 = vmatpush1.bf16.msra.mxu0 %v3913
    %4917 = vmatprep.subr.bf16.mxu0 0
    %4918 = vmatpush1.bf16.msra.mxu0 %v3914
    %4919 = vmatprep.subr.bf16.mxu0 0
    %4920 = vmatpush1.bf16.msra.mxu0 %v3915
    %4921 = vmatprep.subr.bf16.mxu0 0
    %4922 = vmatpush1.bf16.msra.mxu0 %v3916
    %4923 = vmatprep.subr.bf16.mxu0 0
    %4924 = vmatpush1.bf16.msra.mxu0 %v3917
    %4925 = vmatprep.subr.bf16.mxu0 0
    %4926 = vmatpush1.bf16.msra.mxu0 %v3918
    %4927 = vmatprep.subr.bf16.mxu0 0
    %4928 = vmatpush1.bf16.msra.mxu0 %v3919
    %4929 = vmatprep.subr.bf16.mxu0 0
    %4930 = vmatpush1.bf16.msra.mxu0 %v3920
    %4931 = vmatprep.subr.bf16.mxu0 0
    %4932 = vmatpush1.bf16.msra.mxu0 %v3921
    %4933 = vmatprep.subr.bf16.mxu0 0
    %4934 = vmatpush1.bf16.msra.mxu0 %v3922
    %4935 = vmatprep.mubr.bf16.mxu0 %v1311
    %4936 = vmatmul.mubr.bf16.gmra.mrb[0].mxu0 %v1307
    %v4937 = vpop.f32.mrb[0].mxu0
    %v4938 = vadd.f32 %v4897, %v4937
    %v4939 = vpop.f32.mrb[0].mxu0
    %v4940 = vpop.f32.mrb[0].mxu0
    %v4941 = vadd.f32 %v4900, %v4940
    %v4942 = vpop.f32.mrb[0].mxu0
    %4943 = vdwg.mxu0
    %4944 = vmatprep.subr.bf16.mxu0 0
    %4945 = vmatpush1.bf16.msra.mxu0 %v3923
    %4946 = vmatprep.subr.bf16.mxu0 0
    %4947 = vmatpush1.bf16.msra.mxu0 %v3924
    %4948 = vmatprep.subr.bf16.mxu0 0
    %4949 = vmatpush1.bf16.msra.mxu0 %v3925
    %4950 = vmatprep.subr.bf16.mxu0 0
    %4951 = vmatpush1.bf16.msra.mxu0 %v3926
    %4952 = vmatprep.subr.bf16.mxu0 0
    %4953 = vmatpush1.bf16.msra.mxu0 %v3927
    %4954 = vmatprep.subr.bf16.mxu0 0
    %4955 = vmatpush1.bf16.msra.mxu0 %v3928
    %4956 = vmatprep.subr.bf16.mxu0 0
    %4957 = vmatpush1.bf16.msra.mxu0 %v3929
    %4958 = vmatprep.subr.bf16.mxu0 0
    %4959 = vmatpush1.bf16.msra.mxu0 %v3930
    %4960 = vmatprep.subr.bf16.mxu0 0
    %4961 = vmatpush1.bf16.msra.mxu0 %v3931
    %4962 = vmatprep.subr.bf16.mxu0 0
    %4963 = vmatpush1.bf16.msra.mxu0 %v3932
    %4964 = vmatprep.subr.bf16.mxu0 0
    %4965 = vmatpush1.bf16.msra.mxu0 %v3933
    %4966 = vmatprep.subr.bf16.mxu0 0
    %4967 = vmatpush1.bf16.msra.mxu0 %v3934
    %4968 = vmatprep.subr.bf16.mxu0 0
    %4969 = vmatpush1.bf16.msra.mxu0 %v3935
    %4970 = vmatprep.subr.bf16.mxu0 0
    %4971 = vmatpush1.bf16.msra.mxu0 %v3936
    %4972 = vmatprep.subr.bf16.mxu0 0
    %4973 = vmatpush1.bf16.msra.mxu0 %v3937
    %4974 = vmatprep.subr.bf16.mxu0 0
    %4975 = vmatpush1.bf16.msra.mxu0 %v3938
    %4976 = vmatprep.mubr.bf16.mxu0 %v1312
    %4977 = vmatmul.mubr.bf16.gmra.mrb[0].mxu0 %v1308
    %v4978 = vpop.f32.mrb[0].mxu0
    %v4979 = vadd.f32 %v4938, %v4978
    %v4980 = vpop.f32.mrb[0].mxu0
    %v4981 = vpop.f32.mrb[0].mxu0
    %v4982 = vadd.f32 %v4941, %v4981
    %v4983 = vpop.f32.mrb[0].mxu0
    %4984 = vdwg.mxu0
    %4985 = vmatprep.subr.bf16.mxu0 0
    %4986 = vmatpush1.bf16.msra.mxu0 %v3939
    %4987 = vmatprep.subr.bf16.mxu0 0
    %4988 = vmatpush1.bf16.msra.mxu0 %v3940
    %4989 = vmatprep.subr.bf16.mxu0 0
    %4990 = vmatpush1.bf16.msra.mxu0 %v3941
    %4991 = vmatprep.subr.bf16.mxu0 0
    %4992 = vmatpush1.bf16.msra.mxu0 %v3942
    %4993 = vmatprep.subr.bf16.mxu0 0
    %4994 = vmatpush1.bf16.msra.mxu0 %v3943
    %4995 = vmatprep.subr.bf16.mxu0 0
    %4996 = vmatpush1.bf16.msra.mxu0 %v3944
    %4997 = vmatprep.subr.bf16.mxu0 0
    %4998 = vmatpush1.bf16.msra.mxu0 %v3945
    %4999 = vmatprep.subr.bf16.mxu0 0
    %5000 = vmatpush1.bf16.msra.mxu0 %v3946
    %5001 = vmatprep.subr.bf16.mxu0 0
    %5002 = vmatpush1.bf16.msra.mxu0 %v3947
    %5003 = vmatprep.subr.bf16.mxu0 0
    %5004 = vmatpush1.bf16.msra.mxu0 %v3948
    %5005 = vmatprep.subr.bf16.mxu0 0
    %5006 = vmatpush1.bf16.msra.mxu0 %v3949
    %5007 = vmatprep.subr.bf16.mxu0 0
    %5008 = vmatpush1.bf16.msra.mxu0 %v3950
    %5009 = vmatprep.subr.bf16.mxu0 0
    %5010 = vmatpush1.bf16.msra.mxu0 %v3951
    %5011 = vmatprep.subr.bf16.mxu0 0
    %5012 = vmatpush1.bf16.msra.mxu0 %v3952
    %5013 = vmatprep.subr.bf16.mxu0 0
    %5014 = vmatpush1.bf16.msra.mxu0 %v3953
    %5015 = vmatprep.subr.bf16.mxu0 0
    %5016 = vmatpush1.bf16.msra.mxu0 %v3954
    %5017 = vmatprep.mubr.bf16.mxu0 %v1313
    %5018 = vmatmul.mubr.bf16.gmra.mrb[0].mxu0 %v1309
    %v5019 = vpop.f32.mrb[0].mxu0
    %v5020 = vadd.f32 %v4979, %v5019
    %v5021 = vpop.f32.mrb[0].mxu0
    %v5022 = vpop.f32.mrb[0].mxu0
    %v5023 = vadd.f32 %v4982, %v5022
    %v5024 = vpop.f32.mrb[0].mxu0
    %5025 = vdwg.mxu0
    %5026 = vmatprep.subr.bf16.mxu0 0
    %5027 = vmatpush1.bf16.msra.mxu0 %v3955
    %5028 = vmatprep.subr.bf16.mxu0 0
    %5029 = vmatpush1.bf16.msra.mxu0 %v3956
    %5030 = vmatprep.subr.bf16.mxu0 0
    %5031 = vmatpush1.bf16.msra.mxu0 %v3957
    %5032 = vmatprep.subr.bf16.mxu0 0
    %5033 = vmatpush1.bf16.msra.mxu0 %v3958
    %5034 = vmatprep.subr.bf16.mxu0 0
    %5035 = vmatpush1.bf16.msra.mxu0 %v3959
    %5036 = vmatprep.subr.bf16.mxu0 0
    %5037 = vmatpush1.bf16.msra.mxu0 %v3960
    %5038 = vmatprep.subr.bf16.mxu0 0
    %5039 = vmatpush1.bf16.msra.mxu0 %v3961
    %5040 = vmatprep.subr.bf16.mxu0 0
    %5041 = vmatpush1.bf16.msra.mxu0 %v3962
    %5042 = vmatprep.subr.bf16.mxu0 0
    %5043 = vmatpush1.bf16.msra.mxu0 %v3963
    %5044 = vmatprep.subr.bf16.mxu0 0
    %5045 = vmatpush1.bf16.msra.mxu0 %v3964
    %5046 = vmatprep.subr.bf16.mxu0 0
    %5047 = vmatpush1.bf16.msra.mxu0 %v3965
    %5048 = vmatprep.subr.bf16.mxu0 0
    %5049 = vmatpush1.bf16.msra.mxu0 %v3966
    %5050 = vmatprep.subr.bf16.mxu0 0
    %5051 = vmatpush1.bf16.msra.mxu0 %v3967
    %5052 = vmatprep.subr.bf16.mxu0 0
    %5053 = vmatpush1.bf16.msra.mxu0 %v3968
    %5054 = vmatprep.subr.bf16.mxu0 0
    %5055 = vmatpush1.bf16.msra.mxu0 %v3969
    %5056 = vmatprep.subr.bf16.mxu0 0
    %5057 = vmatpush1.bf16.msra.mxu0 %v3970
    %5058 = vmatprep.mubr.bf16.mxu0 %v1314
    %5059 = vmatmul.mubr.bf16.gmra.mrb[0].mxu0 %v1310
    %v5060 = vpop.f32.mrb[0].mxu0
    %v5061 = vadd.f32 %v5020, %v5060
    %v5062 = vpop.f32.mrb[0].mxu0
    %v5063 = vpop.f32.mrb[0].mxu0
    %v5064 = vadd.f32 %v5023, %v5063
    %v5065 = vpop.f32.mrb[0].mxu0
    %5066 = vdwg.mxu0
    %5067 = vmatprep.subr.bf16.mxu0 0
    %5068 = vmatpush1.bf16.msra.mxu0 %v3971
    %5069 = vmatprep.subr.bf16.mxu0 0
    %5070 = vmatpush1.bf16.msra.mxu0 %v3972
    %5071 = vmatprep.subr.bf16.mxu0 0
    %5072 = vmatpush1.bf16.msra.mxu0 %v3973
    %5073 = vmatprep.subr.bf16.mxu0 0
    %5074 = vmatpush1.bf16.msra.mxu0 %v3974
    %5075 = vmatprep.subr.bf16.mxu0 0
    %5076 = vmatpush1.bf16.msra.mxu0 %v3975
    %5077 = vmatprep.subr.bf16.mxu0 0
    %5078 = vmatpush1.bf16.msra.mxu0 %v3976
    %5079 = vmatprep.subr.bf16.mxu0 0
    %5080 = vmatpush1.bf16.msra.mxu0 %v3977
    %5081 = vmatprep.subr.bf16.mxu0 0
    %5082 = vmatpush1.bf16.msra.mxu0 %v3978
    %5083 = vmatprep.subr.bf16.mxu0 0
    %5084 = vmatpush1.bf16.msra.mxu0 %v3979
    %5085 = vmatprep.subr.bf16.mxu0 0
    %5086 = vmatpush1.bf16.msra.mxu0 %v3980
    %5087 = vmatprep.subr.bf16.mxu0 0
    %5088 = vmatpush1.bf16.msra.mxu0 %v3981
    %5089 = vmatprep.subr.bf16.mxu0 0
    %5090 = vmatpush1.bf16.msra.mxu0 %v3982
    %5091 = vmatprep.subr.bf16.mxu0 0
    %5092 = vmatpush1.bf16.msra.mxu0 %v3983
    %5093 = vmatprep.subr.bf16.mxu0 0
    %5094 = vmatpush1.bf16.msra.mxu0 %v3984
    %5095 = vmatprep.subr.bf16.mxu0 0
    %5096 = vmatpush1.bf16.msra.mxu0 %v3985
    %5097 = vmatprep.subr.bf16.mxu0 0
    %5098 = vmatpush1.bf16.msra.mxu0 %v3986
    %5099 = vmatprep.mubr.bf16.mxu0 %v1447
    %5100 = vmatmul.mubr.bf16.gmra.mrb[0].mxu0 %v1443
    %v5101 = vpop.f32.mrb[0].mxu0
    %v5102 = vadd.f32 %v5061, %v5101
    %v5103 = vpop.f32.mrb[0].mxu0
    %v5104 = vpop.f32.mrb[0].mxu0
    %v5105 = vadd.f32 %v5064, %v5104
    %v5106 = vpop.f32.mrb[0].mxu0
    %5107 = vdwg.mxu0
    %5108 = vmatprep.subr.bf16.mxu0 0
    %5109 = vmatpush1.bf16.msra.mxu0 %v3987
    %5110 = vmatprep.subr.bf16.mxu0 0
    %5111 = vmatpush1.bf16.msra.mxu0 %v3988
    %5112 = vmatprep.subr.bf16.mxu0 0
    %5113 = vmatpush1.bf16.msra.mxu0 %v3989
    %5114 = vmatprep.subr.bf16.mxu0 0
    %5115 = vmatpush1.bf16.msra.mxu0 %v3990
    %5116 = vmatprep.subr.bf16.mxu0 0
    %5117 = vmatpush1.bf16.msra.mxu0 %v3991
    %5118 = vmatprep.subr.bf16.mxu0 0
    %5119 = vmatpush1.bf16.msra.mxu0 %v3992
    %5120 = vmatprep.subr.bf16.mxu0 0
    %5121 = vmatpush1.bf16.msra.mxu0 %v3993
    %5122 = vmatprep.subr.bf16.mxu0 0
    %5123 = vmatpush1.bf16.msra.mxu0 %v3994
    %5124 = vmatprep.subr.bf16.mxu0 0
    %5125 = vmatpush1.bf16.msra.mxu0 %v3995
    %5126 = vmatprep.subr.bf16.mxu0 0
    %5127 = vmatpush1.bf16.msra.mxu0 %v3996
    %5128 = vmatprep.subr.bf16.mxu0 0
    %5129 = vmatpush1.bf16.msra.mxu0 %v3997
    %5130 = vmatprep.subr.bf16.mxu0 0
    %5131 = vmatpush1.bf16.msra.mxu0 %v3998
    %5132 = vmatprep.subr.bf16.mxu0 0
    %5133 = vmatpush1.bf16.msra.mxu0 %v3999
    %5134 = vmatprep.subr.bf16.mxu0 0
    %5135 = vmatpush1.bf16.msra.mxu0 %v4000
    %5136 = vmatprep.subr.bf16.mxu0 0
    %5137 = vmatpush1.bf16.msra.mxu0 %v4001
    %5138 = vmatprep.subr.bf16.mxu0 0
    %5139 = vmatpush1.bf16.msra.mxu0 %v4002
    %5140 = vmatprep.mubr.bf16.mxu0 %v1448
    %5141 = vmatmul.mubr.bf16.gmra.mrb[0].mxu0 %v1444
    %v5142 = vpop.f32.mrb[0].mxu0
    %v5143 = vadd.f32 %v5102, %v5142
    %v5144 = vpop.f32.mrb[0].mxu0
    %v5145 = vpop.f32.mrb[0].mxu0
    %v5146 = vadd.f32 %v5105, %v5145
    %v5147 = vpop.f32.mrb[0].mxu0
    %5148 = vdwg.mxu0
    %5149 = vmatprep.subr.bf16.mxu0 0
    %5150 = vmatpush1.bf16.msra.mxu0 %v4003
    %5151 = vmatprep.subr.bf16.mxu0 0
    %5152 = vmatpush1.bf16.msra.mxu0 %v4004
    %5153 = vmatprep.subr.bf16.mxu0 0
    %5154 = vmatpush1.bf16.msra.mxu0 %v4005
    %5155 = vmatprep.subr.bf16.mxu0 0
    %5156 = vmatpush1.bf16.msra.mxu0 %v4006
    %5157 = vmatprep.subr.bf16.mxu0 0
    %5158 = vmatpush1.bf16.msra.mxu0 %v4007
    %5159 = vmatprep.subr.bf16.mxu0 0
    %5160 = vmatpush1.bf16.msra.mxu0 %v4008
    %5161 = vmatprep.subr.bf16.mxu0 0
    %5162 = vmatpush1.bf16.msra.mxu0 %v4009
    %5163 = vmatprep.subr.bf16.mxu0 0
    %5164 = vmatpush1.bf16.msra.mxu0 %v4010
    %5165 = vmatprep.subr.bf16.mxu0 0
    %5166 = vmatpush1.bf16.msra.mxu0 %v4011
    %5167 = vmatprep.subr.bf16.mxu0 0
    %5168 = vmatpush1.bf16.msra.mxu0 %v4012
    %5169 = vmatprep.subr.bf16.mxu0 0
    %5170 = vmatpush1.bf16.msra.mxu0 %v4013
    %5171 = vmatprep.subr.bf16.mxu0 0
    %5172 = vmatpush1.bf16.msra.mxu0 %v4014
    %5173 = vmatprep.subr.bf16.mxu0 0
    %5174 = vmatpush1.bf16.msra.mxu0 %v4015
    %5175 = vmatprep.subr.bf16.mxu0 0
    %5176 = vmatpush1.bf16.msra.mxu0 %v4016
    %5177 = vmatprep.subr.bf16.mxu0 0
    %5178 = vmatpush1.bf16.msra.mxu0 %v4017
    %5179 = vmatprep.subr.bf16.mxu0 0
    %5180 = vmatpush1.bf16.msra.mxu0 %v4018
    %5181 = vmatprep.mubr.bf16.mxu0 %v1449
    %5182 = vmatmul.mubr.bf16.gmra.mrb[0].mxu0 %v1445
    %v5183 = vpop.f32.mrb[0].mxu0
    %v5184 = vadd.f32 %v5143, %v5183
    %v5185 = vpop.f32.mrb[0].mxu0
    %v5186 = vpop.f32.mrb[0].mxu0
    %v5187 = vadd.f32 %v5146, %v5186
    %v5188 = vpop.f32.mrb[0].mxu0
    %5189 = vdwg.mxu0
    %5190 = vmatprep.subr.bf16.mxu0 0
    %5191 = vmatpush1.bf16.msra.mxu0 %v4019
    %5192 = vmatprep.subr.bf16.mxu0 0
    %5193 = vmatpush1.bf16.msra.mxu0 %v4020
    %5194 = vmatprep.subr.bf16.mxu0 0
    %5195 = vmatpush1.bf16.msra.mxu0 %v4021
    %5196 = vmatprep.subr.bf16.mxu0 0
    %5197 = vmatpush1.bf16.msra.mxu0 %v4022
    %5198 = vmatprep.subr.bf16.mxu0 0
    %5199 = vmatpush1.bf16.msra.mxu0 %v4023
    %5200 = vmatprep.subr.bf16.mxu0 0
    %5201 = vmatpush1.bf16.msra.mxu0 %v4024
    %5202 = vmatprep.subr.bf16.mxu0 0
    %5203 = vmatpush1.bf16.msra.mxu0 %v4025
    %5204 = vmatprep.subr.bf16.mxu0 0
    %5205 = vmatpush1.bf16.msra.mxu0 %v4026
    %5206 = vmatprep.subr.bf16.mxu0 0
    %5207 = vmatpush1.bf16.msra.mxu0 %v4027
    %5208 = vmatprep.subr.bf16.mxu0 0
    %5209 = vmatpush1.bf16.msra.mxu0 %v4028
    %5210 = vmatprep.subr.bf16.mxu0 0
    %5211 = vmatpush1.bf16.msra.mxu0 %v4029
    %5212 = vmatprep.subr.bf16.mxu0 0
    %5213 = vmatpush1.bf16.msra.mxu0 %v4030
    %5214 = vmatprep.subr.bf16.mxu0 0
    %5215 = vmatpush1.bf16.msra.mxu0 %v4031
    %5216 = vmatprep.subr.bf16.mxu0 0
    %5217 = vmatpush1.bf16.msra.mxu0 %v4032
    %5218 = vmatprep.subr.bf16.mxu0 0
    %5219 = vmatpush1.bf16.msra.mxu0 %v4033
    %5220 = vmatprep.subr.bf16.mxu0 0
    %5221 = vmatpush1.bf16.msra.mxu0 %v4034
    %5222 = vmatprep.mubr.bf16.mxu0 %v1450
    %5223 = vmatmul.mubr.bf16.gmra.mrb[0].mxu0 %v1446
    %v5224 = vpop.f32.mrb[0].mxu0
    %v5225 = vadd.f32 %v5184, %v5224
    %v5226 = vpop.f32.mrb[0].mxu0
    %v5227 = vpop.f32.mrb[0].mxu0
    %v5228 = vadd.f32 %v5187, %v5227
    %v5229 = vpop.f32.mrb[0].mxu0
    %5230 = vdwg.mxu0
    %5231 = vmatprep.subr.bf16.mxu0 0
    %5232 = vmatpush1.bf16.msra.mxu0 %v4035
    %5233 = vmatprep.subr.bf16.mxu0 0
    %5234 = vmatpush1.bf16.msra.mxu0 %v4036
    %5235 = vmatprep.subr.bf16.mxu0 0
    %5236 = vmatpush1.bf16.msra.mxu0 %v4037
    %5237 = vmatprep.subr.bf16.mxu0 0
    %5238 = vmatpush1.bf16.msra.mxu0 %v4038
    %5239 = vmatprep.subr.bf16.mxu0 0
    %5240 = vmatpush1.bf16.msra.mxu0 %v4039
    %5241 = vmatprep.subr.bf16.mxu0 0
    %5242 = vmatpush1.bf16.msra.mxu0 %v4040
    %5243 = vmatprep.subr.bf16.mxu0 0
    %5244 = vmatpush1.bf16.msra.mxu0 %v4041
    %5245 = vmatprep.subr.bf16.mxu0 0
    %5246 = vmatpush1.bf16.msra.mxu0 %v4042
    %5247 = vmatprep.subr.bf16.mxu0 0
    %5248 = vmatpush1.bf16.msra.mxu0 %v4043
    %5249 = vmatprep.subr.bf16.mxu0 0
    %5250 = vmatpush1.bf16.msra.mxu0 %v4044
    %5251 = vmatprep.subr.bf16.mxu0 0
    %5252 = vmatpush1.bf16.msra.mxu0 %v4045
    %5253 = vmatprep.subr.bf16.mxu0 0
    %5254 = vmatpush1.bf16.msra.mxu0 %v4046
    %5255 = vmatprep.subr.bf16.mxu0 0
    %5256 = vmatpush1.bf16.msra.mxu0 %v4047
    %5257 = vmatprep.subr.bf16.mxu0 0
    %5258 = vmatpush1.bf16.msra.mxu0 %v4048
    %5259 = vmatprep.subr.bf16.mxu0 0
    %5260 = vmatpush1.bf16.msra.mxu0 %v4049
    %5261 = vmatprep.subr.bf16.mxu0 0
    %5262 = vmatpush1.bf16.msra.mxu0 %v4050
    %5263 = vmatprep.mubr.bf16.mxu0 %v1583
    %5264 = vmatmul.mubr.bf16.gmra.mrb[0].mxu0 %v1579
    %v5265 = vpop.f32.mrb[0].mxu0
    %v5266 = vadd.f32 %v5225, %v5265
    %v5267 = vpop.f32.mrb[0].mxu0
    %v5268 = vpop.f32.mrb[0].mxu0
    %v5269 = vadd.f32 %v5228, %v5268
    %v5270 = vpop.f32.mrb[0].mxu0
    %5271 = vdwg.mxu0
    %5272 = vmatprep.subr.bf16.mxu0 0
    %5273 = vmatpush1.bf16.msra.mxu0 %v4051
    %5274 = vmatprep.subr.bf16.mxu0 0
    %5275 = vmatpush1.bf16.msra.mxu0 %v4052
    %5276 = vmatprep.subr.bf16.mxu0 0
    %5277 = vmatpush1.bf16.msra.mxu0 %v4053
    %5278 = vmatprep.subr.bf16.mxu0 0
    %5279 = vmatpush1.bf16.msra.mxu0 %v4054
    %5280 = vmatprep.subr.bf16.mxu0 0
    %5281 = vmatpush1.bf16.msra.mxu0 %v4055
    %5282 = vmatprep.subr.bf16.mxu0 0
    %5283 = vmatpush1.bf16.msra.mxu0 %v4056
    %5284 = vmatprep.subr.bf16.mxu0 0
    %5285 = vmatpush1.bf16.msra.mxu0 %v4057
    %5286 = vmatprep.subr.bf16.mxu0 0
    %5287 = vmatpush1.bf16.msra.mxu0 %v4058
    %5288 = vmatprep.subr.bf16.mxu0 0
    %5289 = vmatpush1.bf16.msra.mxu0 %v4059
    %5290 = vmatprep.subr.bf16.mxu0 0
    %5291 = vmatpush1.bf16.msra.mxu0 %v4060
    %5292 = vmatprep.subr.bf16.mxu0 0
    %5293 = vmatpush1.bf16.msra.mxu0 %v4061
    %5294 = vmatprep.subr.bf16.mxu0 0
    %5295 = vmatpush1.bf16.msra.mxu0 %v4062
    %5296 = vmatprep.subr.bf16.mxu0 0
    %5297 = vmatpush1.bf16.msra.mxu0 %v4063
    %5298 = vmatprep.subr.bf16.mxu0 0
    %5299 = vmatpush1.bf16.msra.mxu0 %v4064
    %5300 = vmatprep.subr.bf16.mxu0 0
    %5301 = vmatpush1.bf16.msra.mxu0 %v4065
    %5302 = vmatprep.subr.bf16.mxu0 0
    %5303 = vmatpush1.bf16.msra.mxu0 %v4066
    %5304 = vmatprep.mubr.bf16.mxu0 %v1584
    %5305 = vmatmul.mubr.bf16.gmra.mrb[0].mxu0 %v1580
    %v5306 = vpop.f32.mrb[0].mxu0
    %v5307 = vadd.f32 %v5266, %v5306
    %v5308 = vpop.f32.mrb[0].mxu0
    %v5309 = vpop.f32.mrb[0].mxu0
    %v5310 = vadd.f32 %v5269, %v5309
    %v5311 = vpop.f32.mrb[0].mxu0
    %5312 = vdwg.mxu0
    %5313 = vmatprep.subr.bf16.mxu0 0
    %5314 = vmatpush1.bf16.msra.mxu0 %v4067
    %5315 = vmatprep.subr.bf16.mxu0 0
    %5316 = vmatpush1.bf16.msra.mxu0 %v4068
    %5317 = vmatprep.subr.bf16.mxu0 0
    %5318 = vmatpush1.bf16.msra.mxu0 %v4069
    %5319 = vmatprep.subr.bf16.mxu0 0
    %5320 = vmatpush1.bf16.msra.mxu0 %v4070
    %5321 = vmatprep.subr.bf16.mxu0 0
    %5322 = vmatpush1.bf16.msra.mxu0 %v4071
    %5323 = vmatprep.subr.bf16.mxu0 0
    %5324 = vmatpush1.bf16.msra.mxu0 %v4072
    %5325 = vmatprep.subr.bf16.mxu0 0
    %5326 = vmatpush1.bf16.msra.mxu0 %v4073
    %5327 = vmatprep.subr.bf16.mxu0 0
    %5328 = vmatpush1.bf16.msra.mxu0 %v4074
    %5329 = vmatprep.subr.bf16.mxu0 0
    %5330 = vmatpush1.bf16.msra.mxu0 %v4075
    %5331 = vmatprep.subr.bf16.mxu0 0
    %5332 = vmatpush1.bf16.msra.mxu0 %v4076
    %5333 = vmatprep.subr.bf16.mxu0 0
    %5334 = vmatpush1.bf16.msra.mxu0 %v4077
    %5335 = vmatprep.subr.bf16.mxu0 0
    %5336 = vmatpush1.bf16.msra.mxu0 %v4078
    %5337 = vmatprep.subr.bf16.mxu0 0
    %5338 = vmatpush1.bf16.msra.mxu0 %v4079
    %5339 = vmatprep.subr.bf16.mxu0 0
    %5340 = vmatpush1.bf16.msra.mxu0 %v4080
    %5341 = vmatprep.subr.bf16.mxu0 0
    %5342 = vmatpush1.bf16.msra.mxu0 %v4081
    %5343 = vmatprep.subr.bf16.mxu0 0
    %5344 = vmatpush1.bf16.msra.mxu0 %v4082
    %5345 = vmatprep.mubr.bf16.mxu0 %v1585
    %5346 = vmatmul.mubr.bf16.gmra.mrb[0].mxu0 %v1581
    %v5347 = vpop.f32.mrb[0].mxu0
    %v5348 = vadd.f32 %v5307, %v5347
    %v5349 = vpop.f32.mrb[0].mxu0
    %v5350 = vpop.f32.mrb[0].mxu0
    %v5351 = vadd.f32 %v5310, %v5350
    %v5352 = vpop.f32.mrb[0].mxu0
    %5353 = vdwg.mxu0
    %5354 = vmatprep.subr.bf16.mxu0 0
    %5355 = vmatpush1.bf16.msra.mxu0 %v4083
    %5356 = vmatprep.subr.bf16.mxu0 0
    %5357 = vmatpush1.bf16.msra.mxu0 %v4084
    %5358 = vmatprep.subr.bf16.mxu0 0
    %5359 = vmatpush1.bf16.msra.mxu0 %v4085
    %5360 = vmatprep.subr.bf16.mxu0 0
    %5361 = vmatpush1.bf16.msra.mxu0 %v4086
    %5362 = vmatprep.subr.bf16.mxu0 0
    %5363 = vmatpush1.bf16.msra.mxu0 %v4087
    %5364 = vmatprep.subr.bf16.mxu0 0
    %5365 = vmatpush1.bf16.msra.mxu0 %v4088
    %5366 = vmatprep.subr.bf16.mxu0 0
    %5367 = vmatpush1.bf16.msra.mxu0 %v4089
    %5368 = vmatprep.subr.bf16.mxu0 0
    %5369 = vmatpush1.bf16.msra.mxu0 %v4090
    %5370 = vmatprep.subr.bf16.mxu0 0
    %5371 = vmatpush1.bf16.msra.mxu0 %v4091
    %5372 = vmatprep.subr.bf16.mxu0 0
    %5373 = vmatpush1.bf16.msra.mxu0 %v4092
    %5374 = vmatprep.subr.bf16.mxu0 0
    %5375 = vmatpush1.bf16.msra.mxu0 %v4093
    %5376 = vmatprep.subr.bf16.mxu0 0
    %5377 = vmatpush1.bf16.msra.mxu0 %v4094
    %5378 = vmatprep.subr.bf16.mxu0 0
    %5379 = vmatpush1.bf16.msra.mxu0 %v4095
    %5380 = vmatprep.subr.bf16.mxu0 0
    %5381 = vmatpush1.bf16.msra.mxu0 %v4096
    %5382 = vmatprep.subr.bf16.mxu0 0
    %5383 = vmatpush1.bf16.msra.mxu0 %v4097
    %5384 = vmatprep.subr.bf16.mxu0 0
    %5385 = vmatpush1.bf16.msra.mxu0 %v4098
    %5386 = vmatprep.mubr.bf16.mxu0 %v1586
    %5387 = vmatmul.mubr.bf16.gmra.mrb[0].mxu0 %v1582
    %v5388 = vpop.f32.mrb[0].mxu0
    %v5389 = vadd.f32 %v5348, %v5388
    %v5390 = vpop.f32.mrb[0].mxu0
    %v5391 = vpop.f32.mrb[0].mxu0
    %v5392 = vadd.f32 %v5351, %v5391
    %v5393 = vpop.f32.mrb[0].mxu0
    %5394 = vdwg.mxu0
    %5395 = vmatprep.subr.bf16.mxu0 0
    %5396 = vmatpush1.bf16.msra.mxu0 %v4099
    %5397 = vmatprep.subr.bf16.mxu0 0
    %5398 = vmatpush1.bf16.msra.mxu0 %v4100
    %5399 = vmatprep.subr.bf16.mxu0 0
    %5400 = vmatpush1.bf16.msra.mxu0 %v4101
    %5401 = vmatprep.subr.bf16.mxu0 0
    %5402 = vmatpush1.bf16.msra.mxu0 %v4102
    %5403 = vmatprep.subr.bf16.mxu0 0
    %5404 = vmatpush1.bf16.msra.mxu0 %v4103
    %5405 = vmatprep.subr.bf16.mxu0 0
    %5406 = vmatpush1.bf16.msra.mxu0 %v4104
    %5407 = vmatprep.subr.bf16.mxu0 0
    %5408 = vmatpush1.bf16.msra.mxu0 %v4105
    %5409 = vmatprep.subr.bf16.mxu0 0
    %5410 = vmatpush1.bf16.msra.mxu0 %v4106
    %5411 = vmatprep.subr.bf16.mxu0 0
    %5412 = vmatpush1.bf16.msra.mxu0 %v4107
    %5413 = vmatprep.subr.bf16.mxu0 0
    %5414 = vmatpush1.bf16.msra.mxu0 %v4108
    %5415 = vmatprep.subr.bf16.mxu0 0
    %5416 = vmatpush1.bf16.msra.mxu0 %v4109
    %5417 = vmatprep.subr.bf16.mxu0 0
    %5418 = vmatpush1.bf16.msra.mxu0 %v4110
    %5419 = vmatprep.subr.bf16.mxu0 0
    %5420 = vmatpush1.bf16.msra.mxu0 %v4111
    %5421 = vmatprep.subr.bf16.mxu0 0
    %5422 = vmatpush1.bf16.msra.mxu0 %v4112
    %5423 = vmatprep.subr.bf16.mxu0 0
    %5424 = vmatpush1.bf16.msra.mxu0 %v4113
    %5425 = vmatprep.subr.bf16.mxu0 0
    %5426 = vmatpush1.bf16.msra.mxu0 %v4114
    %5427 = vmatprep.mubr.bf16.mxu0 %v1719
    %5428 = vmatmul.mubr.bf16.gmra.mrb[0].mxu0 %v1715
    %v5429 = vpop.f32.mrb[0].mxu0
    %v5430 = vadd.f32 %v5389, %v5429
    %v5431 = vpop.f32.mrb[0].mxu0
    %v5432 = vpop.f32.mrb[0].mxu0
    %v5433 = vadd.f32 %v5392, %v5432
    %v5434 = vpop.f32.mrb[0].mxu0
    %5435 = vdwg.mxu0
    %5436 = vmatprep.subr.bf16.mxu0 0
    %5437 = vmatpush1.bf16.msra.mxu0 %v4115
    %5438 = vmatprep.subr.bf16.mxu0 0
    %5439 = vmatpush1.bf16.msra.mxu0 %v4116
    %5440 = vmatprep.subr.bf16.mxu0 0
    %5441 = vmatpush1.bf16.msra.mxu0 %v4117
    %5442 = vmatprep.subr.bf16.mxu0 0
    %5443 = vmatpush1.bf16.msra.mxu0 %v4118
    %5444 = vmatprep.subr.bf16.mxu0 0
    %5445 = vmatpush1.bf16.msra.mxu0 %v4119
    %5446 = vmatprep.subr.bf16.mxu0 0
    %5447 = vmatpush1.bf16.msra.mxu0 %v4120
    %5448 = vmatprep.subr.bf16.mxu0 0
    %5449 = vmatpush1.bf16.msra.mxu0 %v4121
    %5450 = vmatprep.subr.bf16.mxu0 0
    %5451 = vmatpush1.bf16.msra.mxu0 %v4122
    %5452 = vmatprep.subr.bf16.mxu0 0
    %5453 = vmatpush1.bf16.msra.mxu0 %v4123
    %5454 = vmatprep.subr.bf16.mxu0 0
    %5455 = vmatpush1.bf16.msra.mxu0 %v4124
    %5456 = vmatprep.subr.bf16.mxu0 0
    %5457 = vmatpush1.bf16.msra.mxu0 %v4125
    %5458 = vmatprep.subr.bf16.mxu0 0
    %5459 = vmatpush1.bf16.msra.mxu0 %v4126
    %5460 = vmatprep.subr.bf16.mxu0 0
    %5461 = vmatpush1.bf16.msra.mxu0 %v4127
    %5462 = vmatprep.subr.bf16.mxu0 0
    %5463 = vmatpush1.bf16.msra.mxu0 %v4128
    %5464 = vmatprep.subr.bf16.mxu0 0
    %5465 = vmatpush1.bf16.msra.mxu0 %v4129
    %5466 = vmatprep.subr.bf16.mxu0 0
    %5467 = vmatpush1.bf16.msra.mxu0 %v4130
    %5468 = vmatprep.mubr.bf16.mxu0 %v1720
    %5469 = vmatmul.mubr.bf16.gmra.mrb[0].mxu0 %v1716
    %v5470 = vpop.f32.mrb[0].mxu0
    %v5471 = vadd.f32 %v5430, %v5470
    %v5472 = vpop.f32.mrb[0].mxu0
    %v5473 = vpop.f32.mrb[0].mxu0
    %v5474 = vadd.f32 %v5433, %v5473
    %v5475 = vpop.f32.mrb[0].mxu0
    %5476 = vdwg.mxu0
    %5477 = vmatprep.subr.bf16.mxu0 0
    %5478 = vmatpush1.bf16.msra.mxu0 %v4131
    %5479 = vmatprep.subr.bf16.mxu0 0
    %5480 = vmatpush1.bf16.msra.mxu0 %v4132
    %5481 = vmatprep.subr.bf16.mxu0 0
    %5482 = vmatpush1.bf16.msra.mxu0 %v4133
    %5483 = vmatprep.subr.bf16.mxu0 0
    %5484 = vmatpush1.bf16.msra.mxu0 %v4134
    %5485 = vmatprep.subr.bf16.mxu0 0
    %5486 = vmatpush1.bf16.msra.mxu0 %v4135
    %5487 = vmatprep.subr.bf16.mxu0 0
    %5488 = vmatpush1.bf16.msra.mxu0 %v4136
    %5489 = vmatprep.subr.bf16.mxu0 0
    %5490 = vmatpush1.bf16.msra.mxu0 %v4137
    %5491 = vmatprep.subr.bf16.mxu0 0
    %5492 = vmatpush1.bf16.msra.mxu0 %v4138
    %5493 = vmatprep.subr.bf16.mxu0 0
    %5494 = vmatpush1.bf16.msra.mxu0 %v4139
    %5495 = vmatprep.subr.bf16.mxu0 0
    %5496 = vmatpush1.bf16.msra.mxu0 %v4140
    %5497 = vmatprep.subr.bf16.mxu0 0
    %5498 = vmatpush1.bf16.msra.mxu0 %v4141
    %5499 = vmatprep.subr.bf16.mxu0 0
    %5500 = vmatpush1.bf16.msra.mxu0 %v4142
    %5501 = vmatprep.subr.bf16.mxu0 0
    %5502 = vmatpush1.bf16.msra.mxu0 %v4143
    %5503 = vmatprep.subr.bf16.mxu0 0
    %5504 = vmatpush1.bf16.msra.mxu0 %v4144
    %5505 = vmatprep.subr.bf16.mxu0 0
    %5506 = vmatpush1.bf16.msra.mxu0 %v4145
    %5507 = vmatprep.subr.bf16.mxu0 0
    %5508 = vmatpush1.bf16.msra.mxu0 %v4146
    %5509 = vmatprep.mubr.bf16.mxu0 %v1721
    %5510 = vmatmul.mubr.bf16.gmra.mrb[0].mxu0 %v1717
    %v5511 = vpop.f32.mrb[0].mxu0
    %v5512 = vadd.f32 %v5471, %v5511
    %v5513 = vpop.f32.mrb[0].mxu0
    %v5514 = vpop.f32.mrb[0].mxu0
    %v5515 = vadd.f32 %v5474, %v5514
    %v5516 = vpop.f32.mrb[0].mxu0
    %5517 = vdwg.mxu0
    %5518 = vmatprep.subr.bf16.mxu0 0
    %5519 = vmatpush1.bf16.msra.mxu0 %v4147
    %5520 = vmatprep.subr.bf16.mxu0 0
    %5521 = vmatpush1.bf16.msra.mxu0 %v4148
    %5522 = vmatprep.subr.bf16.mxu0 0
    %5523 = vmatpush1.bf16.msra.mxu0 %v4149
    %5524 = vmatprep.subr.bf16.mxu0 0
    %5525 = vmatpush1.bf16.msra.mxu0 %v4150
    %5526 = vmatprep.subr.bf16.mxu0 0
    %5527 = vmatpush1.bf16.msra.mxu0 %v4151
    %5528 = vmatprep.subr.bf16.mxu0 0
    %5529 = vmatpush1.bf16.msra.mxu0 %v4152
    %5530 = vmatprep.subr.bf16.mxu0 0
    %5531 = vmatpush1.bf16.msra.mxu0 %v4153
    %5532 = vmatprep.subr.bf16.mxu0 0
    %5533 = vmatpush1.bf16.msra.mxu0 %v4154
    %5534 = vmatprep.subr.bf16.mxu0 0
    %5535 = vmatpush1.bf16.msra.mxu0 %v4155
    %5536 = vmatprep.subr.bf16.mxu0 0
    %5537 = vmatpush1.bf16.msra.mxu0 %v4156
    %5538 = vmatprep.subr.bf16.mxu0 0
    %5539 = vmatpush1.bf16.msra.mxu0 %v4157
    %5540 = vmatprep.subr.bf16.mxu0 0
    %5541 = vmatpush1.bf16.msra.mxu0 %v4158
    %5542 = vmatprep.subr.bf16.mxu0 0
    %5543 = vmatpush1.bf16.msra.mxu0 %v4159
    %5544 = vmatprep.subr.bf16.mxu0 0
    %5545 = vmatpush1.bf16.msra.mxu0 %v4160
    %5546 = vmatprep.subr.bf16.mxu0 0
    %5547 = vmatpush1.bf16.msra.mxu0 %v4161
    %5548 = vmatprep.subr.bf16.mxu0 0
    %5549 = vmatpush1.bf16.msra.mxu0 %v4162
    %5550 = vmatprep.mubr.bf16.mxu0 %v1722
    %5551 = vmatmul.mubr.bf16.gmra.mrb[0].mxu0 %v1718
    %v5552 = vpop.f32.mrb[0].mxu0
    %v5553 = vadd.f32 %v5512, %v5552
    %v5554 = vpop.f32.mrb[0].mxu0
    %v5555 = vpop.f32.mrb[0].mxu0
    %v5556 = vadd.f32 %v5515, %v5555
    %v5557 = vpop.f32.mrb[0].mxu0
    %5558 = vdwg.mxu0
    %5559 = vmatprep.subr.bf16.mxu0 0
    %5560 = vmatpush1.bf16.msra.mxu0 %v4163
    %5561 = vmatprep.subr.bf16.mxu0 0
    %5562 = vmatpush1.bf16.msra.mxu0 %v4164
    %5563 = vmatprep.subr.bf16.mxu0 0
    %5564 = vmatpush1.bf16.msra.mxu0 %v4165
    %5565 = vmatprep.subr.bf16.mxu0 0
    %5566 = vmatpush1.bf16.msra.mxu0 %v4166
    %5567 = vmatprep.subr.bf16.mxu0 0
    %5568 = vmatpush1.bf16.msra.mxu0 %v4167
    %5569 = vmatprep.subr.bf16.mxu0 0
    %5570 = vmatpush1.bf16.msra.mxu0 %v4168
    %5571 = vmatprep.subr.bf16.mxu0 0
    %5572 = vmatpush1.bf16.msra.mxu0 %v4169
    %5573 = vmatprep.subr.bf16.mxu0 0
    %5574 = vmatpush1.bf16.msra.mxu0 %v4170
    %5575 = vmatprep.subr.bf16.mxu0 0
    %5576 = vmatpush1.bf16.msra.mxu0 %v4171
    %5577 = vmatprep.subr.bf16.mxu0 0
    %5578 = vmatpush1.bf16.msra.mxu0 %v4172
    %5579 = vmatprep.subr.bf16.mxu0 0
    %5580 = vmatpush1.bf16.msra.mxu0 %v4173
    %5581 = vmatprep.subr.bf16.mxu0 0
    %5582 = vmatpush1.bf16.msra.mxu0 %v4174
    %5583 = vmatprep.subr.bf16.mxu0 0
    %5584 = vmatpush1.bf16.msra.mxu0 %v4175
    %5585 = vmatprep.subr.bf16.mxu0 0
    %5586 = vmatpush1.bf16.msra.mxu0 %v4176
    %5587 = vmatprep.subr.bf16.mxu0 0
    %5588 = vmatpush1.bf16.msra.mxu0 %v4177
    %5589 = vmatprep.subr.bf16.mxu0 0
    %5590 = vmatpush1.bf16.msra.mxu0 %v4178
    %5591 = vmatprep.mubr.bf16.mxu0 %v1855
    %5592 = vmatmul.mubr.bf16.gmra.mrb[0].mxu0 %v1851
    %v5593 = vpop.f32.mrb[0].mxu0
    %v5594 = vadd.f32 %v5553, %v5593
    %v5595 = vpop.f32.mrb[0].mxu0
    %v5596 = vpop.f32.mrb[0].mxu0
    %v5597 = vadd.f32 %v5556, %v5596
    %v5598 = vpop.f32.mrb[0].mxu0
    %5599 = vdwg.mxu0
    %5600 = vmatprep.subr.bf16.mxu0 0
    %5601 = vmatpush1.bf16.msra.mxu0 %v4179
    %5602 = vmatprep.subr.bf16.mxu0 0
    %5603 = vmatpush1.bf16.msra.mxu0 %v4180
    %5604 = vmatprep.subr.bf16.mxu0 0
    %5605 = vmatpush1.bf16.msra.mxu0 %v4181
    %5606 = vmatprep.subr.bf16.mxu0 0
    %5607 = vmatpush1.bf16.msra.mxu0 %v4182
    %5608 = vmatprep.subr.bf16.mxu0 0
    %5609 = vmatpush1.bf16.msra.mxu0 %v4183
    %5610 = vmatprep.subr.bf16.mxu0 0
    %5611 = vmatpush1.bf16.msra.mxu0 %v4184
    %5612 = vmatprep.subr.bf16.mxu0 0
    %5613 = vmatpush1.bf16.msra.mxu0 %v4185
    %5614 = vmatprep.subr.bf16.mxu0 0
    %5615 = vmatpush1.bf16.msra.mxu0 %v4186
    %5616 = vmatprep.subr.bf16.mxu0 0
    %5617 = vmatpush1.bf16.msra.mxu0 %v4187
    %5618 = vmatprep.subr.bf16.mxu0 0
    %5619 = vmatpush1.bf16.msra.mxu0 %v4188
    %5620 = vmatprep.subr.bf16.mxu0 0
    %5621 = vmatpush1.bf16.msra.mxu0 %v4189
    %5622 = vmatprep.subr.bf16.mxu0 0
    %5623 = vmatpush1.bf16.msra.mxu0 %v4190
    %5624 = vmatprep.subr.bf16.mxu0 0
    %5625 = vmatpush1.bf16.msra.mxu0 %v4191
    %5626 = vmatprep.subr.bf16.mxu0 0
    %5627 = vmatpush1.bf16.msra.mxu0 %v4192
    %5628 = vmatprep.subr.bf16.mxu0 0
    %5629 = vmatpush1.bf16.msra.mxu0 %v4193
    %5630 = vmatprep.subr.bf16.mxu0 0
    %5631 = vmatpush1.bf16.msra.mxu0 %v4194
    %5632 = vmatprep.mubr.bf16.mxu0 %v1856
    %5633 = vmatmul.mubr.bf16.gmra.mrb[0].mxu0 %v1852
    %v5634 = vpop.f32.mrb[0].mxu0
    %v5635 = vadd.f32 %v5594, %v5634
    %v5636 = vpop.f32.mrb[0].mxu0
    %v5637 = vpop.f32.mrb[0].mxu0
    %v5638 = vadd.f32 %v5597, %v5637
    %v5639 = vpop.f32.mrb[0].mxu0
    %5640 = vdwg.mxu0
    %5641 = vmatprep.subr.bf16.mxu0 0
    %5642 = vmatpush1.bf16.msra.mxu0 %v4195
    %5643 = vmatprep.subr.bf16.mxu0 0
    %5644 = vmatpush1.bf16.msra.mxu0 %v4196
    %5645 = vmatprep.subr.bf16.mxu0 0
    %5646 = vmatpush1.bf16.msra.mxu0 %v4197
    %5647 = vmatprep.subr.bf16.mxu0 0
    %5648 = vmatpush1.bf16.msra.mxu0 %v4198
    %5649 = vmatprep.subr.bf16.mxu0 0
    %5650 = vmatpush1.bf16.msra.mxu0 %v4199
    %5651 = vmatprep.subr.bf16.mxu0 0
    %5652 = vmatpush1.bf16.msra.mxu0 %v4200
    %5653 = vmatprep.subr.bf16.mxu0 0
    %5654 = vmatpush1.bf16.msra.mxu0 %v4201
    %5655 = vmatprep.subr.bf16.mxu0 0
    %5656 = vmatpush1.bf16.msra.mxu0 %v4202
    %5657 = vmatprep.subr.bf16.mxu0 0
    %5658 = vmatpush1.bf16.msra.mxu0 %v4203
    %5659 = vmatprep.subr.bf16.mxu0 0
    %5660 = vmatpush1.bf16.msra.mxu0 %v4204
    %5661 = vmatprep.subr.bf16.mxu0 0
    %5662 = vmatpush1.bf16.msra.mxu0 %v4205
    %5663 = vmatprep.subr.bf16.mxu0 0
    %5664 = vmatpush1.bf16.msra.mxu0 %v4206
    %5665 = vmatprep.subr.bf16.mxu0 0
    %5666 = vmatpush1.bf16.msra.mxu0 %v4207
    %5667 = vmatprep.subr.bf16.mxu0 0
    %5668 = vmatpush1.bf16.msra.mxu0 %v4208
    %5669 = vmatprep.subr.bf16.mxu0 0
    %5670 = vmatpush1.bf16.msra.mxu0 %v4209
    %5671 = vmatprep.subr.bf16.mxu0 0
    %5672 = vmatpush1.bf16.msra.mxu0 %v4210
    %5673 = vmatprep.mubr.bf16.mxu0 %v1857
    %5674 = vmatmul.mubr.bf16.gmra.mrb[0].mxu0 %v1853
    %v5675 = vpop.f32.mrb[0].mxu0
    %v5676 = vadd.f32 %v5635, %v5675
    %v5677 = vpop.f32.mrb[0].mxu0
    %v5678 = vpop.f32.mrb[0].mxu0
    %v5679 = vadd.f32 %v5638, %v5678
    %v5680 = vpop.f32.mrb[0].mxu0
    %5681 = vdwg.mxu0
    %5682 = vmatprep.subr.bf16.mxu0 0
    %5683 = vmatpush1.bf16.msra.mxu0 %v4211
    %5684 = vmatprep.subr.bf16.mxu0 0
    %5685 = vmatpush1.bf16.msra.mxu0 %v4212
    %5686 = vmatprep.subr.bf16.mxu0 0
    %5687 = vmatpush1.bf16.msra.mxu0 %v4213
    %5688 = vmatprep.subr.bf16.mxu0 0
    %5689 = vmatpush1.bf16.msra.mxu0 %v4214
    %5690 = vmatprep.subr.bf16.mxu0 0
    %5691 = vmatpush1.bf16.msra.mxu0 %v4215
    %5692 = vmatprep.subr.bf16.mxu0 0
    %5693 = vmatpush1.bf16.msra.mxu0 %v4216
    %5694 = vmatprep.subr.bf16.mxu0 0
    %5695 = vmatpush1.bf16.msra.mxu0 %v4217
    %5696 = vmatprep.subr.bf16.mxu0 0
    %5697 = vmatpush1.bf16.msra.mxu0 %v4218
    %5698 = vmatprep.subr.bf16.mxu0 0
    %5699 = vmatpush1.bf16.msra.mxu0 %v4219
    %5700 = vmatprep.subr.bf16.mxu0 0
    %5701 = vmatpush1.bf16.msra.mxu0 %v4220
    %5702 = vmatprep.subr.bf16.mxu0 0
    %5703 = vmatpush1.bf16.msra.mxu0 %v4221
    %5704 = vmatprep.subr.bf16.mxu0 0
    %5705 = vmatpush1.bf16.msra.mxu0 %v4222
    %5706 = vmatprep.subr.bf16.mxu0 0
    %5707 = vmatpush1.bf16.msra.mxu0 %v4223
    %5708 = vmatprep.subr.bf16.mxu0 0
    %5709 = vmatpush1.bf16.msra.mxu0 %v4224
    %5710 = vmatprep.subr.bf16.mxu0 0
    %5711 = vmatpush1.bf16.msra.mxu0 %v4225
    %5712 = vmatprep.subr.bf16.mxu0 0
    %5713 = vmatpush1.bf16.msra.mxu0 %v4226
    %5714 = vmatprep.mubr.bf16.mxu0 %v1858
    %5715 = vmatmul.mubr.bf16.gmra.mrb[0].mxu0 %v1854
    %v5716 = vpop.f32.mrb[0].mxu0
    %v5717 = vadd.f32 %v5676, %v5716
    %v5718 = vpop.f32.mrb[0].mxu0
    %v5719 = vpop.f32.mrb[0].mxu0
    %v5720 = vadd.f32 %v5679, %v5719
    %v5721 = vpop.f32.mrb[0].mxu0
    %5722 = vdwg.mxu0
    %5723 = vmatprep.subr.bf16.mxu0 0
    %5724 = vmatpush1.bf16.msra.mxu0 %v4227
    %5725 = vmatprep.subr.bf16.mxu0 0
    %5726 = vmatpush1.bf16.msra.mxu0 %v4228
    %5727 = vmatprep.subr.bf16.mxu0 0
    %5728 = vmatpush1.bf16.msra.mxu0 %v4229
    %5729 = vmatprep.subr.bf16.mxu0 0
    %5730 = vmatpush1.bf16.msra.mxu0 %v4230
    %5731 = vmatprep.subr.bf16.mxu0 0
    %5732 = vmatpush1.bf16.msra.mxu0 %v4231
    %5733 = vmatprep.subr.bf16.mxu0 0
    %5734 = vmatpush1.bf16.msra.mxu0 %v4232
    %5735 = vmatprep.subr.bf16.mxu0 0
    %5736 = vmatpush1.bf16.msra.mxu0 %v4233
    %5737 = vmatprep.subr.bf16.mxu0 0
    %5738 = vmatpush1.bf16.msra.mxu0 %v4234
    %5739 = vmatprep.subr.bf16.mxu0 0
    %5740 = vmatpush1.bf16.msra.mxu0 %v4235
    %5741 = vmatprep.subr.bf16.mxu0 0
    %5742 = vmatpush1.bf16.msra.mxu0 %v4236
    %5743 = vmatprep.subr.bf16.mxu0 0
    %5744 = vmatpush1.bf16.msra.mxu0 %v4237
    %5745 = vmatprep.subr.bf16.mxu0 0
    %5746 = vmatpush1.bf16.msra.mxu0 %v4238
    %5747 = vmatprep.subr.bf16.mxu0 0
    %5748 = vmatpush1.bf16.msra.mxu0 %v4239
    %5749 = vmatprep.subr.bf16.mxu0 0
    %5750 = vmatpush1.bf16.msra.mxu0 %v4240
    %5751 = vmatprep.subr.bf16.mxu0 0
    %5752 = vmatpush1.bf16.msra.mxu0 %v4241
    %5753 = vmatprep.subr.bf16.mxu0 0
    %5754 = vmatpush1.bf16.msra.mxu0 %v4242
    %5755 = vmatprep.mubr.bf16.mxu0 %v1991
    %5756 = vmatmul.mubr.bf16.gmra.mrb[0].mxu0 %v1987
    %v5757 = vpop.f32.mrb[0].mxu0
    %v5758 = vadd.f32 %v5717, %v5757
    %v5759 = vpop.f32.mrb[0].mxu0
    %v5760 = vpop.f32.mrb[0].mxu0
    %v5761 = vadd.f32 %v5720, %v5760
    %v5762 = vpop.f32.mrb[0].mxu0
    %5763 = vdwg.mxu0
    %5764 = vmatprep.subr.bf16.mxu0 0
    %5765 = vmatpush1.bf16.msra.mxu0 %v4243
    %5766 = vmatprep.subr.bf16.mxu0 0
    %5767 = vmatpush1.bf16.msra.mxu0 %v4244
    %5768 = vmatprep.subr.bf16.mxu0 0
    %5769 = vmatpush1.bf16.msra.mxu0 %v4245
    %5770 = vmatprep.subr.bf16.mxu0 0
    %5771 = vmatpush1.bf16.msra.mxu0 %v4246
    %5772 = vmatprep.subr.bf16.mxu0 0
    %5773 = vmatpush1.bf16.msra.mxu0 %v4247
    %5774 = vmatprep.subr.bf16.mxu0 0
    %5775 = vmatpush1.bf16.msra.mxu0 %v4248
    %5776 = vmatprep.subr.bf16.mxu0 0
    %5777 = vmatpush1.bf16.msra.mxu0 %v4249
    %5778 = vmatprep.subr.bf16.mxu0 0
    %5779 = vmatpush1.bf16.msra.mxu0 %v4250
    %5780 = vmatprep.subr.bf16.mxu0 0
    %5781 = vmatpush1.bf16.msra.mxu0 %v4251
    %5782 = vmatprep.subr.bf16.mxu0 0
    %5783 = vmatpush1.bf16.msra.mxu0 %v4252
    %5784 = vmatprep.subr.bf16.mxu0 0
    %5785 = vmatpush1.bf16.msra.mxu0 %v4253
    %5786 = vmatprep.subr.bf16.mxu0 0
    %5787 = vmatpush1.bf16.msra.mxu0 %v4254
    %5788 = vmatprep.subr.bf16.mxu0 0
    %5789 = vmatpush1.bf16.msra.mxu0 %v4255
    %5790 = vmatprep.subr.bf16.mxu0 0
    %5791 = vmatpush1.bf16.msra.mxu0 %v4256
    %5792 = vmatprep.subr.bf16.mxu0 0
    %5793 = vmatpush1.bf16.msra.mxu0 %v4257
    %5794 = vmatprep.subr.bf16.mxu0 0
    %5795 = vmatpush1.bf16.msra.mxu0 %v4258
    %5796 = vmatprep.mubr.bf16.mxu0 %v1992
    %5797 = vmatmul.mubr.bf16.gmra.mrb[0].mxu0 %v1988
    %v5798 = vpop.f32.mrb[0].mxu0
    %v5799 = vadd.f32 %v5758, %v5798
    %v5800 = vpop.f32.mrb[0].mxu0
    %v5801 = vpop.f32.mrb[0].mxu0
    %v5802 = vadd.f32 %v5761, %v5801
    %v5803 = vpop.f32.mrb[0].mxu0
    %5804 = vdwg.mxu0
    %5805 = vmatprep.subr.bf16.mxu0 0
    %5806 = vmatpush1.bf16.msra.mxu0 %v4259
    %5807 = vmatprep.subr.bf16.mxu0 0
    %5808 = vmatpush1.bf16.msra.mxu0 %v4260
    %5809 = vmatprep.subr.bf16.mxu0 0
    %5810 = vmatpush1.bf16.msra.mxu0 %v4261
    %5811 = vmatprep.subr.bf16.mxu0 0
    %5812 = vmatpush1.bf16.msra.mxu0 %v4262
    %5813 = vmatprep.subr.bf16.mxu0 0
    %5814 = vmatpush1.bf16.msra.mxu0 %v4263
    %5815 = vmatprep.subr.bf16.mxu0 0
    %5816 = vmatpush1.bf16.msra.mxu0 %v4264
    %5817 = vmatprep.subr.bf16.mxu0 0
    %5818 = vmatpush1.bf16.msra.mxu0 %v4265
    %5819 = vmatprep.subr.bf16.mxu0 0
    %5820 = vmatpush1.bf16.msra.mxu0 %v4266
    %5821 = vmatprep.subr.bf16.mxu0 0
    %5822 = vmatpush1.bf16.msra.mxu0 %v4267
    %5823 = vmatprep.subr.bf16.mxu0 0
    %5824 = vmatpush1.bf16.msra.mxu0 %v4268
    %5825 = vmatprep.subr.bf16.mxu0 0
    %5826 = vmatpush1.bf16.msra.mxu0 %v4269
    %5827 = vmatprep.subr.bf16.mxu0 0
    %5828 = vmatpush1.bf16.msra.mxu0 %v4270
    %5829 = vmatprep.subr.bf16.mxu0 0
    %5830 = vmatpush1.bf16.msra.mxu0 %v4271
    %5831 = vmatprep.subr.bf16.mxu0 0
    %5832 = vmatpush1.bf16.msra.mxu0 %v4272
    %5833 = vmatprep.subr.bf16.mxu0 0
    %5834 = vmatpush1.bf16.msra.mxu0 %v4273
    %5835 = vmatprep.subr.bf16.mxu0 0
    %5836 = vmatpush1.bf16.msra.mxu0 %v4274
    %5837 = vmatprep.mubr.bf16.mxu0 %v1993
    %5838 = vmatmul.mubr.bf16.gmra.mrb[0].mxu0 %v1989
    %v5839 = vpop.f32.mrb[0].mxu0
    %v5840 = vadd.f32 %v5799, %v5839
    %v5841 = vpop.f32.mrb[0].mxu0
    %v5842 = vpop.f32.mrb[0].mxu0
    %v5843 = vadd.f32 %v5802, %v5842
    %v5844 = vpop.f32.mrb[0].mxu0
    %5845 = vdwg.mxu0
    %5846 = vmatprep.subr.bf16.mxu0 0
    %5847 = vmatpush1.bf16.msra.mxu0 %v4275
    %5848 = vmatprep.subr.bf16.mxu0 0
    %5849 = vmatpush1.bf16.msra.mxu0 %v4276
    %5850 = vmatprep.subr.bf16.mxu0 0
    %5851 = vmatpush1.bf16.msra.mxu0 %v4277
    %5852 = vmatprep.subr.bf16.mxu0 0
    %5853 = vmatpush1.bf16.msra.mxu0 %v4278
    %5854 = vmatprep.subr.bf16.mxu0 0
    %5855 = vmatpush1.bf16.msra.mxu0 %v4279
    %5856 = vmatprep.subr.bf16.mxu0 0
    %5857 = vmatpush1.bf16.msra.mxu0 %v4280
    %5858 = vmatprep.subr.bf16.mxu0 0
    %5859 = vmatpush1.bf16.msra.mxu0 %v4281
    %5860 = vmatprep.subr.bf16.mxu0 0
    %5861 = vmatpush1.bf16.msra.mxu0 %v4282
    %5862 = vmatprep.subr.bf16.mxu0 0
    %5863 = vmatpush1.bf16.msra.mxu0 %v4283
    %5864 = vmatprep.subr.bf16.mxu0 0
    %5865 = vmatpush1.bf16.msra.mxu0 %v4284
    %5866 = vmatprep.subr.bf16.mxu0 0
    %5867 = vmatpush1.bf16.msra.mxu0 %v4285
    %5868 = vmatprep.subr.bf16.mxu0 0
    %5869 = vmatpush1.bf16.msra.mxu0 %v4286
    %5870 = vmatprep.subr.bf16.mxu0 0
    %5871 = vmatpush1.bf16.msra.mxu0 %v4287
    %5872 = vmatprep.subr.bf16.mxu0 0
    %5873 = vmatpush1.bf16.msra.mxu0 %v4288
    %5874 = vmatprep.subr.bf16.mxu0 0
    %5875 = vmatpush1.bf16.msra.mxu0 %v4289
    %5876 = vmatprep.subr.bf16.mxu0 0
    %5877 = vmatpush1.bf16.msra.mxu0 %v4290
    %5878 = vmatprep.mubr.bf16.mxu0 %v1994
    %5879 = vmatmul.mubr.bf16.gmra.mrb[0].mxu0 %v1990
    %v5880 = vpop.f32.mrb[0].mxu0
    %v5881 = vadd.f32 %v5840, %v5880
    %v5882 = vpop.f32.mrb[0].mxu0
    %v5883 = vpop.f32.mrb[0].mxu0
    %v5884 = vadd.f32 %v5843, %v5883
    %v5885 = vpop.f32.mrb[0].mxu0
    %5886 = vdwg.mxu0
    %v5887 = vmax.f32 %v5881, 0.0
    %v5888 = vmax.f32 %v5884, 0.0
    %v5889 = vpack.c.bf16 %v5888, %v5887
    %v5890 = vld [vmem:[%s3] sm:$0xf]
    %v5891 = vld [vmem:[%s3 + $0x4] sm:$0xf]
    %v5892 = vld [vmem:[%s3 + $0x8] sm:$0xf]
    %v5893 = vld [vmem:[%s3 + $0xc] sm:$0xf]
    %v5894 = vld [vmem:[%s3 + $0x10] sm:$0xf]
    %v5895 = vld [vmem:[%s3 + $0x14] sm:$0xf]
    %v5896 = vld [vmem:[%s3 + $0x18] sm:$0xf]
    %v5897 = vld [vmem:[%s3 + $0x1c] sm:$0xf]
    %v5898 = vld [vmem:[%s3 + $0x20] sm:$0xf]
    %v5899 = vld [vmem:[%s3 + $0x24] sm:$0xf]
    %v5900 = vld [vmem:[%s3 + $0x28] sm:$0xf]
    %v5901 = vld [vmem:[%s3 + $0x2c] sm:$0xf]
    %v5902 = vld [vmem:[%s3 + $0x30] sm:$0xf]
    %v5903 = vld [vmem:[%s3 + $0x34] sm:$0xf]
    %v5904 = vld [vmem:[%s3 + $0x38] sm:$0xf]
    %v5905 = vld [vmem:[%s3 + $0x3c] sm:$0xf]
    %v5906 = vld [vmem:[%s4] sm:$0x1]
    %v5908 = vlaneseq
    %v5909 = vshrl.u32 %v5908, 7
    %v5910 = vsub.s32 0, %v5909
    %v5911 = vrot.slane %v5906, %v5910
    %v5929 = vunpack.c.l.b16 %v5890
    %v5930 = vunpack.c.l.b16 %v5891
    %v5931 = vunpack.c.l.b16 %v5892
    %v5932 = vunpack.c.l.b16 %v5893
    %v5933 = vunpack.c.l.b16 %v5894
    %v5934 = vunpack.c.l.b16 %v5895
    %v5935 = vunpack.c.l.b16 %v5896
    %v5936 = vunpack.c.l.b16 %v5897
    %v5937 = vunpack.c.l.b16 %v5898
    %v5938 = vunpack.c.l.b16 %v5899
    %v5939 = vunpack.c.l.b16 %v5900
    %v5940 = vunpack.c.l.b16 %v5901
    %v5941 = vunpack.c.l.b16 %v5902
    %v5942 = vunpack.c.l.b16 %v5903
    %v5943 = vunpack.c.l.b16 %v5904
    %v5944 = vunpack.c.l.b16 %v5905
    %v5945 = vpack.c.b16 %v5930, %v5929
    %v5946 = vpack.c.b16 %v5932, %v5931
    %v5947 = vpack.c.b16 %v5934, %v5933
    %v5948 = vpack.c.b16 %v5936, %v5935
    %v5949 = vpack.c.b16 %v5938, %v5937
    %v5950 = vpack.c.b16 %v5940, %v5939
    %v5951 = vpack.c.b16 %v5942, %v5941
    %v5952 = vpack.c.b16 %v5944, %v5943
    %5961 = vmatprep.subr.bf16.mxu0 0
    %5962 = vmatpush1.bf16.msra.mxu0 %v5945
    %5963 = vmatprep.subr.bf16.mxu0 0
    %5964 = vmatpush1.bf16.msra.mxu0 %v5946
    %5965 = vmatprep.subr.bf16.mxu0 0
    %5966 = vmatpush1.bf16.msra.mxu0 %v5947
    %5967 = vmatprep.subr.bf16.mxu0 0
    %5968 = vmatpush1.bf16.msra.mxu0 %v5948
    %5969 = vmatprep.subr.bf16.mxu0 0
    %5970 = vmatpush1.bf16.msra.mxu0 %v5949
    %5971 = vmatprep.subr.bf16.mxu0 0
    %5972 = vmatpush1.bf16.msra.mxu0 %v5950
    %5973 = vmatprep.subr.bf16.mxu0 0
    %5974 = vmatpush1.bf16.msra.mxu0 %v5951
    %5975 = vmatprep.subr.bf16.mxu0 0
    %5976 = vmatpush1.bf16.msra.mxu0 %v5952
    %5977 = vmatprep.subr.bf16.mxu0 0
    %5978 = vmatpush1.bf16.msra.mxu0 0
    %5979 = vmatprep.subr.bf16.mxu0 0
    %5980 = vmatpush1.bf16.msra.mxu0 0
    %5981 = vmatprep.subr.bf16.mxu0 0
    %5982 = vmatpush1.bf16.msra.mxu0 0
    %5983 = vmatprep.subr.bf16.mxu0 0
    %5984 = vmatpush1.bf16.msra.mxu0 0
    %5985 = vmatprep.subr.bf16.mxu0 0
    %5986 = vmatpush1.bf16.msra.mxu0 0
    %5987 = vmatprep.subr.bf16.mxu0 0
    %5988 = vmatpush1.bf16.msra.mxu0 0
    %5989 = vmatprep.subr.bf16.mxu0 0
    %5990 = vmatpush1.bf16.msra.mxu0 0
    %5991 = vmatprep.subr.bf16.mxu0 0
    %5992 = vmatpush1.bf16.msra.mxu0 0
    %5993 = vmatprep.mubr.bf16.mxu0 0
    %5994 = vmatmul.mubr.bf16.gmra.mrb[0].mxu0 %v5889
    %v5995 = vpop.f32.mrb[0].mxu0
    %v5996 = vadd.f32 %v5911, %v5995
    %v5997 = vpop.f32.mrb[0].mxu0
    %v5998 = vpop.f32.mrb[0].mxu0
    %v5999 = vadd.f32 %v5911, %v5998
    %v6000 = vpop.f32.mrb[0].mxu0
    %6001 = vdwg.mxu0
    %v6002 = vmax.f32 %v5996, 0.0
    %v6003 = vmax.f32 %v5999, 0.0
    %v6004 = vpack.c.bf16 %v6003, %v6002
    %v6005 = vld [vmem:[%s5] sm:$0xf]
    %v6006 = vld [vmem:[%s5 + $0x4] sm:$0xf]
    %v6007 = vld [vmem:[%s5 + $0x8] sm:$0xf]
    %v6008 = vld [vmem:[%s5 + $0xc] sm:$0xf]
    %v6009 = vld [vmem:[%s5 + $0x10] sm:$0xf]
    %v6010 = vld [vmem:[%s5 + $0x14] sm:$0xf]
    %v6011 = vld [vmem:[%s5 + $0x18] sm:$0xf]
    %v6012 = vld [vmem:[%s5 + $0x1c] sm:$0xf]
    %v6013 = vld [vmem:[%s5 + $0x20] sm:$0xf]
    %v6014 = vld [vmem:[%s5 + $0x24] sm:$0xf]
    %v6015 = vld [vmem:[%s5 + $0x28] sm:$0xf]
    %v6016 = vld [vmem:[%s5 + $0x2c] sm:$0xf]
    %v6017 = vld [vmem:[%s5 + $0x30] sm:$0xf]
    %v6018 = vld [vmem:[%s5 + $0x34] sm:$0xf]
    %v6019 = vld [vmem:[%s5 + $0x38] sm:$0xf]
    %v6020 = vld [vmem:[%s5 + $0x3c] sm:$0xf]
    %v6021 = vld [vmem:[%s6] sm:$0x1]
    %v6023 = vlaneseq
    %v6024 = vshrl.u32 %v6023, 7
    %v6025 = vsub.s32 0, %v6024
    %v6026 = vrot.slane %v6021, %v6025
    %v6044 = vunpack.c.l.b16 %v6005
    %v6045 = vunpack.c.l.b16 %v6006
    %v6046 = vunpack.c.l.b16 %v6007
    %v6047 = vunpack.c.l.b16 %v6008
    %v6048 = vunpack.c.l.b16 %v6009
    %v6049 = vunpack.c.l.b16 %v6010
    %v6050 = vunpack.c.l.b16 %v6011
    %v6051 = vunpack.c.l.b16 %v6012
    %v6052 = vunpack.c.l.b16 %v6013
    %v6053 = vunpack.c.l.b16 %v6014
    %v6054 = vunpack.c.l.b16 %v6015
    %v6055 = vunpack.c.l.b16 %v6016
    %v6056 = vunpack.c.l.b16 %v6017
    %v6057 = vunpack.c.l.b16 %v6018
    %v6058 = vunpack.c.l.b16 %v6019
    %v6059 = vunpack.c.l.b16 %v6020
    %v6060 = vpack.c.b16 %v6045, %v6044
    %v6061 = vpack.c.b16 %v6047, %v6046
    %v6062 = vpack.c.b16 %v6049, %v6048
    %v6063 = vpack.c.b16 %v6051, %v6050
    %v6064 = vpack.c.b16 %v6053, %v6052
    %v6065 = vpack.c.b16 %v6055, %v6054
    %v6066 = vpack.c.b16 %v6057, %v6056
    %v6067 = vpack.c.b16 %v6059, %v6058
    %6076 = vmatprep.subr.bf16.mxu0 0
    %6077 = vmatpush1.bf16.msra.mxu0 %v6060
    %6078 = vmatprep.subr.bf16.mxu0 0
    %6079 = vmatpush1.bf16.msra.mxu0 %v6061
    %6080 = vmatprep.subr.bf16.mxu0 0
    %6081 = vmatpush1.bf16.msra.mxu0 %v6062
    %6082 = vmatprep.subr.bf16.mxu0 0
    %6083 = vmatpush1.bf16.msra.mxu0 %v6063
    %6084 = vmatprep.subr.bf16.mxu0 0
    %6085 = vmatpush1.bf16.msra.mxu0 %v6064
    %6086 = vmatprep.subr.bf16.mxu0 0
    %6087 = vmatpush1.bf16.msra.mxu0 %v6065
    %6088 = vmatprep.subr.bf16.mxu0 0
    %6089 = vmatpush1.bf16.msra.mxu0 %v6066
    %6090 = vmatprep.subr.bf16.mxu0 0
    %6091 = vmatpush1.bf16.msra.mxu0 %v6067
    %6092 = vmatprep.subr.bf16.mxu0 0
    %6093 = vmatpush1.bf16.msra.mxu0 0
    %6094 = vmatprep.subr.bf16.mxu0 0
    %6095 = vmatpush1.bf16.msra.mxu0 0
    %6096 = vmatprep.subr.bf16.mxu0 0
    %6097 = vmatpush1.bf16.msra.mxu0 0
    %6098 = vmatprep.subr.bf16.mxu0 0
    %6099 = vmatpush1.bf16.msra.mxu0 0
    %6100 = vmatprep.subr.bf16.mxu0 0
    %6101 = vmatpush1.bf16.msra.mxu0 0
    %6102 = vmatprep.subr.bf16.mxu0 0
    %6103 = vmatpush1.bf16.msra.mxu0 0
    %6104 = vmatprep.subr.bf16.mxu0 0
    %6105 = vmatpush1.bf16.msra.mxu0 0
    %6106 = vmatprep.subr.bf16.mxu0 0
    %6107 = vmatpush1.bf16.msra.mxu0 0
    %6108 = vmatprep.mubr.bf16.mxu0 0
    %6109 = vmatmul.mubr.bf16.gmra.mrb[0].mxu0 %v6004
    %v6110 = vpop.f32.mrb[0].mxu0
    %v6111 = vadd.f32 %v6026, %v6110
    %v6112 = vpop.f32.mrb[0].mxu0
    %v6113 = vpop.f32.mrb[0].mxu0
    %v6114 = vadd.f32 %v6026, %v6113
    %v6115 = vpop.f32.mrb[0].mxu0
    %6116 = vdwg.mxu0
    %6117 = vst [vmem:[#allocation2] sm:$0xff] %v6111
    %6118 = vst [vmem:[#allocation2 + $0x8] sm:$0xff] %v6114
    // Predicated region
    $region30: #{forward.5} parent=1 // pred_check
      _
    $region31: #{forward.5} parent=1 // pred_check_branch
      %6120 = sbr.rel (0) target = $region33
    $region32: #{forward.5} parent=1 // pred_region
      %s6122 = ssub.s32 256, 32
      %6123 = vsyncadd [#allocation3], %s6122
      %s6124 = sshll.u32 [#allocation2], 4
      %s6125 = int_to_ptr.vmem [resolvable:$true] %s6124
      %6130 = dma.vmem_to_hbm [thread:$0]  %s6125, 32, %s7, [#allocation3], 32, 32, 2
    $region33: #{forward.5} parent=1 // pred_fallthru
      _
    // Predicated region
    $region34: #{forward.5} parent=1 // pred_check
      _
    $region35: #{forward.5} parent=1 // pred_check_branch
      %6132 = sbr.rel (0) target = $region37
    $region36: #{forward.5} parent=1 // pred_region
      %6133 = dma.done [#allocation3], 256
    $region37: #{forward.5} parent=1 // pred_fallthru
      _
    %6134 = vsyncpa [#allocation3], 1

</llo_original>
